<compile_context>
chip_gen: v7x
topology: tpu7x:2x2x1
jax: 0.10.0
libtpu: 0.0.40
codegen_flags: <defaults>
</compile_context>

<pallas_src>
import functools
import math

import jax
import jax.numpy as jnp
from jax.experimental import pallas as pl
from jax.experimental.pallas import tpu as pltpu


_VMEM_LIMIT = 64 * 1024 * 1024          # explicit scoped-VMEM cap (review item)

# -----------------------------------------------------------------------------
# matmul tiling helpers
# -----------------------------------------------------------------------------

_M_CAP, _N_CAP, _K_CAP = 512, 1280, 2048     # re-derived caps (v5e/v6e/v7x safe)


def _round_up(x, m):
    return (x + m - 1) // m * m


def _tile_m(m):
    mp = 64 if m <= 64 else _round_up(m, 8)
    if mp <= _M_CAP:
        return mp, mp
    n = -(-mp // _M_CAP)
    t = _round_up(-(-mp // n), 8)
    return t * n, t


def _tile_n(n_out):
    if n_out <= _N_CAP:
        return n_out, n_out
    n = -(-n_out // _N_CAP)
    t = _round_up(-(-n_out // n), 128)
    return t * n, t


def _tile_k(k_in):
    if k_in <= _K_CAP:
        kp = _round_up(k_in, 8)
        return kp, kp
    n = -(-k_in // _K_CAP)
    t = _round_up(-(-k_in // n), 128)
    return t * n, t


# -----------------------------------------------------------------------------
# matmul kernel (linears, 1x1 convs, stride-2 im2col convs)
# -----------------------------------------------------------------------------

def _mm_kernel(a_ref, b_ref, bias_ref, o_ref, acc_ref):
    """bf16 x bf16 -> f32 accumulate matmul with fused bias add."""
    @pl.when(pl.program_id(2) == 0)
    def _():
        acc_ref[...] = jnp.zeros_like(acc_ref)

    acc_ref[...] += jnp.dot(a_ref[...], b_ref[...],
                            preferred_element_type=jnp.float32)

    @pl.when(pl.program_id(2) == pl.num_programs(2) - 1)
    def _():
        o_ref[...] = (acc_ref[...] + bias_ref[...]).astype(o_ref.dtype)


@functools.partial(jax.jit, static_argnames=("mp", "kp", "tm", "tk", "tn"))
def _mm_exec(a, w, bias, *, mp, kp, tm, tk, tn):
    m, k = a.shape
    np_ = w.shape[1]
    a = a.astype(jnp.bfloat16)
    if (mp, kp) != (m, k):
        a = jnp.pad(a, ((0, mp - m), (0, kp - k)))
    grid = (mp // tm, np_ // tn, kp // tk)
    out = pl.pallas_call(
        _mm_kernel,
        out_shape=jax.ShapeDtypeStruct((mp, np_), jnp.bfloat16),
        grid=grid,
        in_specs=[
            pl.BlockSpec((tm, tk), lambda i, j, kk: (i, kk)),
            pl.BlockSpec((tk, tn), lambda i, j, kk: (kk, j)),
            pl.BlockSpec((1, tn), lambda i, j, kk: (0, j)),
        ],
        out_specs=pl.BlockSpec((tm, tn), lambda i, j, kk: (i, j)),
        scratch_shapes=[pltpu.VMEM((tm, tn), jnp.float32)],
        compiler_params=pltpu.CompilerParams(
            dimension_semantics=("parallel", "parallel", "arbitrary"),
            vmem_limit_bytes=_VMEM_LIMIT),
    )(a, w, bias)
    return out[:m]


def _matmul(a2d, p, extra_bias=None):
    """(M, K) @ pre-padded weight + bias (optionally + per-channel extra)."""
    bias = p["b"]
    if extra_bias is not None:
        eb = extra_bias.astype(jnp.float32)
        if eb.shape[1] != bias.shape[1]:
            eb = jnp.pad(eb, ((0, 0), (0, bias.shape[1] - eb.shape[1])))
        bias = bias + eb
    mp, tm = _tile_m(a2d.shape[0])
    out = _mm_exec(a2d, p["w"], bias,
                   mp=mp, kp=p["kp"], tm=tm, tk=p["tk"], tn=p["tn"])
    if out.shape[1] != p["n"]:
        out = out[:, : p["n"]]
    return out


# -----------------------------------------------------------------------------
# im2col-free 3x3 stride-1 conv kernel
# -----------------------------------------------------------------------------

@functools.lru_cache(maxsize=None)
def _make_conv3x3_kernel(wp, m_out):
    def kernel(x_ref, w_ref, b_ref, o_ref, acc_ref):
        @pl.when(pl.program_id(2) == 0)
        def _():
            acc_ref[...] = jnp.zeros_like(acc_ref)

        acc = None
        for ki in range(3):
            for kj in range(3):
                # tap window = contiguous row range of the flattened padded image
                a = x_ref[pl.ds(ki * wp + kj, m_out), :]
                contrib = jnp.dot(a, w_ref[ki * 3 + kj],
                                  preferred_element_type=jnp.float32)
                acc = contrib if acc is None else acc + contrib
        acc_ref[...] += acc

        @pl.when(pl.program_id(2) == pl.num_programs(2) - 1)
        def _():
            o_ref[...] = (acc_ref[...] + b_ref[...]).astype(o_ref.dtype)
    return kernel


def _divisor_tiles(c):
    return [t for t in range(128, c, 128) if c % t == 0] + [c]


def _pick_tile(c, per_ch_bytes, budget):
    opts = _divisor_tiles(c)
    fits = [t for t in opts if t * per_ch_bytes <= budget]
    return max(fits) if fits else min(opts)


@functools.partial(jax.jit, static_argnames=("h", "w", "tcin", "tcout"))
def _conv3x3_exec(x, wt, bias, *, h, w, tcin, tcout):
    n = x.shape[0]
    cin = x.shape[3]
    cout = wt.shape[2]
    wp, hp = w + 2, h + 3                      # 1 left/right, 1 top, 2 bottom pad
    m_out = h * wp                             # valid rows x padded width
    xp = jnp.pad(x.astype(jnp.bfloat16), ((0, 0), (1, 2), (1, 1), (0, 0)))
    xf = xp.reshape(n, hp * wp, cin)
    out = pl.pallas_call(
        _make_conv3x3_kernel(wp, m_out),
        out_shape=jax.ShapeDtypeStruct((n, m_out, cout), jnp.bfloat16),
        grid=(n, cout // tcout, cin // tcin),
        in_specs=[
            pl.BlockSpec((None, hp * wp, tcin), lambda i, co, ci: (i, 0, ci)),
            pl.BlockSpec((9, tcin, tcout), lambda i, co, ci: (0, ci, co)),
            pl.BlockSpec((1, tcout), lambda i, co, ci: (0, co)),
        ],
        out_specs=pl.BlockSpec((None, m_out, tcout), lambda i, co, ci: (i, 0, co)),
        scratch_shapes=[pltpu.VMEM((m_out, tcout), jnp.float32)],
        compiler_params=pltpu.CompilerParams(
            dimension_semantics=("parallel", "parallel", "arbitrary"),
            vmem_limit_bytes=_VMEM_LIMIT),
    )(xf, wt, bias)
    # drop the 2 junk columns per row that fall outside the valid output width
    return out.reshape(n, h, wp, cout)[:, :, :w, :]


def _conv3x3_s1(x, p, extra_bias=None):
    n, h, w, c = x.shape
    cout = p["n"]
    bias = p["b"]
    if extra_bias is not None:
        bias = bias + extra_bias.astype(jnp.float32)
    wp, hp = w + 2, h + 3
    m_out = h * wp
    tcout = _pick_tile(cout, m_out * 4, 12 * 1024 * 1024)          # f32 acc budget
    tcin = _pick_tile(c, 2 * (hp * wp * 2 + 9 * tcout * 2),        # x + weight, 2x buffered
                      16 * 1024 * 1024)
    return _conv3x3_exec(x, p["w9"], bias, h=h, w=w, tcin=tcin, tcout=tcout)


# -----------------------------------------------------------------------------
# GroupNorm: tiled stats-reduction kernel + tiled apply(+SiLU) kernel
# -----------------------------------------------------------------------------

def _gn_stats_kernel(x_ref, o_ref, s1_ref, s2_ref):
    j = pl.program_id(1)

    @pl.when(j == 0)
    def _():
        s1_ref[...] = jnp.zeros_like(s1_ref)
        s2_ref[...] = jnp.zeros_like(s2_ref)

    x = x_ref[...].astype(jnp.float32)
    s1_ref[...] += jnp.sum(x, axis=0, keepdims=True)
    s2_ref[...] += jnp.sum(x * x, axis=0, keepdims=True)

    @pl.when(j == pl.num_programs(1) - 1)
    def _():
        o_ref[0:1, :] = s1_ref[...]
        o_ref[1:2, :] = s2_ref[...]


@functools.lru_cache(maxsize=None)
def _make_gn_apply_kernel(silu):
    def kernel(x_ref, sc_ref, sh_ref, o_ref):
        x = x_ref[...].astype(jnp.float32)
        y = x * sc_ref[...] + sh_ref[...]
        if silu:
            y = y * jax.nn.sigmoid(y)
        o_ref[...] = y.astype(o_ref.dtype)
    return kernel


@functools.partial(jax.jit, static_argnames=("eps", "silu", "groups"))
def _gn_exec(x, gamma, beta, *, eps, silu, groups):
    n, h, w, c = x.shape
    hw = h * w
    xr = x.reshape(n, hw, c)
    thw = 512 if (hw > 512 and hw % 512 == 0) else hw
    stats = pl.pallas_call(
        _gn_stats_kernel,
        out_shape=jax.ShapeDtypeStruct((n, 2, c), jnp.float32),
        grid=(n, hw // thw),
        in_specs=[pl.BlockSpec((None, thw, c), lambda i, j: (i, j, 0))],
        out_specs=pl.BlockSpec((None, 2, c), lambda i, j: (i, 0, 0)),
        scratch_shapes=[pltpu.VMEM((1, c), jnp.float32),
                        pltpu.VMEM((1, c), jnp.float32)],
        compiler_params=pltpu.CompilerParams(
            dimension_semantics=("parallel", "arbitrary")),
    )(xr)
    # tiny (N, C)-sized group reduce / affine-fold stays in XLA
    cg = c // groups
    inv_cnt = 1.0 / float(hw * cg)
    s1 = stats[:, 0, :].reshape(n, groups, cg)
    s2 = stats[:, 1, :].reshape(n, groups, cg)
    mean_g = jnp.sum(s1, axis=-1, keepdims=True) * inv_cnt
    ex2_g = jnp.sum(s2, axis=-1, keepdims=True) * inv_cnt
    var_g = jnp.maximum(ex2_g - mean_g * mean_g, 0.0)
    rstd_g = jax.lax.rsqrt(var_g + eps)
    mean_c = jnp.broadcast_to(mean_g, (n, groups, cg)).reshape(n, 1, c)
    rstd_c = jnp.broadcast_to(rstd_g, (n, groups, cg)).reshape(n, 1, c)
    scale = rstd_c * gamma.reshape(1, 1, c)
    shift = beta.reshape(1, 1, c) - mean_c * scale
    out = pl.pallas_call(
        _make_gn_apply_kernel(silu),
        out_shape=jax.ShapeDtypeStruct((n, hw, c), jnp.bfloat16),
        grid=(n, hw // thw),
        in_specs=[pl.BlockSpec((None, thw, c), lambda i, j: (i, j, 0)),
                  pl.BlockSpec((None, 1, c), lambda i, j: (i, 0, 0)),
                  pl.BlockSpec((None, 1, c), lambda i, j: (i, 0, 0))],
        out_specs=pl.BlockSpec((None, thw, c), lambda i, j: (i, j, 0)),
        compiler_params=pltpu.CompilerParams(
            dimension_semantics=("parallel", "parallel")),
    )(xr, scale, shift)
    return out.reshape(n, h, w, c)


def group_norm(x, p, eps, silu):
    return _gn_exec(x, p["g"], p["b"], eps=eps, silu=silu, groups=32)


# -----------------------------------------------------------------------------
# LayerNorm
# -----------------------------------------------------------------------------

def _ln_kernel(x_ref, g_ref, b_ref, o_ref):
    x = x_ref[...].astype(jnp.float32)                # (TS, C)
    mean = jnp.mean(x, axis=-1, keepdims=True)
    var = jnp.mean(jnp.square(x - mean), axis=-1, keepdims=True)
    y = (x - mean) * jax.lax.rsqrt(var + 1e-5) * g_ref[...] + b_ref[...]
    o_ref[...] = y.astype(o_ref.dtype)


@jax.jit
def _ln_exec(x, gamma, beta):
    b, s, c = x.shape
    ts = s if (s <= 512 or s % 512 != 0) else 512
    return pl.pallas_call(
        _ln_kernel,
        out_shape=jax.ShapeDtypeStruct((b, s, c), jnp.bfloat16),
        grid=(b, s // ts),
        in_specs=[
            pl.BlockSpec((None, ts, c), lambda i, j: (i, j, 0)),
            pl.BlockSpec((1, c), lambda i, j: (0, 0)),
            pl.BlockSpec((1, c), lambda i, j: (0, 0)),
        ],
        out_specs=pl.BlockSpec((None, ts, c), lambda i, j: (i, j, 0)),
        compiler_params=pltpu.CompilerParams(
            dimension_semantics=("parallel", "parallel")),
    )(x, gamma, beta)


def layer_norm(x, p):
    return _ln_exec(x, p["g"], p["b"])


# -----------------------------------------------------------------------------
# attention kernels (K pre-laid (h, d, sk): no per-step transposes)
# -----------------------------------------------------------------------------

@functools.lru_cache(maxsize=None)
def _make_attn_onepass_kernel(scale):
    # single KV block: skip all online-softmax bookkeeping (review item)
    def kernel(q_ref, k_ref, v_ref, o_ref):
        q = (q_ref[...].astype(jnp.float32) * scale).astype(jnp.bfloat16)
        s = jnp.einsum("hqd,hdk->hqk", q, k_ref[...],
                       preferred_element_type=jnp.float32)
        m = jnp.max(s, axis=-1, keepdims=True)
        p = jnp.exp(s - m)
        l = jnp.sum(p, axis=-1, keepdims=True)
        acc = jnp.einsum("hqk,hkd->hqd", p.astype(v_ref.dtype), v_ref[...],
                         preferred_element_type=jnp.float32)
        o_ref[...] = (acc * pl.reciprocal(l, approx=True)).astype(o_ref.dtype)
    return kernel


@functools.lru_cache(maxsize=None)
def _make_attn_flash_kernel(scale):
    def kernel(q_ref, k_ref, v_ref, o_ref, m_sc, l_sc, acc_sc):
        ki = pl.program_id(2)

        @pl.when(ki == 0)
        def _():
            m_sc[...] = jnp.full_like(m_sc, -1e30)
            l_sc[...] = jnp.zeros_like(l_sc)
            acc_sc[...] = jnp.zeros_like(acc_sc)

        q = (q_ref[...].astype(jnp.float32) * scale).astype(jnp.bfloat16)
        s = jnp.einsum("hqd,hdk->hqk", q, k_ref[...],
                       preferred_element_type=jnp.float32)
        m_new = jnp.maximum(m_sc[...], jnp.max(s, axis=-1, keepdims=True))
        alpha = jnp.exp(m_sc[...] - m_new)
        p = jnp.exp(s - m_new)
        l_sc[...] = alpha * l_sc[...] + jnp.sum(p, axis=-1, keepdims=True)
        acc_sc[...] = alpha * acc_sc[...] + jnp.einsum(
            "hqk,hkd->hqd", p.astype(v_ref.dtype), v_ref[...],
            preferred_element_type=jnp.float32)
        m_sc[...] = m_new

        @pl.when(ki == pl.num_programs(2) - 1)
        def _():
            inv_l = pl.reciprocal(l_sc[...], approx=True)
            o_ref[...] = (acc_sc[...] * inv_l).astype(o_ref.dtype)
    return kernel


@functools.partial(jax.jit, static_argnames=("n_head",))
def _attention_exec(q, k, v, *, n_head):
    b, sq, c = q.shape
    sk = k.shape[1]
    d = c // n_head
    scale = 1.0 / math.sqrt(d)
    # TODO(synk): q/v/out head-major relayouts could be folded into the BlockSpecs;
    # K is pre-laid (b, h, d, sk) so QK^T is a plain MXU matmul in the kernel.
    qh = q.reshape(b, sq, n_head, d).transpose(0, 2, 1, 3)    # (b, h, sq, d)
    kt = k.reshape(b, sk, n_head, d).transpose(0, 2, 3, 1)    # (b, h, d, sk)
    vh = v.reshape(b, sk, n_head, d).transpose(0, 2, 1, 3)    # (b, h, sk, d)
    tq = sq if (sq <= 256 or sq % 256 != 0) else 256
    if sk <= 256 or sk % 256 != 0:
        out = pl.pallas_call(
            _make_attn_onepass_kernel(scale),
            out_shape=jax.ShapeDtypeStruct((b, n_head, sq, d), jnp.bfloat16),
            grid=(b, sq // tq),
            in_specs=[
                pl.BlockSpec((None, n_head, tq, d), lambda i, qi: (i, 0, qi, 0)),
                pl.BlockSpec((None, n_head, d, sk), lambda i, qi: (i, 0, 0, 0)),
                pl.BlockSpec((None, n_head, sk, d), lambda i, qi: (i, 0, 0, 0)),
            ],
            out_specs=pl.BlockSpec((None, n_head, tq, d),
                                   lambda i, qi: (i, 0, qi, 0)),
            compiler_params=pltpu.CompilerParams(
                dimension_semantics=("parallel", "parallel"),
                vmem_limit_bytes=_VMEM_LIMIT),
        )(qh, kt, vh)
    else:
        tk = 256
        out = pl.pallas_call(
            _make_attn_flash_kernel(scale),
            out_shape=jax.ShapeDtypeStruct((b, n_head, sq, d), jnp.bfloat16),
            grid=(b, sq // tq, sk // tk),
            in_specs=[
                pl.BlockSpec((None, n_head, tq, d),
                             lambda i, qi, ki: (i, 0, qi, 0)),
                pl.BlockSpec((None, n_head, d, tk),
                             lambda i, qi, ki: (i, 0, 0, ki)),
                pl.BlockSpec((None, n_head, tk, d),
                             lambda i, qi, ki: (i, 0, ki, 0)),
            ],
            out_specs=pl.BlockSpec((None, n_head, tq, d),
                                   lambda i, qi, ki: (i, 0, qi, 0)),
            scratch_shapes=[pltpu.VMEM((n_head, tq, 1), jnp.float32),
                            pltpu.VMEM((n_head, tq, 1), jnp.float32),
                            pltpu.VMEM((n_head, tq, d), jnp.float32)],
            compiler_params=pltpu.CompilerParams(
                dimension_semantics=("parallel", "parallel", "arbitrary"),
                vmem_limit_bytes=_VMEM_LIMIT),
        )(qh, kt, vh)
    return out.transpose(0, 2, 1, 3).reshape(b, sq, c)


# -----------------------------------------------------------------------------
# conv / linear wrappers
# -----------------------------------------------------------------------------

def _im2col(x, k, stride, pad):
    # only used for the 3 stride-2 downsample convs.
    # TODO(synk): fold stride-2 taps into the conv kernel as well.
    n, h, w, c = x.shape
    xp = jnp.pad(x, ((0, 0), (pad, pad), (pad, pad), (0, 0)))
    ho = (h + 2 * pad - k) // stride + 1
    wo = (w + 2 * pad - k) // stride + 1
    cols = [xp[:, i:i + stride * ho:stride, j:j + stride * wo:stride, :]
            for i in range(k) for j in range(k)]
    a = jnp.concatenate(cols, axis=-1)
    return a.reshape(n * ho * wo, k * k * c), ho, wo


def conv2d(x, p, extra_bias=None):
    if "w9" in p:                                  # im2col-free 3x3 stride-1 path
        return _conv3x3_s1(x, p, extra_bias)
    n, h, w, c = x.shape
    k, s, pd = p["ksize"], p["stride"], p["pad"]
    if k == 1:
        a = x.reshape(n * h * w, c)
        ho, wo = h, w
    else:
        a, ho, wo = _im2col(x, k, s, pd)
    out = _matmul(a, p, extra_bias)
    return out.reshape(n, ho, wo, p["n"])


def linear(x, p):
    b, s, c = x.shape
    return _matmul(x.reshape(b * s, c), p).reshape(b, s, p["n"])


# -----------------------------------------------------------------------------
# UNET blocks
# -----------------------------------------------------------------------------

def residual_block(x, p, t_silu):
    residue = x
    h = group_norm(x, p["gn_f"], eps=1e-5, silu=True)          # GN + SiLU fused
    tvec = _matmul(t_silu, p["lin_t"])                         # (1, Cout)
    h = conv2d(h, p["conv_f"], extra_bias=tvec)                # time add fused as bias
    h = group_norm(h, p["gn_m"], eps=1e-5, silu=True)
    h = conv2d(h, p["conv_m"])
    if "res_conv" in p:
        residue = conv2d(residue, p["res_conv"])
    return h + residue


def attention_block(x, context, p, n_head):
    residue_long = x
    h = group_norm(x, p["gn"], eps=1e-6, silu=False)
    h = conv2d(h, p["conv_in"])
    n, hh, ww, c = h.shape
    h = h.reshape(n, hh * ww, c)

    res = h
    y = layer_norm(h, p["ln1"])
    qkv = linear(y, p["attn1_in"])
    q, k, v = jnp.split(qkv, 3, axis=-1)
    a = _attention_exec(q, k, v, n_head=n_head)
    h = linear(a, p["attn1_out"]) + res

    res = h
    y = layer_norm(h, p["ln2"])
    q = linear(y, p["q"])
    k = linear(context, p["k"])
    v = linear(context, p["v"])
    a = _attention_exec(q, k, v, n_head=n_head)
    h = linear(a, p["attn2_out"]) + res

    res = h
    y = layer_norm(h, p["ln3"])
    g = linear(y, p["geglu1"])
    xg, gate = jnp.split(g, 2, axis=-1)
    # TODO(synk): exact-erf GELU gate kept in XLA (Mosaic erf lowering not guaranteed).
    h = (xg.astype(jnp.float32) *
         jax.nn.gelu(gate.astype(jnp.float32), approximate=False)
         ).astype(jnp.bfloat16)
    h = linear(h, p["geglu2"]) + res

    h = h.reshape(n, hh, ww, c)
    return conv2d(h, p["conv_out"]) + residue_long


def upsample(x, p):
    # TODO(synk): fold the 2x nearest repeat into the conv index map.
    xu = jnp.repeat(jnp.repeat(x, 2, axis=1), 2, axis=2)
    return conv2d(xu, p)


# -----------------------------------------------------------------------------
# architecture spec (mirrors the PyTorch __init__)
# -----------------------------------------------------------------------------

ENCODERS = [
    [("conv", 4, 320, 3, 1, 1)],
    [("res", 320, 320), ("attn", 8, 40)],
    [("res", 320, 320), ("attn", 8, 40)],
    [("conv", 320, 320, 3, 2, 1)],
    [("res", 320, 640), ("attn", 8, 80)],
    [("res", 640, 640), ("attn", 8, 80)],
    [("conv", 640, 640, 3, 2, 1)],
    [("res", 640, 1280), ("attn", 8, 160)],
    [("res", 1280, 1280), ("attn", 8, 160)],
    [("conv", 1280, 1280, 3, 2, 1)],
    [("res", 1280, 1280)],
    [("res", 1280, 1280)],
]
BOTTLENECK = [("res", 1280, 1280), ("attn", 8, 160), ("res", 1280, 1280)]
DECODERS = [
    [("res", 2560, 1280)],
    [("res", 2560, 1280)],
    [("res", 2560, 1280), ("up", 1280)],
    [("res", 2560, 1280), ("attn", 8, 160)],
    [("res", 2560, 1280), ("attn", 8, 160)],
    [("res", 1920, 1280), ("attn", 8, 160), ("up", 1280)],
    [("res", 1920, 640), ("attn", 8, 80)],
    [("res", 1280, 640), ("attn", 8, 80)],
    [("res", 960, 640), ("attn", 8, 80), ("up", 640)],
    [("res", 960, 320), ("attn", 8, 40)],
    [("res", 640, 320), ("attn", 8, 40)],
    [("res", 640, 320), ("attn", 8, 40)],
]


# -----------------------------------------------------------------------------
# deterministic (cheap) parameter init, stored in matmul / tap layouts
# -----------------------------------------------------------------------------

_SEED = [0]


def _cheap_vals(n_elem, scale):
    _SEED[0] += 1
    i = jnp.arange(n_elem, dtype=jnp.uint32) + jnp.uint32(_SEED[0] * 1000003)
    v = ((i * jnp.uint32(2654435761)) >> jnp.uint32(8)) & jnp.uint32(2047)
    v = v.astype(jnp.float32) * (1.0 / 2047.0) - 0.5
    return v * (2.0 * scale)


def init_matmul_param(k_in, n_out):
    kp, tk = _tile_k(k_in)
    np_, tn = _tile_n(n_out)
    w = _cheap_vals(k_in * n_out, 1.0 / math.sqrt(k_in)).reshape(k_in, n_out)
    if (kp, np_) != (k_in, n_out):
        w = jnp.pad(w, ((0, kp - k_in), (0, np_ - n_out)))
    return {"w": w.astype(jnp.bfloat16),
            "b": jnp.zeros((1, np_), jnp.float32),
            "kp": kp, "tk": tk, "tn": tn, "n": n_out}


def init_conv_param(cin, cout, k, stride, pad):
    if k == 3 and stride == 1:
        w = _cheap_vals(9 * cin * cout,
                        1.0 / math.sqrt(9 * cin)).reshape(9, cin, cout)
        return {"w9": w.astype(jnp.bfloat16),
                "b": jnp.zeros((1, cout), jnp.float32),
                "n": cout}
    p = init_matmul_param(cin * k * k, cout)
    p.update(ksize=k, stride=stride, pad=pad)
    return p


def init_norm(c):
    return {"g": jnp.ones((1, c), jnp.float32), "b": jnp.zeros((1, c), jnp.float32)}


def init_res(cin, cout):
    p = {"gn_f": init_norm(cin),
         "conv_f": init_conv_param(cin, cout, 3, 1, 1),
         "lin_t": init_matmul_param(1280, cout),
         "gn_m": init_norm(cout),
         "conv_m": init_conv_param(cout, cout, 3, 1, 1)}
    if cin != cout:
        p["res_conv"] = init_conv_param(cin, cout, 1, 1, 0)
    return p


def init_attn(n_head, n_embd, d_context=768):
    c = n_head * n_embd
    return {"gn": init_norm(c),
            "conv_in": init_conv_param(c, c, 1, 1, 0),
            "ln1": init_norm(c),
            "attn1_in": init_matmul_param(c, 3 * c),    # no-bias layer -> zero bias
            "attn1_out": init_matmul_param(c, c),
            "ln2": init_norm(c),
            "q": init_matmul_param(c, c),
            "k": init_matmul_param(d_context, c),
            "v": init_matmul_param(d_context, c),
            "attn2_out": init_matmul_param(c, c),
            "ln3": init_norm(c),
            "geglu1": init_matmul_param(c, 8 * c),
            "geglu2": init_matmul_param(4 * c, c),
            "conv_out": init_conv_param(c, c, 1, 1, 0)}


def init_layer(spec):
    kind = spec[0]
    if kind == "conv":
        _, cin, cout, k, s, pd = spec
        return init_conv_param(cin, cout, k, s, pd)
    if kind == "res":
        return init_res(spec[1], spec[2])
    if kind == "attn":
        return init_attn(spec[1], spec[2])
    if kind == "up":
        return init_conv_param(spec[1], spec[1], 3, 1, 1)
    raise ValueError(kind)


def init_unet_params():
    enc = [[init_layer(s) for s in block] for block in ENCODERS]
    bott = [init_layer(s) for s in BOTTLENECK]
    dec = [[init_layer(s) for s in block] for block in DECODERS]
    return enc, bott, dec


# -----------------------------------------------------------------------------
# UNET forward
# -----------------------------------------------------------------------------

def apply_layer(spec, p, x, context, t_silu):
    kind = spec[0]
    if kind == "conv":
        return conv2d(x, p)
    if kind == "res":
        return residual_block(x, p, t_silu)
    if kind == "attn":
        return attention_block(x, context, p, spec[1])
    if kind == "up":
        return upsample(x, p)
    raise ValueError(kind)


def unet_forward(params, x_nchw, context, time):
    enc_p, bott_p, dec_p = params
    x = jnp.transpose(x_nchw, (0, 2, 3, 1)).astype(jnp.bfloat16)     # NHWC
    ctx = context.astype(jnp.bfloat16)
    # silu(time) hoisted: computed once per forward (used by every residual block)
    t_silu = (time * jax.nn.sigmoid(time)).astype(jnp.bfloat16)

    skips = []
    for spec_block, p_block in zip(ENCODERS, enc_p):
        for spec, p in zip(spec_block, p_block):
            x = apply_layer(spec, p, x, ctx, t_silu)
        skips.append(x)
    for spec, p in zip(BOTTLENECK, bott_p):
        x = apply_layer(spec, p, x, ctx, t_silu)
    for spec_block, p_block in zip(DECODERS, dec_p):
        # TODO(synk): concat could be avoided by feeding two K-chunks to the conv grid.
        x = jnp.concatenate([x, skips.pop()], axis=-1)
        for spec, p in zip(spec_block, p_block):
            x = apply_layer(spec, p, x, ctx, t_silu)
    return jnp.transpose(x, (0, 3, 1, 2)).astype(jnp.float32)        # back to NCHW


# -----------------------------------------------------------------------------
# main
# -----------------------------------------------------------------------------

if __name__ == "__main__":
    key = jax.random.PRNGKey(0)
    kx, kc, kt = jax.random.split(key, 3)

    B, H, W = 1, 8, 8          # latent spatial must be divisible by 8 (3 stride-2 convs)
    SEQ_CTX = 8
    x = jax.random.normal(kx, (B, 4, H, W), jnp.float32)
    context = jax.random.normal(kc, (B, SEQ_CTX, 768), jnp.float32)
    time = jax.random.normal(kt, (1, 1280), jnp.float32)

    params = init_unet_params()

    out = unet_forward(params, x, context, time)
    out = jax.block_until_ready(out)

    assert out.shape == (B, 320, H, W), out.shape
    assert bool(jnp.all(jnp.isfinite(out)))
    print("KERNEL_OK")
</pallas_src>

<mosaic_0001>
module attributes {stable_mosaic.version = 11 : i64} {
  func.func @kernel(%arg0: i32, %arg1: i32, %arg2: i32, %arg3: memref<1x110x4xbf16, #tpu.memory_space<vmem>>, %arg4: memref<9x4x320xbf16, #tpu.memory_space<vmem>>, %arg5: memref<1x320xf32, #tpu.memory_space<vmem>>, %arg6: memref<1x80x320xbf16, #tpu.memory_space<vmem>>, %arg7: memref<80x320xf32, #tpu.memory_space<vmem>>) attributes {dimension_semantics = [#tpu.dimension_semantics<parallel>, #tpu.dimension_semantics<parallel>, #tpu.dimension_semantics<arbitrary>], iteration_bounds = array<i64: 1, 1, 1>, scalar_prefetch = 0 : i64, scratch_operands = 1 : i64, tpu.core_type = #tpu.core_type<tc>, window_params = [{transform_indices = @transform_0, window_bounds = array<i64: 1, 110, 4>}, {transform_indices = @transform_1, window_bounds = array<i64: 9, 4, 320>}, {transform_indices = @transform_2, window_bounds = array<i64: 1, 320>}, {transform_indices = @transform_3, window_bounds = array<i64: 1, 80, 320>}]} {
    %c0_i32 = arith.constant 0 : i32
    %0 = arith.cmpi eq, %arg2, %c0_i32 : i32
    %1 = arith.extui %0 : i1 to i32
    %c0_i32_0 = arith.constant 0 : i32
    %2 = arith.cmpi ne, %1, %c0_i32_0 : i32
    scf.if %2 {
      %cst_54 = arith.constant 0.000000e+00 : f32
      %62 = vector.broadcast %cst_54 : f32 to vector<80x320xf32>
      %c0_55 = arith.constant 0 : index
      %c0_56 = arith.constant 0 : index
      %63 = vector.load %arg7[%c0_55, %c0_56] : memref<80x320xf32, #tpu.memory_space<vmem>>, vector<80x320xf32>
      tpu.vector_store %arg7[%c0_55, %c0_56], %62 {strides = array<i32>} : memref<80x320xf32, #tpu.memory_space<vmem>>, vector<80x320xf32>,
    } else {
    }
    %c0 = arith.constant 0 : index
    %c0_1 = arith.constant 0 : index
    %c0_2 = arith.constant 0 : index
    %3 = vector.load %arg3[%c0, %c0_1, %c0_2] : memref<1x110x4xbf16, #tpu.memory_space<vmem>>, vector<1x80x4xbf16>
    %4 = vector.shape_cast %3 : vector<1x80x4xbf16> to vector<80x4xbf16>
    %c0_3 = arith.constant 0 : index
    %c0_4 = arith.constant 0 : index
    %c0_5 = arith.constant 0 : index
    %5 = vector.load %arg4[%c0_3, %c0_4, %c0_5] : memref<9x4x320xbf16, #tpu.memory_space<vmem>>, vector<1x4x320xbf16>
    %6 = vector.shape_cast %5 : vector<1x4x320xbf16> to vector<4x320xbf16>
    %cst = arith.constant dense<0.000000e+00> : vector<80x320xf32>
    %7 = tpu.matmul %4, %6, %cst {dimension_numbers = #tpu.dot_dimension_numbers<[1], [0], [0], [1], [0, 0, 1, 1], [], []>} : vector<80x4xbf16>, vector<4x320xbf16>, vector<80x320xf32> -> vector<80x320xf32>
    %c0_6 = arith.constant 0 : index
    %c1 = arith.constant 1 : index
    %c0_7 = arith.constant 0 : index
    %8 = vector.load %arg3[%c0_6, %c1, %c0_7] : memref<1x110x4xbf16, #tpu.memory_space<vmem>>, vector<1x80x4xbf16>
    %9 = vector.shape_cast %8 : vector<1x80x4xbf16> to vector<80x4xbf16>
    %c1_8 = arith.constant 1 : index
    %c0_9 = arith.constant 0 : index
    %c0_10 = arith.constant 0 : index
    %10 = vector.load %arg4[%c1_8, %c0_9, %c0_10] : memref<9x4x320xbf16, #tpu.memory_space<vmem>>, vector<1x4x320xbf16>
    %11 = vector.shape_cast %10 : vector<1x4x320xbf16> to vector<4x320xbf16>
    %cst_11 = arith.constant dense<0.000000e+00> : vector<80x320xf32>
    %12 = tpu.matmul %9, %11, %cst_11 {dimension_numbers = #tpu.dot_dimension_numbers<[1], [0], [0], [1], [0, 0, 1, 1], [], []>} : vector<80x4xbf16>, vector<4x320xbf16>, vector<80x320xf32> -> vector<80x320xf32>
    %13 = arith.addf %7, %12 : vector<80x320xf32>
    %c0_12 = arith.constant 0 : index
    %c2 = arith.constant 2 : index
    %c0_13 = arith.constant 0 : index
    %14 = vector.load %arg3[%c0_12, %c2, %c0_13] : memref<1x110x4xbf16, #tpu.memory_space<vmem>>, vector<1x80x4xbf16>
    %15 = vector.shape_cast %14 : vector<1x80x4xbf16> to vector<80x4xbf16>
    %c2_14 = arith.constant 2 : index
    %c0_15 = arith.constant 0 : index
    %c0_16 = arith.constant 0 : index
    %16 = vector.load %arg4[%c2_14, %c0_15, %c0_16] : memref<9x4x320xbf16, #tpu.memory_space<vmem>>, vector<1x4x320xbf16>
    %17 = vector.shape_cast %16 : vector<1x4x320xbf16> to vector<4x320xbf16>
    %cst_17 = arith.constant dense<0.000000e+00> : vector<80x320xf32>
    %18 = tpu.matmul %15, %17, %cst_17 {dimension_numbers = #tpu.dot_dimension_numbers<[1], [0], [0], [1], [0, 0, 1, 1], [], []>} : vector<80x4xbf16>, vector<4x320xbf16>, vector<80x320xf32> -> vector<80x320xf32>
    %19 = arith.addf %13, %18 : vector<80x320xf32>
    %c0_18 = arith.constant 0 : index
    %c10 = arith.constant 10 : index
    %c0_19 = arith.constant 0 : index
    %20 = vector.load %arg3[%c0_18, %c10, %c0_19] : memref<1x110x4xbf16, #tpu.memory_space<vmem>>, vector<1x80x4xbf16>
    %21 = vector.shape_cast %20 : vector<1x80x4xbf16> to vector<80x4xbf16>
    %c3 = arith.constant 3 : index
    %c0_20 = arith.constant 0 : index
    %c0_21 = arith.constant 0 : index
    %22 = vector.load %arg4[%c3, %c0_20, %c0_21] : memref<9x4x320xbf16, #tpu.memory_space<vmem>>, vector<1x4x320xbf16>
    %23 = vector.shape_cast %22 : vector<1x4x320xbf16> to vector<4x320xbf16>
    %cst_22 = arith.constant dense<0.000000e+00> : vector<80x320xf32>
    %24 = tpu.matmul %21, %23, %cst_22 {dimension_numbers = #tpu.dot_dimension_numbers<[1], [0], [0], [1], [0, 0, 1, 1], [], []>} : vector<80x4xbf16>, vector<4x320xbf16>, vector<80x320xf32> -> vector<80x320xf32>
    %25 = arith.addf %19, %24 : vector<80x320xf32>
    %c0_23 = arith.constant 0 : index
    %c11 = arith.constant 11 : index
    %c0_24 = arith.constant 0 : index
    %26 = vector.load %arg3[%c0_23, %c11, %c0_24] : memref<1x110x4xbf16, #tpu.memory_space<vmem>>, vector<1x80x4xbf16>
    %27 = vector.shape_cast %26 : vector<1x80x4xbf16> to vector<80x4xbf16>
    %c4 = arith.constant 4 : index
    %c0_25 = arith.constant 0 : index
    %c0_26 = arith.constant 0 : index
    %28 = vector.load %arg4[%c4, %c0_25, %c0_26] : memref<9x4x320xbf16, #tpu.memory_space<vmem>>, vector<1x4x320xbf16>
    %29 = vector.shape_cast %28 : vector<1x4x320xbf16> to vector<4x320xbf16>
    %cst_27 = arith.constant dense<0.000000e+00> : vector<80x320xf32>
    %30 = tpu.matmul %27, %29, %cst_27 {dimension_numbers = #tpu.dot_dimension_numbers<[1], [0], [0], [1], [0, 0, 1, 1], [], []>} : vector<80x4xbf16>, vector<4x320xbf16>, vector<80x320xf32> -> vector<80x320xf32>
    %31 = arith.addf %25, %30 : vector<80x320xf32>
    %c0_28 = arith.constant 0 : index
    %c12 = arith.constant 12 : index
    %c0_29 = arith.constant 0 : index
    %32 = vector.load %arg3[%c0_28, %c12, %c0_29] : memref<1x110x4xbf16, #tpu.memory_space<vmem>>, vector<1x80x4xbf16>
    %33 = vector.shape_cast %32 : vector<1x80x4xbf16> to vector<80x4xbf16>
    %c5 = arith.constant 5 : index
    %c0_30 = arith.constant 0 : index
    %c0_31 = arith.constant 0 : index
    %34 = vector.load %arg4[%c5, %c0_30, %c0_31] : memref<9x4x320xbf16, #tpu.memory_space<vmem>>, vector<1x4x320xbf16>
    %35 = vector.shape_cast %34 : vector<1x4x320xbf16> to vector<4x320xbf16>
    %cst_32 = arith.constant dense<0.000000e+00> : vector<80x320xf32>
    %36 = tpu.matmul %33, %35, %cst_32 {dimension_numbers = #tpu.dot_dimension_numbers<[1], [0], [0], [1], [0, 0, 1, 1], [], []>} : vector<80x4xbf16>, vector<4x320xbf16>, vector<80x320xf32> -> vector<80x320xf32>
    %37 = arith.addf %31, %36 : vector<80x320xf32>
    %c0_33 = arith.constant 0 : index
    %c20 = arith.constant 20 : index
    %c0_34 = arith.constant 0 : index
    %38 = vector.load %arg3[%c0_33, %c20, %c0_34] : memref<1x110x4xbf16, #tpu.memory_space<vmem>>, vector<1x80x4xbf16>
    %39 = vector.shape_cast %38 : vector<1x80x4xbf16> to vector<80x4xbf16>
    %c6 = arith.constant 6 : index
    %c0_35 = arith.constant 0 : index
    %c0_36 = arith.constant 0 : index
    %40 = vector.load %arg4[%c6, %c0_35, %c0_36] : memref<9x4x320xbf16, #tpu.memory_space<vmem>>, vector<1x4x320xbf16>
    %41 = vector.shape_cast %40 : vector<1x4x320xbf16> to vector<4x320xbf16>
    %cst_37 = arith.constant dense<0.000000e+00> : vector<80x320xf32>
    %42 = tpu.matmul %39, %41, %cst_37 {dimension_numbers = #tpu.dot_dimension_numbers<[1], [0], [0], [1], [0, 0, 1, 1], [], []>} : vector<80x4xbf16>, vector<4x320xbf16>, vector<80x320xf32> -> vector<80x320xf32>
    %43 = arith.addf %37, %42 : vector<80x320xf32>
    %c0_38 = arith.constant 0 : index
    %c21 = arith.constant 21 : index
    %c0_39 = arith.constant 0 : index
    %44 = vector.load %arg3[%c0_38, %c21, %c0_39] : memref<1x110x4xbf16, #tpu.memory_space<vmem>>, vector<1x80x4xbf16>
    %45 = vector.shape_cast %44 : vector<1x80x4xbf16> to vector<80x4xbf16>
    %c7 = arith.constant 7 : index
    %c0_40 = arith.constant 0 : index
    %c0_41 = arith.constant 0 : index
    %46 = vector.load %arg4[%c7, %c0_40, %c0_41] : memref<9x4x320xbf16, #tpu.memory_space<vmem>>, vector<1x4x320xbf16>
    %47 = vector.shape_cast %46 : vector<1x4x320xbf16> to vector<4x320xbf16>
    %cst_42 = arith.constant dense<0.000000e+00> : vector<80x320xf32>
    %48 = tpu.matmul %45, %47, %cst_42 {dimension_numbers = #tpu.dot_dimension_numbers<[1], [0], [0], [1], [0, 0, 1, 1], [], []>} : vector<80x4xbf16>, vector<4x320xbf16>, vector<80x320xf32> -> vector<80x320xf32>
    %49 = arith.addf %43, %48 : vector<80x320xf32>
    %c0_43 = arith.constant 0 : index
    %c22 = arith.constant 22 : index
    %c0_44 = arith.constant 0 : index
    %50 = vector.load %arg3[%c0_43, %c22, %c0_44] : memref<1x110x4xbf16, #tpu.memory_space<vmem>>, vector<1x80x4xbf16>
    %51 = vector.shape_cast %50 : vector<1x80x4xbf16> to vector<80x4xbf16>
    %c8 = arith.constant 8 : index
    %c0_45 = arith.constant 0 : index
    %c0_46 = arith.constant 0 : index
    %52 = vector.load %arg4[%c8, %c0_45, %c0_46] : memref<9x4x320xbf16, #tpu.memory_space<vmem>>, vector<1x4x320xbf16>
    %53 = vector.shape_cast %52 : vector<1x4x320xbf16> to vector<4x320xbf16>
    %cst_47 = arith.constant dense<0.000000e+00> : vector<80x320xf32>
    %54 = tpu.matmul %51, %53, %cst_47 {dimension_numbers = #tpu.dot_dimension_numbers<[1], [0], [0], [1], [0, 0, 1, 1], [], []>} : vector<80x4xbf16>, vector<4x320xbf16>, vector<80x320xf32> -> vector<80x320xf32>
    %55 = arith.addf %49, %54 : vector<80x320xf32>
    %c0_48 = arith.constant 0 : index
    %c0_49 = arith.constant 0 : index
    %56 = vector.load %arg7[%c0_48, %c0_49] : memref<80x320xf32, #tpu.memory_space<vmem>>, vector<80x320xf32>
    %57 = arith.addf %56, %55 : vector<80x320xf32>
    %c0_50 = arith.constant 0 : index
    %c0_51 = arith.constant 0 : index
    %58 = vector.load %arg7[%c0_50, %c0_51] : memref<80x320xf32, #tpu.memory_space<vmem>>, vector<80x320xf32>
    tpu.vector_store %arg7[%c0_50, %c0_51], %57 {strides = array<i32>} : memref<80x320xf32, #tpu.memory_space<vmem>>, vector<80x320xf32>,
    %c0_i32_52 = arith.constant 0 : i32
    %59 = arith.cmpi eq, %arg2, %c0_i32_52 : i32
    %60 = arith.extui %59 : i1 to i32
    %c0_i32_53 = arith.constant 0 : i32
    %61 = arith.cmpi ne, %60, %c0_i32_53 : i32
    scf.if %61 {
      %c0_54 = arith.constant 0 : index
      %c0_55 = arith.constant 0 : index
      %62 = vector.load %arg7[%c0_54, %c0_55] : memref<80x320xf32, #tpu.memory_space<vmem>>, vector<80x320xf32>
      %c0_56 = arith.constant 0 : index
      %c0_57 = arith.constant 0 : index
      %63 = vector.load %arg5[%c0_56, %c0_57] : memref<1x320xf32, #tpu.memory_space<vmem>>, vector<1x320xf32>
      %64 = vector.broadcast %63 : vector<1x320xf32> to vector<80x320xf32>
      %65 = arith.addf %62, %64 : vector<80x320xf32>
      %66 = arith.truncf %65 : vector<80x320xf32> to vector<80x320xbf16>
      %c0_58 = arith.constant 0 : index
      %c0_59 = arith.constant 0 : index
      %c0_60 = arith.constant 0 : index
      %67 = vector.load %arg6[%c0_58, %c0_59, %c0_60] : memref<1x80x320xbf16, #tpu.memory_space<vmem>>, vector<1x80x320xbf16>
      %68 = vector.shape_cast %67 : vector<1x80x320xbf16> to vector<80x320xbf16>
      %69 = vector.shape_cast %66 : vector<80x320xbf16> to vector<1x80x320xbf16>
      tpu.vector_store %arg6[%c0_58, %c0_59, %c0_60], %69 {strides = array<i32>} : memref<1x80x320xbf16, #tpu.memory_space<vmem>>, vector<1x80x320xbf16>,
    } else {
    }
    return
  }
  func.func @transform_0(%arg0: i32, %arg1: i32, %arg2: i32) -> (i32, i32, i32) {
    %c0_i32 = arith.constant 0 : i32
    %c0_i32_0 = arith.constant 0 : i32
    return %arg0, %c0_i32, %arg2 : i32, i32, i32
  }
  func.func @transform_1(%arg0: i32, %arg1: i32, %arg2: i32) -> (i32, i32, i32) {
    %c0_i32 = arith.constant 0 : i32
    %c0_i32_0 = arith.constant 0 : i32
    return %c0_i32, %arg2, %arg1 : i32, i32, i32
  }
  func.func @transform_2(%arg0: i32, %arg1: i32, %arg2: i32) -> (i32, i32) {
    %c0_i32 = arith.constant 0 : i32
    %c0_i32_0 = arith.constant 0 : i32
    return %c0_i32, %arg1 : i32, i32
  }
  func.func @transform_3(%arg0: i32, %arg1: i32, %arg2: i32) -> (i32, i32, i32) {
    %c0_i32 = arith.constant 0 : i32
    %c0_i32_0 = arith.constant 0 : i32
    return %arg0, %c0_i32, %arg1 : i32, i32, i32
  }
}

</mosaic_0001>

<llo_original>
// kernel: _conv3x3_exec.1
$region0: #{_conv3x3_exec.1}
  #allocation0 [shape = 'u32[]', space=smem, size = 0x4, offset = 0x4, fixed_abs, tag = 'smem constant byte address 0x4 - core index']
  #allocation1 [shape = 'u32[144,128]{1,0:T(1,128)}', space=vmem, size = 0x12000, scoped, tag = 'internal scratch']
  #allocation2 [shape = 'f32[80,320]{1,0:T(8,128)}', space=vmem, size = 0x1e000, scoped, tag = 'scratch operand']
  %s0 = inlined_call_operand.hbm [shape: bf16[1,110,4], index: 0, kind: input, shape index: {}]
  %s1 = inlined_call_operand.hbm [shape: bf16[9,4,320], index: 1, kind: input, shape index: {}]
  %s2 = inlined_call_operand.hbm [shape: f32[1,320], index: 2, kind: input, shape index: {}]
  %s3 = inlined_call_operand.hbm [shape: bf16[1,80,320], index: 3, kind: output, shape index: {}]
  %s4 = sld [smem:[#allocation0]]
  $region42: #{_conv3x3_exec.1} parent=0
    _
  %s6 = ssub.s32 1, %s4
  %s7 = scalar_select 0, %s6, %s4
  $region1: #{_conv3x3_exec.1} parent=0
    #allocation3 [shape = 'u8[28672]{0}', space=vmem, size = 0x7000, scoped, tag = 'input window, operand 0, single buffered']
    #allocation4 [shape = 's32[1]{0}', space=sflag, size = 0x4, scoped, tag = 'scoped memory for _conv3x3_exec.1']
    #allocation5 [shape = 's32[1]{0}', space=sflag, size = 0x4, scoped, tag = 'scoped memory for _conv3x3_exec.1']
    #allocation6 [shape = 'u8[27648]{0}', space=vmem, size = 0x6c00, scoped, tag = 'input window, operand 1, single buffered']
    #allocation7 [shape = 's32[1]{0}', space=sflag, size = 0x4, scoped, tag = 'scoped memory for _conv3x3_exec.1']
    #allocation8 [shape = 'u8[1536]{0}', space=vmem, size = 0x800, scoped, tag = 'input window, operand 2, single buffered']
    #allocation9 [shape = 'u8[61440]{0}', space=vmem, size = 0xf000, scoped, tag = 'output window, operand 0, single buffered']
    %8 = vsyncpa [#allocation4], 0
    %9 = vsyncpa [#allocation7], 0
    %10 = vsyncpa [#allocation5], 0
    // Predicated region
    $region2: #{_conv3x3_exec.1} parent=1 // pred_check
      _
    $region3: #{_conv3x3_exec.1} parent=1 // pred_check_branch
      %12 = sbr.rel (0) target = $region5
    $region4: #{_conv3x3_exec.1} parent=1 // pred_region
      %s14 = ssub.s32 896, 896
      %15 = vsyncadd [#allocation4], %s14
      %s16 = sshll.u32 [#allocation3], 4
      %s17 = int_to_ptr.vmem [resolvable:$true] %s16
      %22 = dma.hbm_to_vmem [thread:$0]  %s0, 896, %s17, [#allocation4], 64, 64, 4
    $region5: #{_conv3x3_exec.1} parent=1 // pred_fallthru
      _
    // Predicated region
    $region6: #{_conv3x3_exec.1} parent=1 // pred_check
      _
    $region7: #{_conv3x3_exec.1} parent=1 // pred_check_branch
      %24 = sbr.rel (0) target = $region9
    $region8: #{_conv3x3_exec.1} parent=1 // pred_region
      %s26 = ssub.s32 864, 864
      %27 = vsyncadd [#allocation7], %s26
      %s28 = sshll.u32 [#allocation6], 4
      %s29 = int_to_ptr.vmem [resolvable:$true] %s28
      %34 = dma.hbm_to_vmem [thread:$0]  %s1, 864, %s29, [#allocation7], 96, 96, 6
    $region9: #{_conv3x3_exec.1} parent=1 // pred_fallthru
      _
    // Predicated region
    $region10: #{_conv3x3_exec.1} parent=1 // pred_check
      _
    $region11: #{_conv3x3_exec.1} parent=1 // pred_check_branch
      %36 = sbr.rel (0) target = $region13
    $region12: #{_conv3x3_exec.1} parent=1 // pred_region
      %s38 = ssub.s32 48, 48
      %39 = vsyncadd [#allocation7], %s38
      %s41 = sshll.u32 [#allocation8], 4
      %s42 = int_to_ptr.vmem [resolvable:$true] %s41
      %44 = dma.hbm_to_vmem [thread:$0]  %s2, 48, %s42, [#allocation7]
    $region13: #{_conv3x3_exec.1} parent=1 // pred_fallthru
      _
    // Predicated region
    $region14: #{_conv3x3_exec.1} parent=1 // pred_check
      _
    $region15: #{_conv3x3_exec.1} parent=1 // pred_check_branch
      %46 = sbr.rel (0) target = $region17
    $region16: #{_conv3x3_exec.1} parent=1 // pred_region
      %47 = dma.done [#allocation4], 896
    $region17: #{_conv3x3_exec.1} parent=1 // pred_fallthru
      _
    // Predicated region
    $region18: #{_conv3x3_exec.1} parent=1 // pred_check
      _
    $region19: #{_conv3x3_exec.1} parent=1 // pred_check_branch
      %49 = sbr.rel (0) target = $region21
    $region20: #{_conv3x3_exec.1} parent=1 // pred_region
      %50 = dma.done [#allocation7], 864
    $region21: #{_conv3x3_exec.1} parent=1 // pred_fallthru
      _
    // Predicated region
    $region22: #{_conv3x3_exec.1} parent=1 // pred_check
      _
    $region23: #{_conv3x3_exec.1} parent=1 // pred_check_branch
      %52 = sbr.rel (0) target = $region25
    $region24: #{_conv3x3_exec.1} parent=1 // pred_region
      %53 = dma.done [#allocation7], 48
    $region25: #{_conv3x3_exec.1} parent=1 // pred_fallthru
      _
    %p55 = scmp.eq.s32.totalorder 0, 0
    // Predicated region
    $region26: #{_conv3x3_exec.1} parent=1 // pred_check
      %p56 = pneg %p55
    $region27: #{_conv3x3_exec.1} parent=1 // pred_check_branch
      %58 = sbr.rel (%p56) target = $region29
    $region28: #{_conv3x3_exec.1} parent=1 // pred_region
      %59 = vst [vmem:[#allocation2] sm:$0xff] 0.0
      %60 = vst [vmem:[#allocation2 + $0x8] sm:$0xff] 0.0
      %vm61 = vcmask 523264
      %62 = vst.msk [vmem:[#allocation2 + $0x10] sm:$0xff] %vm61, 0.0
      %63 = vst [vmem:[#allocation2 + $0x18] sm:$0xff] 0.0
      %64 = vst [vmem:[#allocation2 + $0x20] sm:$0xff] 0.0
      %65 = vst.msk [vmem:[#allocation2 + $0x28] sm:$0xff] %vm61, 0.0
      %66 = vst [vmem:[#allocation2 + $0x30] sm:$0xff] 0.0
      %67 = vst [vmem:[#allocation2 + $0x38] sm:$0xff] 0.0
      %68 = vst.msk [vmem:[#allocation2 + $0x40] sm:$0xff] %vm61, 0.0
      %69 = vst [vmem:[#allocation2 + $0x48] sm:$0xff] 0.0
      %70 = vst [vmem:[#allocation2 + $0x50] sm:$0xff] 0.0
      %71 = vst.msk [vmem:[#allocation2 + $0x58] sm:$0xff] %vm61, 0.0
      %72 = vst [vmem:[#allocation2 + $0x60] sm:$0xff] 0.0
      %73 = vst [vmem:[#allocation2 + $0x68] sm:$0xff] 0.0
      %74 = vst.msk [vmem:[#allocation2 + $0x70] sm:$0xff] %vm61, 0.0
      %75 = vst [vmem:[#allocation2 + $0x78] sm:$0xff] 0.0
      %76 = vst [vmem:[#allocation2 + $0x80] sm:$0xff] 0.0
      %77 = vst.msk [vmem:[#allocation2 + $0x88] sm:$0xff] %vm61, 0.0
      %78 = vst [vmem:[#allocation2 + $0x90] sm:$0xff] 0.0
      %79 = vst [vmem:[#allocation2 + $0x98] sm:$0xff] 0.0
      %80 = vst.msk [vmem:[#allocation2 + $0xa0] sm:$0xff] %vm61, 0.0
      %81 = vst [vmem:[#allocation2 + $0xa8] sm:$0xff] 0.0
      %82 = vst [vmem:[#allocation2 + $0xb0] sm:$0xff] 0.0
      %83 = vst.msk [vmem:[#allocation2 + $0xb8] sm:$0xff] %vm61, 0.0
      %84 = vst [vmem:[#allocation2 + $0xc0] sm:$0xff] 0.0
      %85 = vst [vmem:[#allocation2 + $0xc8] sm:$0xff] 0.0
      %86 = vst.msk [vmem:[#allocation2 + $0xd0] sm:$0xff] %vm61, 0.0
      %87 = vst [vmem:[#allocation2 + $0xd8] sm:$0xff] 0.0
      %88 = vst [vmem:[#allocation2 + $0xe0] sm:$0xff] 0.0
      %89 = vst.msk [vmem:[#allocation2 + $0xe8] sm:$0xff] %vm61, 0.0
    $region29: #{_conv3x3_exec.1} parent=1 // pred_fallthru
      _
    %v90 = vld [vmem:[#allocation3] sm:$0xf]
    %v91 = vld [vmem:[#allocation3 + $0x4] sm:$0xf]
    %v92 = vld [vmem:[#allocation3 + $0x8] sm:$0xf]
    %v93 = vld [vmem:[#allocation3 + $0xc] sm:$0xf]
    %v94 = vld [vmem:[#allocation3 + $0x10] sm:$0xf]
    %v95 = vld [vmem:[#allocation3 + $0x14] sm:$0xf]
    %v96 = vld [vmem:[#allocation3 + $0x18] sm:$0xf]
    %v97 = vld [vmem:[#allocation3 + $0x1c] sm:$0xf]
    %v98 = vld [vmem:[#allocation3 + $0x20] sm:$0xf]
    %v99 = vld [vmem:[#allocation3 + $0x24] sm:$0xf]
    %v100 = vld [vmem:[#allocation6] sm:$0x3f]
    %v101 = vld [vmem:[#allocation3 + $0x28] sm:$0x1]
    %s102 = scalar_lea.vmem [#allocation6], 6
    %v103 = vld [vmem:[%s102] sm:$0x3f]
    %v115 = vunpack.c.l.b16 %v90
    %v116 = vunpack.c.l.b16 %v91
    %v117 = vunpack.c.l.b16 %v92
    %v118 = vunpack.c.l.b16 %v93
    %v119 = vunpack.c.l.b16 %v94
    %v120 = vunpack.c.l.b16 %v95
    %v121 = vunpack.c.l.b16 %v96
    %v122 = vunpack.c.l.b16 %v97
    %v123 = vunpack.c.l.b16 %v98
    %v124 = vunpack.c.l.b16 %v99
    %v125 = vunpack.c.l.b16 %v101
    %v126 = vpack.c.b16 %v116, %v115
    %v127 = vpack.c.b16 %v118, %v117
    %v128 = vpack.c.b16 %v120, %v119
    %v129 = vpack.c.b16 %v122, %v121
    %v130 = vpack.c.b16 %v124, %v123
    %v131 = vpack.c.b16 %v125, %v125
    %vm132 = vsmask.f32 7424
    %v134 = vshrl.u32 %v126, 16
    %v136 = vshll.u32 %v126, 16
    %v138 = vrot.slane %v136, 1
    %v139 = vor.u32 %v134, %v138
    %v141 = vshll.u32 %v127, 16
    %v143 = vrot.slane %v141, 1
    %v144 = vsel %vm132, %v139, %v143
    %v145 = vshrl.u32 %v127, 16
    %v147 = vor.u32 %v145, %v143
    %v149 = vshll.u32 %v128, 16
    %v151 = vrot.slane %v149, 1
    %v152 = vsel %vm132, %v147, %v151
    %v153 = vshrl.u32 %v128, 16
    %v155 = vor.u32 %v153, %v151
    %v157 = vshll.u32 %v129, 16
    %v159 = vrot.slane %v157, 1
    %v160 = vsel %vm132, %v155, %v159
    %v161 = vshrl.u32 %v129, 16
    %v163 = vor.u32 %v161, %v159
    %v165 = vshll.u32 %v130, 16
    %v167 = vrot.slane %v165, 1
    %v168 = vsel %vm132, %v163, %v167
    %v169 = vshrl.u32 %v130, 16
    %v171 = vor.u32 %v169, %v167
    %v173 = vshll.u32 %v131, 16
    %v175 = vrot.slane %v173, 1
    %v176 = vsel %vm132, %v171, %v175
    %v178 = vcombine.high %v103, %v103
    %v180 = vunpack.c.l.s4 1983009808
    %v181 = vunpack.c.0.s8 %v180
    %v182 = vlaneseq
    %v183 = vshrl.u32 %v182, 7
    %v184 = vsub.s32 %v181, %v183
    %v185 = vrot.slane %v103, %v184
    %v187 = vunpack.c.l.s4 1983009808
    %v188 = vunpack.c.0.s8 %v187
    %v189 = vlaneseq
    %v190 = vshrl.u32 %v189, 7
    %v191 = vsub.s32 %v188, %v190
    %v192 = vrot.slane %v178, %v191
    %v193 = vcombine.high %v185, %v185
    %vm194 = vcmask 31744
    %v196 = vsel %vm194, %v144, 0
    %v199 = vsel %vm194, %v152, 0
    %v202 = vsel %vm194, %v160, 0
    %v205 = vsel %vm194, %v168, 0
    %v208 = vsel %vm194, %v176, 0
    %vm210 = vcmask 1041408
    %v212 = vsel %vm210, %v185, 0
    %v215 = vsel %vm210, %v193, 0
    %v218 = vsel %vm210, %v192, 0
    %220 = vmatprep.subr.bf16.mxu0 %v215
    %221 = vmatpush1.bf16.msra.mxu0 %v212
    %222 = vmatprep.subr.bf16.mxu0 0
    %223 = vmatpush1.bf16.msra.mxu0 0
    %224 = vmatprep.subr.bf16.mxu0 0
    %225 = vmatpush1.bf16.msra.mxu0 0
    %226 = vmatprep.subr.bf16.mxu0 0
    %227 = vmatpush1.bf16.msra.mxu0 0
    %228 = vmatprep.subr.bf16.mxu0 0
    %229 = vmatpush1.bf16.msra.mxu0 0
    %230 = vmatprep.subr.bf16.mxu0 0
    %231 = vmatpush1.bf16.msra.mxu0 0
    %232 = vmatprep.subr.bf16.mxu0 0
    %233 = vmatpush1.bf16.msra.mxu0 0
    %234 = vmatprep.subr.bf16.mxu0 0
    %235 = vmatpush1.bf16.msra.mxu0 0
    %236 = vmatprep.subr.bf16.mxu0 0
    %237 = vmatpush1.bf16.msra.mxu0 0
    %238 = vmatprep.subr.bf16.mxu0 0
    %239 = vmatpush1.bf16.msra.mxu0 0
    %240 = vmatprep.subr.bf16.mxu0 0
    %241 = vmatpush1.bf16.msra.mxu0 0
    %242 = vmatprep.subr.bf16.mxu0 0
    %243 = vmatpush1.bf16.msra.mxu0 0
    %244 = vmatprep.subr.bf16.mxu0 0
    %245 = vmatpush1.bf16.msra.mxu0 0
    %246 = vmatprep.subr.bf16.mxu0 0
    %247 = vmatpush1.bf16.msra.mxu0 0
    %248 = vmatprep.subr.bf16.mxu0 0
    %249 = vmatpush1.bf16.msra.mxu0 0
    %250 = vmatprep.subr.bf16.mxu0 0
    %251 = vmatpush1.bf16.msra.mxu0 0
    %252 = vmatprep.mubr.bf16.mxu0 0
    %253 = vmatmul.mubr.bf16.gmra.mrb[0].mxu0 %v196
    %v254 = vpop.f32.mrb[0].mxu0
    %v255 = vadd.f32 0.0, %v254
    %v256 = vpop.f32.mrb[0].mxu0
    %v257 = vadd.f32 0.0, %v256
    %v258 = vpop.f32.mrb[0].mxu0
    %v259 = vadd.f32 0.0, %v258
    %v260 = vpop.f32.mrb[0].mxu0
    %v261 = vadd.f32 0.0, %v260
    %262 = vmatprep.mubr.bf16.mxu0 0
    %263 = vmatmul.mubr.bf16.gmra.mrb[0].mxu0 %v199
    %v264 = vpop.f32.mrb[0].mxu0
    %v265 = vadd.f32 0.0, %v264
    %v266 = vpop.f32.mrb[0].mxu0
    %v267 = vadd.f32 0.0, %v266
    %v268 = vpop.f32.mrb[0].mxu0
    %v269 = vadd.f32 0.0, %v268
    %v270 = vpop.f32.mrb[0].mxu0
    %v271 = vadd.f32 0.0, %v270
    %272 = vmatprep.mubr.bf16.mxu0 0
    %273 = vmatmul.mubr.bf16.gmra.mrb[0].mxu0 %v202
    %v274 = vpop.f32.mrb[0].mxu0
    %v275 = vadd.f32 0.0, %v274
    %v276 = vpop.f32.mrb[0].mxu0
    %v277 = vadd.f32 0.0, %v276
    %v278 = vpop.f32.mrb[0].mxu0
    %v279 = vadd.f32 0.0, %v278
    %v280 = vpop.f32.mrb[0].mxu0
    %v281 = vadd.f32 0.0, %v280
    %282 = vmatprep.mubr.bf16.mxu0 0
    %283 = vmatmul.mubr.bf16.gmra.mrb[0].mxu0 %v205
    %v284 = vpop.f32.mrb[0].mxu0
    %v285 = vadd.f32 0.0, %v284
    %v286 = vpop.f32.mrb[0].mxu0
    %v287 = vadd.f32 0.0, %v286
    %v288 = vpop.f32.mrb[0].mxu0
    %v289 = vadd.f32 0.0, %v288
    %v290 = vpop.f32.mrb[0].mxu0
    %v291 = vadd.f32 0.0, %v290
    %292 = vmatprep.mubr.bf16.mxu0 0
    %293 = vmatmul.mubr.bf16.gmra.mrb[0].mxu0 %v208
    %v294 = vpop.f32.mrb[0].mxu0
    %v295 = vadd.f32 0.0, %v294
    %v296 = vpop.f32.mrb[0].mxu0
    %v297 = vadd.f32 0.0, %v296
    %v298 = vpop.f32.mrb[0].mxu0
    %v299 = vadd.f32 0.0, %v298
    %v300 = vpop.f32.mrb[0].mxu0
    %v301 = vadd.f32 0.0, %v300
    %302 = vdwg.mxu0
    %303 = vmatprep.subr.bf16.mxu0 0
    %304 = vmatpush1.bf16.msra.mxu0 %v218
    %305 = vmatprep.subr.bf16.mxu0 0
    %306 = vmatpush1.bf16.msra.mxu0 0
    %307 = vmatprep.subr.bf16.mxu0 0
    %308 = vmatpush1.bf16.msra.mxu0 0
    %309 = vmatprep.subr.bf16.mxu0 0
    %310 = vmatpush1.bf16.msra.mxu0 0
    %311 = vmatprep.subr.bf16.mxu0 0
    %312 = vmatpush1.bf16.msra.mxu0 0
    %313 = vmatprep.subr.bf16.mxu0 0
    %314 = vmatpush1.bf16.msra.mxu0 0
    %315 = vmatprep.subr.bf16.mxu0 0
    %316 = vmatpush1.bf16.msra.mxu0 0
    %317 = vmatprep.subr.bf16.mxu0 0
    %318 = vmatpush1.bf16.msra.mxu0 0
    %319 = vmatprep.subr.bf16.mxu0 0
    %320 = vmatpush1.bf16.msra.mxu0 0
    %321 = vmatprep.subr.bf16.mxu0 0
    %322 = vmatpush1.bf16.msra.mxu0 0
    %323 = vmatprep.subr.bf16.mxu0 0
    %324 = vmatpush1.bf16.msra.mxu0 0
    %325 = vmatprep.subr.bf16.mxu0 0
    %326 = vmatpush1.bf16.msra.mxu0 0
    %327 = vmatprep.subr.bf16.mxu0 0
    %328 = vmatpush1.bf16.msra.mxu0 0
    %329 = vmatprep.subr.bf16.mxu0 0
    %330 = vmatpush1.bf16.msra.mxu0 0
    %331 = vmatprep.subr.bf16.mxu0 0
    %332 = vmatpush1.bf16.msra.mxu0 0
    %333 = vmatprep.subr.bf16.mxu0 0
    %334 = vmatpush1.bf16.msra.mxu0 0
    %335 = vmatprep.mubr.bf16.mxu0 0
    %336 = vmatmul.mubr.bf16.gmra.mrb[0].mxu0 %v196
    %v337 = vpop.f32.mrb[0].mxu0
    %v338 = vadd.f32 0.0, %v337
    %v339 = vpop.f32.mrb[0].mxu0
    %v340 = vpop.f32.mrb[0].mxu0
    %v341 = vadd.f32 0.0, %v340
    %v342 = vpop.f32.mrb[0].mxu0
    %343 = vmatprep.mubr.bf16.mxu0 0
    %344 = vmatmul.mubr.bf16.gmra.mrb[0].mxu0 %v199
    %v345 = vpop.f32.mrb[0].mxu0
    %v346 = vadd.f32 0.0, %v345
    %v347 = vpop.f32.mrb[0].mxu0
    %v348 = vpop.f32.mrb[0].mxu0
    %v349 = vadd.f32 0.0, %v348
    %v350 = vpop.f32.mrb[0].mxu0
    %351 = vmatprep.mubr.bf16.mxu0 0
    %352 = vmatmul.mubr.bf16.gmra.mrb[0].mxu0 %v202
    %v353 = vpop.f32.mrb[0].mxu0
    %v354 = vadd.f32 0.0, %v353
    %v355 = vpop.f32.mrb[0].mxu0
    %v356 = vpop.f32.mrb[0].mxu0
    %v357 = vadd.f32 0.0, %v356
    %v358 = vpop.f32.mrb[0].mxu0
    %359 = vmatprep.mubr.bf16.mxu0 0
    %360 = vmatmul.mubr.bf16.gmra.mrb[0].mxu0 %v205
    %v361 = vpop.f32.mrb[0].mxu0
    %v362 = vadd.f32 0.0, %v361
    %v363 = vpop.f32.mrb[0].mxu0
    %v364 = vpop.f32.mrb[0].mxu0
    %v365 = vadd.f32 0.0, %v364
    %v366 = vpop.f32.mrb[0].mxu0
    %367 = vmatprep.mubr.bf16.mxu0 0
    %368 = vmatmul.mubr.bf16.gmra.mrb[0].mxu0 %v208
    %v369 = vpop.f32.mrb[0].mxu0
    %v370 = vadd.f32 0.0, %v369
    %v371 = vpop.f32.mrb[0].mxu0
    %v372 = vpop.f32.mrb[0].mxu0
    %v373 = vadd.f32 0.0, %v372
    %v374 = vpop.f32.mrb[0].mxu0
    %375 = vdwg.mxu0
    %v377 = vcombine.high %v100, %v100
    %v379 = vunpack.c.l.s4 1983009808
    %v380 = vunpack.c.0.s8 %v379
    %v381 = vlaneseq
    %v382 = vshrl.u32 %v381, 7
    %v383 = vsub.s32 %v380, %v382
    %v384 = vrot.slane %v100, %v383
    %v386 = vunpack.c.l.s4 1983009808
    %v387 = vunpack.c.0.s8 %v386
    %v388 = vlaneseq
    %v389 = vshrl.u32 %v388, 7
    %v390 = vsub.s32 %v387, %v389
    %v391 = vrot.slane %v377, %v390
    %v392 = vcombine.high %v384, %v384
    %v393 = vsel %vm194, %v126, 0
    %v395 = vsel %vm194, %v127, 0
    %v397 = vsel %vm194, %v128, 0
    %v399 = vsel %vm194, %v129, 0
    %v401 = vsel %vm194, %v130, 0
    %v404 = vsel %vm210, %v384, 0
    %v407 = vsel %vm210, %v392, 0
    %v410 = vsel %vm210, %v391, 0
    %412 = vmatprep.subr.bf16.mxu0 %v407
    %413 = vmatpush1.bf16.msra.mxu0 %v404
    %414 = vmatprep.subr.bf16.mxu0 0
    %415 = vmatpush1.bf16.msra.mxu0 0
    %416 = vmatprep.subr.bf16.mxu0 0
    %417 = vmatpush1.bf16.msra.mxu0 0
    %418 = vmatprep.subr.bf16.mxu0 0
    %419 = vmatpush1.bf16.msra.mxu0 0
    %420 = vmatprep.subr.bf16.mxu0 0
    %421 = vmatpush1.bf16.msra.mxu0 0
    %422 = vmatprep.subr.bf16.mxu0 0
    %423 = vmatpush1.bf16.msra.mxu0 0
    %424 = vmatprep.subr.bf16.mxu0 0
    %425 = vmatpush1.bf16.msra.mxu0 0
    %426 = vmatprep.subr.bf16.mxu0 0
    %427 = vmatpush1.bf16.msra.mxu0 0
    %428 = vmatprep.subr.bf16.mxu0 0
    %429 = vmatpush1.bf16.msra.mxu0 0
    %430 = vmatprep.subr.bf16.mxu0 0
    %431 = vmatpush1.bf16.msra.mxu0 0
    %432 = vmatprep.subr.bf16.mxu0 0
    %433 = vmatpush1.bf16.msra.mxu0 0
    %434 = vmatprep.subr.bf16.mxu0 0
    %435 = vmatpush1.bf16.msra.mxu0 0
    %436 = vmatprep.subr.bf16.mxu0 0
    %437 = vmatpush1.bf16.msra.mxu0 0
    %438 = vmatprep.subr.bf16.mxu0 0
    %439 = vmatpush1.bf16.msra.mxu0 0
    %440 = vmatprep.subr.bf16.mxu0 0
    %441 = vmatpush1.bf16.msra.mxu0 0
    %442 = vmatprep.subr.bf16.mxu0 0
    %443 = vmatpush1.bf16.msra.mxu0 0
    %444 = vmatprep.mubr.bf16.mxu0 0
    %445 = vmatmul.mubr.bf16.gmra.mrb[0].mxu0 %v393
    %v446 = vpop.f32.mrb[0].mxu0
    %v447 = vadd.f32 %v255, %v446
    %v448 = vpop.f32.mrb[0].mxu0
    %v449 = vadd.f32 %v257, %v448
    %v450 = vpop.f32.mrb[0].mxu0
    %v451 = vadd.f32 %v259, %v450
    %v452 = vpop.f32.mrb[0].mxu0
    %v453 = vadd.f32 %v261, %v452
    %454 = vmatprep.mubr.bf16.mxu0 0
    %455 = vmatmul.mubr.bf16.gmra.mrb[0].mxu0 %v395
    %v456 = vpop.f32.mrb[0].mxu0
    %v457 = vadd.f32 %v265, %v456
    %v458 = vpop.f32.mrb[0].mxu0
    %v459 = vadd.f32 %v267, %v458
    %v460 = vpop.f32.mrb[0].mxu0
    %v461 = vadd.f32 %v269, %v460
    %v462 = vpop.f32.mrb[0].mxu0
    %v463 = vadd.f32 %v271, %v462
    %464 = vmatprep.mubr.bf16.mxu0 0
    %465 = vmatmul.mubr.bf16.gmra.mrb[0].mxu0 %v397
    %v466 = vpop.f32.mrb[0].mxu0
    %v467 = vadd.f32 %v275, %v466
    %v468 = vpop.f32.mrb[0].mxu0
    %v469 = vadd.f32 %v277, %v468
    %v470 = vpop.f32.mrb[0].mxu0
    %v471 = vadd.f32 %v279, %v470
    %v472 = vpop.f32.mrb[0].mxu0
    %v473 = vadd.f32 %v281, %v472
    %474 = vmatprep.mubr.bf16.mxu0 0
    %475 = vmatmul.mubr.bf16.gmra.mrb[0].mxu0 %v399
    %v476 = vpop.f32.mrb[0].mxu0
    %v477 = vadd.f32 %v285, %v476
    %v478 = vpop.f32.mrb[0].mxu0
    %v479 = vadd.f32 %v287, %v478
    %v480 = vpop.f32.mrb[0].mxu0
    %v481 = vadd.f32 %v289, %v480
    %v482 = vpop.f32.mrb[0].mxu0
    %v483 = vadd.f32 %v291, %v482
    %484 = vmatprep.mubr.bf16.mxu0 0
    %485 = vmatmul.mubr.bf16.gmra.mrb[0].mxu0 %v401
    %v486 = vpop.f32.mrb[0].mxu0
    %v487 = vadd.f32 %v295, %v486
    %v488 = vpop.f32.mrb[0].mxu0
    %v489 = vadd.f32 %v297, %v488
    %v490 = vpop.f32.mrb[0].mxu0
    %v491 = vadd.f32 %v299, %v490
    %v492 = vpop.f32.mrb[0].mxu0
    %v493 = vadd.f32 %v301, %v492
    %494 = vdwg.mxu0
    %495 = vmatprep.subr.bf16.mxu0 0
    %496 = vmatpush1.bf16.msra.mxu0 %v410
    %497 = vmatprep.subr.bf16.mxu0 0
    %498 = vmatpush1.bf16.msra.mxu0 0
    %499 = vmatprep.subr.bf16.mxu0 0
    %500 = vmatpush1.bf16.msra.mxu0 0
    %501 = vmatprep.subr.bf16.mxu0 0
    %502 = vmatpush1.bf16.msra.mxu0 0
    %503 = vmatprep.subr.bf16.mxu0 0
    %504 = vmatpush1.bf16.msra.mxu0 0
    %505 = vmatprep.subr.bf16.mxu0 0
    %506 = vmatpush1.bf16.msra.mxu0 0
    %507 = vmatprep.subr.bf16.mxu0 0
    %508 = vmatpush1.bf16.msra.mxu0 0
    %509 = vmatprep.subr.bf16.mxu0 0
    %510 = vmatpush1.bf16.msra.mxu0 0
    %511 = vmatprep.subr.bf16.mxu0 0
    %512 = vmatpush1.bf16.msra.mxu0 0
    %513 = vmatprep.subr.bf16.mxu0 0
    %514 = vmatpush1.bf16.msra.mxu0 0
    %515 = vmatprep.subr.bf16.mxu0 0
    %516 = vmatpush1.bf16.msra.mxu0 0
    %517 = vmatprep.subr.bf16.mxu0 0
    %518 = vmatpush1.bf16.msra.mxu0 0
    %519 = vmatprep.subr.bf16.mxu0 0
    %520 = vmatpush1.bf16.msra.mxu0 0
    %521 = vmatprep.subr.bf16.mxu0 0
    %522 = vmatpush1.bf16.msra.mxu0 0
    %523 = vmatprep.subr.bf16.mxu0 0
    %524 = vmatpush1.bf16.msra.mxu0 0
    %525 = vmatprep.subr.bf16.mxu0 0
    %526 = vmatpush1.bf16.msra.mxu0 0
    %527 = vmatprep.mubr.bf16.mxu0 0
    %528 = vmatmul.mubr.bf16.gmra.mrb[0].mxu0 %v393
    %v529 = vpop.f32.mrb[0].mxu0
    %v530 = vadd.f32 %v338, %v529
    %v531 = vpop.f32.mrb[0].mxu0
    %v532 = vpop.f32.mrb[0].mxu0
    %v533 = vadd.f32 %v341, %v532
    %v534 = vpop.f32.mrb[0].mxu0
    %535 = vmatprep.mubr.bf16.mxu0 0
    %536 = vmatmul.mubr.bf16.gmra.mrb[0].mxu0 %v395
    %v537 = vpop.f32.mrb[0].mxu0
    %v538 = vadd.f32 %v346, %v537
    %v539 = vpop.f32.mrb[0].mxu0
    %v540 = vpop.f32.mrb[0].mxu0
    %v541 = vadd.f32 %v349, %v540
    %v542 = vpop.f32.mrb[0].mxu0
    %543 = vmatprep.mubr.bf16.mxu0 0
    %544 = vmatmul.mubr.bf16.gmra.mrb[0].mxu0 %v397
    %v545 = vpop.f32.mrb[0].mxu0
    %v546 = vadd.f32 %v354, %v545
    %v547 = vpop.f32.mrb[0].mxu0
    %v548 = vpop.f32.mrb[0].mxu0
    %v549 = vadd.f32 %v357, %v548
    %v550 = vpop.f32.mrb[0].mxu0
    %551 = vmatprep.mubr.bf16.mxu0 0
    %552 = vmatmul.mubr.bf16.gmra.mrb[0].mxu0 %v399
    %v553 = vpop.f32.mrb[0].mxu0
    %v554 = vadd.f32 %v362, %v553
    %v555 = vpop.f32.mrb[0].mxu0
    %v556 = vpop.f32.mrb[0].mxu0
    %v557 = vadd.f32 %v365, %v556
    %v558 = vpop.f32.mrb[0].mxu0
    %559 = vmatprep.mubr.bf16.mxu0 0
    %560 = vmatmul.mubr.bf16.gmra.mrb[0].mxu0 %v401
    %v561 = vpop.f32.mrb[0].mxu0
    %v562 = vadd.f32 %v370, %v561
    %v563 = vpop.f32.mrb[0].mxu0
    %v564 = vpop.f32.mrb[0].mxu0
    %v565 = vadd.f32 %v373, %v564
    %v566 = vpop.f32.mrb[0].mxu0
    %567 = vdwg.mxu0
    %v568 = vld [vmem:[#allocation3] sm:$0xe]
    %v569 = vld [vmem:[#allocation3 + $0x4] sm:$0xf]
    %v570 = vld [vmem:[#allocation3 + $0x8] sm:$0xf]
    %v571 = vld [vmem:[#allocation3 + $0xc] sm:$0xf]
    %v572 = vld [vmem:[#allocation3 + $0x10] sm:$0xf]
    %v573 = vld [vmem:[#allocation3 + $0x14] sm:$0xf]
    %v574 = vld [vmem:[#allocation3 + $0x18] sm:$0xf]
    %v575 = vld [vmem:[#allocation3 + $0x1c] sm:$0xf]
    %v576 = vld [vmem:[#allocation3 + $0x20] sm:$0xf]
    %v577 = vld [vmem:[#allocation3 + $0x24] sm:$0xf]
    %v578 = vld [vmem:[#allocation3 + $0x28] sm:$0x1]
    %s579 = scalar_lea.vmem [#allocation6], 12
    %v580 = vld [vmem:[%s579] sm:$0x3f]
    %v592 = vunpack.c.l.b16 %v568
    %v593 = vunpack.c.l.b16 %v569
    %v594 = vunpack.c.l.b16 %v570
    %v595 = vunpack.c.l.b16 %v571
    %v596 = vunpack.c.l.b16 %v572
    %v597 = vunpack.c.l.b16 %v573
    %v598 = vunpack.c.l.b16 %v574
    %v599 = vunpack.c.l.b16 %v575
    %v600 = vunpack.c.l.b16 %v576
    %v601 = vunpack.c.l.b16 %v577
    %v602 = vunpack.c.l.b16 %v578
    %v603 = vpack.c.b16 %v593, %v592
    %v604 = vpack.c.b16 %v595, %v594
    %v605 = vpack.c.b16 %v597, %v596
    %v606 = vpack.c.b16 %v599, %v598
    %v607 = vpack.c.b16 %v601, %v600
    %v608 = vpack.c.b16 %v602, %v602
    %vm609 = vcmask 1046528
    %v610 = vrot.slane %v603, 1
    %v611 = vrot.slane %v604, 1
    %v612 = vsel %vm609, %v610, %v611
    %v613 = vrot.slane %v605, 1
    %v614 = vsel %vm609, %v611, %v613
    %v615 = vrot.slane %v606, 1
    %v616 = vsel %vm609, %v613, %v615
    %v617 = vrot.slane %v607, 1
    %v618 = vsel %vm609, %v615, %v617
    %v619 = vrot.slane %v608, 1
    %v620 = vsel %vm609, %v617, %v619
    %v622 = vcombine.high %v580, %v580
    %v624 = vunpack.c.l.s4 1983009808
    %v625 = vunpack.c.0.s8 %v624
    %v626 = vlaneseq
    %v627 = vshrl.u32 %v626, 7
    %v628 = vsub.s32 %v625, %v627
    %v629 = vrot.slane %v580, %v628
    %v631 = vunpack.c.l.s4 1983009808
    %v632 = vunpack.c.0.s8 %v631
    %v633 = vlaneseq
    %v634 = vshrl.u32 %v633, 7
    %v635 = vsub.s32 %v632, %v634
    %v636 = vrot.slane %v622, %v635
    %v637 = vcombine.high %v629, %v629
    %v639 = vsel %vm194, %v612, 0
    %v642 = vsel %vm194, %v614, 0
    %v645 = vsel %vm194, %v616, 0
    %v648 = vsel %vm194, %v618, 0
    %v651 = vsel %vm194, %v620, 0
    %v654 = vsel %vm210, %v629, 0
    %v657 = vsel %vm210, %v637, 0
    %v660 = vsel %vm210, %v636, 0
    %662 = vmatprep.subr.bf16.mxu0 %v657
    %663 = vmatpush1.bf16.msra.mxu0 %v654
    %664 = vmatprep.subr.bf16.mxu0 0
    %665 = vmatpush1.bf16.msra.mxu0 0
    %666 = vmatprep.subr.bf16.mxu0 0
    %667 = vmatpush1.bf16.msra.mxu0 0
    %668 = vmatprep.subr.bf16.mxu0 0
    %669 = vmatpush1.bf16.msra.mxu0 0
    %670 = vmatprep.subr.bf16.mxu0 0
    %671 = vmatpush1.bf16.msra.mxu0 0
    %672 = vmatprep.subr.bf16.mxu0 0
    %673 = vmatpush1.bf16.msra.mxu0 0
    %674 = vmatprep.subr.bf16.mxu0 0
    %675 = vmatpush1.bf16.msra.mxu0 0
    %676 = vmatprep.subr.bf16.mxu0 0
    %677 = vmatpush1.bf16.msra.mxu0 0
    %678 = vmatprep.subr.bf16.mxu0 0
    %679 = vmatpush1.bf16.msra.mxu0 0
    %680 = vmatprep.subr.bf16.mxu0 0
    %681 = vmatpush1.bf16.msra.mxu0 0
    %682 = vmatprep.subr.bf16.mxu0 0
    %683 = vmatpush1.bf16.msra.mxu0 0
    %684 = vmatprep.subr.bf16.mxu0 0
    %685 = vmatpush1.bf16.msra.mxu0 0
    %686 = vmatprep.subr.bf16.mxu0 0
    %687 = vmatpush1.bf16.msra.mxu0 0
    %688 = vmatprep.subr.bf16.mxu0 0
    %689 = vmatpush1.bf16.msra.mxu0 0
    %690 = vmatprep.subr.bf16.mxu0 0
    %691 = vmatpush1.bf16.msra.mxu0 0
    %692 = vmatprep.subr.bf16.mxu0 0
    %693 = vmatpush1.bf16.msra.mxu0 0
    %694 = vmatprep.mubr.bf16.mxu0 0
    %695 = vmatmul.mubr.bf16.gmra.mrb[0].mxu0 %v639
    %v696 = vpop.f32.mrb[0].mxu0
    %v697 = vadd.f32 0.0, %v696
    %v698 = vpop.f32.mrb[0].mxu0
    %v699 = vadd.f32 0.0, %v698
    %v700 = vpop.f32.mrb[0].mxu0
    %v701 = vadd.f32 0.0, %v700
    %v702 = vpop.f32.mrb[0].mxu0
    %v703 = vadd.f32 0.0, %v702
    %704 = vmatprep.mubr.bf16.mxu0 0
    %705 = vmatmul.mubr.bf16.gmra.mrb[0].mxu0 %v642
    %v706 = vpop.f32.mrb[0].mxu0
    %v707 = vadd.f32 0.0, %v706
    %v708 = vpop.f32.mrb[0].mxu0
    %v709 = vadd.f32 0.0, %v708
    %v710 = vpop.f32.mrb[0].mxu0
    %v711 = vadd.f32 0.0, %v710
    %v712 = vpop.f32.mrb[0].mxu0
    %v713 = vadd.f32 0.0, %v712
    %714 = vmatprep.mubr.bf16.mxu0 0
    %715 = vmatmul.mubr.bf16.gmra.mrb[0].mxu0 %v645
    %v716 = vpop.f32.mrb[0].mxu0
    %v717 = vadd.f32 0.0, %v716
    %v718 = vpop.f32.mrb[0].mxu0
    %v719 = vadd.f32 0.0, %v718
    %v720 = vpop.f32.mrb[0].mxu0
    %v721 = vadd.f32 0.0, %v720
    %v722 = vpop.f32.mrb[0].mxu0
    %v723 = vadd.f32 0.0, %v722
    %724 = vmatprep.mubr.bf16.mxu0 0
    %725 = vmatmul.mubr.bf16.gmra.mrb[0].mxu0 %v648
    %v726 = vpop.f32.mrb[0].mxu0
    %v727 = vadd.f32 0.0, %v726
    %v728 = vpop.f32.mrb[0].mxu0
    %v729 = vadd.f32 0.0, %v728
    %v730 = vpop.f32.mrb[0].mxu0
    %v731 = vadd.f32 0.0, %v730
    %v732 = vpop.f32.mrb[0].mxu0
    %v733 = vadd.f32 0.0, %v732
    %734 = vmatprep.mubr.bf16.mxu0 0
    %735 = vmatmul.mubr.bf16.gmra.mrb[0].mxu0 %v651
    %v736 = vpop.f32.mrb[0].mxu0
    %v737 = vadd.f32 0.0, %v736
    %v738 = vpop.f32.mrb[0].mxu0
    %v739 = vadd.f32 0.0, %v738
    %v740 = vpop.f32.mrb[0].mxu0
    %v741 = vadd.f32 0.0, %v740
    %v742 = vpop.f32.mrb[0].mxu0
    %v743 = vadd.f32 0.0, %v742
    %744 = vdwg.mxu0
    %745 = vmatprep.subr.bf16.mxu0 0
    %746 = vmatpush1.bf16.msra.mxu0 %v660
    %747 = vmatprep.subr.bf16.mxu0 0
    %748 = vmatpush1.bf16.msra.mxu0 0
    %749 = vmatprep.subr.bf16.mxu0 0
    %750 = vmatpush1.bf16.msra.mxu0 0
    %751 = vmatprep.subr.bf16.mxu0 0
    %752 = vmatpush1.bf16.msra.mxu0 0
    %753 = vmatprep.subr.bf16.mxu0 0
    %754 = vmatpush1.bf16.msra.mxu0 0
    %755 = vmatprep.subr.bf16.mxu0 0
    %756 = vmatpush1.bf16.msra.mxu0 0
    %757 = vmatprep.subr.bf16.mxu0 0
    %758 = vmatpush1.bf16.msra.mxu0 0
    %759 = vmatprep.subr.bf16.mxu0 0
    %760 = vmatpush1.bf16.msra.mxu0 0
    %761 = vmatprep.subr.bf16.mxu0 0
    %762 = vmatpush1.bf16.msra.mxu0 0
    %763 = vmatprep.subr.bf16.mxu0 0
    %764 = vmatpush1.bf16.msra.mxu0 0
    %765 = vmatprep.subr.bf16.mxu0 0
    %766 = vmatpush1.bf16.msra.mxu0 0
    %767 = vmatprep.subr.bf16.mxu0 0
    %768 = vmatpush1.bf16.msra.mxu0 0
    %769 = vmatprep.subr.bf16.mxu0 0
    %770 = vmatpush1.bf16.msra.mxu0 0
    %771 = vmatprep.subr.bf16.mxu0 0
    %772 = vmatpush1.bf16.msra.mxu0 0
    %773 = vmatprep.subr.bf16.mxu0 0
    %774 = vmatpush1.bf16.msra.mxu0 0
    %775 = vmatprep.subr.bf16.mxu0 0
    %776 = vmatpush1.bf16.msra.mxu0 0
    %777 = vmatprep.mubr.bf16.mxu0 0
    %778 = vmatmul.mubr.bf16.gmra.mrb[0].mxu0 %v639
    %v779 = vpop.f32.mrb[0].mxu0
    %v780 = vadd.f32 0.0, %v779
    %v781 = vpop.f32.mrb[0].mxu0
    %v782 = vpop.f32.mrb[0].mxu0
    %v783 = vadd.f32 0.0, %v782
    %v784 = vpop.f32.mrb[0].mxu0
    %785 = vmatprep.mubr.bf16.mxu0 0
    %786 = vmatmul.mubr.bf16.gmra.mrb[0].mxu0 %v642
    %v787 = vpop.f32.mrb[0].mxu0
    %v788 = vadd.f32 0.0, %v787
    %v789 = vpop.f32.mrb[0].mxu0
    %v790 = vpop.f32.mrb[0].mxu0
    %v791 = vadd.f32 0.0, %v790
    %v792 = vpop.f32.mrb[0].mxu0
    %793 = vmatprep.mubr.bf16.mxu0 0
    %794 = vmatmul.mubr.bf16.gmra.mrb[0].mxu0 %v645
    %v795 = vpop.f32.mrb[0].mxu0
    %v796 = vadd.f32 0.0, %v795
    %v797 = vpop.f32.mrb[0].mxu0
    %v798 = vpop.f32.mrb[0].mxu0
    %v799 = vadd.f32 0.0, %v798
    %v800 = vpop.f32.mrb[0].mxu0
    %801 = vmatprep.mubr.bf16.mxu0 0
    %802 = vmatmul.mubr.bf16.gmra.mrb[0].mxu0 %v648
    %v803 = vpop.f32.mrb[0].mxu0
    %v804 = vadd.f32 0.0, %v803
    %v805 = vpop.f32.mrb[0].mxu0
    %v806 = vpop.f32.mrb[0].mxu0
    %v807 = vadd.f32 0.0, %v806
    %v808 = vpop.f32.mrb[0].mxu0
    %809 = vmatprep.mubr.bf16.mxu0 0
    %810 = vmatmul.mubr.bf16.gmra.mrb[0].mxu0 %v651
    %v811 = vpop.f32.mrb[0].mxu0
    %v812 = vadd.f32 0.0, %v811
    %v813 = vpop.f32.mrb[0].mxu0
    %v814 = vpop.f32.mrb[0].mxu0
    %v815 = vadd.f32 0.0, %v814
    %v816 = vpop.f32.mrb[0].mxu0
    %817 = vdwg.mxu0
    %v818 = vadd.f32 %v447, %v697
    %v819 = vadd.f32 %v449, %v699
    %v820 = vadd.f32 %v530, %v780
    %v821 = vadd.f32 %v451, %v701
    %v822 = vadd.f32 %v453, %v703
    %v823 = vadd.f32 %v533, %v783
    %v824 = vadd.f32 %v457, %v707
    %v825 = vadd.f32 %v459, %v709
    %v826 = vadd.f32 %v538, %v788
    %v827 = vadd.f32 %v461, %v711
    %v828 = vadd.f32 %v463, %v713
    %v829 = vadd.f32 %v541, %v791
    %v830 = vadd.f32 %v467, %v717
    %v831 = vadd.f32 %v469, %v719
    %v832 = vadd.f32 %v546, %v796
    %v833 = vadd.f32 %v471, %v721
    %v834 = vadd.f32 %v473, %v723
    %v835 = vadd.f32 %v549, %v799
    %v836 = vadd.f32 %v477, %v727
    %v837 = vadd.f32 %v479, %v729
    %v838 = vadd.f32 %v554, %v804
    %v839 = vadd.f32 %v481, %v731
    %v840 = vadd.f32 %v483, %v733
    %v841 = vadd.f32 %v557, %v807
    %v842 = vadd.f32 %v487, %v737
    %v843 = vadd.f32 %v489, %v739
    %v844 = vadd.f32 %v562, %v812
    %v845 = vadd.f32 %v491, %v741
    %v846 = vadd.f32 %v493, %v743
    %v847 = vadd.f32 %v565, %v815
    %v848 = vld [vmem:[#allocation3 + $0x4] sm:$0xe]
    %v849 = vld [vmem:[#allocation3 + $0x8] sm:$0xf]
    %v850 = vld [vmem:[#allocation3 + $0xc] sm:$0xf]
    %v851 = vld [vmem:[#allocation3 + $0x10] sm:$0xf]
    %v852 = vld [vmem:[#allocation3 + $0x14] sm:$0xf]
    %v853 = vld [vmem:[#allocation3 + $0x18] sm:$0xf]
    %v854 = vld [vmem:[#allocation3 + $0x1c] sm:$0xf]
    %v855 = vld [vmem:[#allocation3 + $0x20] sm:$0xf]
    %v856 = vld [vmem:[#allocation3 + $0x24] sm:$0xf]
    %v857 = vld [vmem:[#allocation3 + $0x28] sm:$0xf]
    %v858 = vld [vmem:[#allocation3 + $0x2c] sm:$0x1]
    %s859 = scalar_lea.vmem [#allocation6], 18
    %v860 = vld [vmem:[%s859] sm:$0x3f]
    %v872 = vunpack.c.l.b16 %v848
    %v873 = vunpack.c.l.b16 %v849
    %v874 = vunpack.c.l.b16 %v850
    %v875 = vunpack.c.l.b16 %v851
    %v876 = vunpack.c.l.b16 %v852
    %v877 = vunpack.c.l.b16 %v853
    %v878 = vunpack.c.l.b16 %v854
    %v879 = vunpack.c.l.b16 %v855
    %v880 = vunpack.c.l.b16 %v856
    %v881 = vunpack.c.l.b16 %v857
    %v882 = vunpack.c.l.b16 %v858
    %v883 = vpack.c.b16 %v873, %v872
    %v884 = vpack.c.b16 %v875, %v874
    %v885 = vpack.c.b16 %v877, %v876
    %v886 = vpack.c.b16 %v879, %v878
    %v887 = vpack.c.b16 %v881, %v880
    %v888 = vpack.c.b16 %v882, %v882
    %v889 = vrot.slane %v883, 1
    %v890 = vrot.slane %v884, 1
    %v891 = vsel %vm609, %v889, %v890
    %v892 = vrot.slane %v885, 1
    %v893 = vsel %vm609, %v890, %v892
    %v894 = vrot.slane %v886, 1
    %v895 = vsel %vm609, %v892, %v894
    %v896 = vrot.slane %v887, 1
    %v897 = vsel %vm609, %v894, %v896
    %v898 = vrot.slane %v888, 1
    %v899 = vsel %vm609, %v896, %v898
    %v901 = vcombine.high %v860, %v860
    %v903 = vunpack.c.l.s4 1983009808
    %v904 = vunpack.c.0.s8 %v903
    %v905 = vlaneseq
    %v906 = vshrl.u32 %v905, 7
    %v907 = vsub.s32 %v904, %v906
    %v908 = vrot.slane %v860, %v907
    %v910 = vunpack.c.l.s4 1983009808
    %v911 = vunpack.c.0.s8 %v910
    %v912 = vlaneseq
    %v913 = vshrl.u32 %v912, 7
    %v914 = vsub.s32 %v911, %v913
    %v915 = vrot.slane %v901, %v914
    %v916 = vcombine.high %v908, %v908
    %v918 = vsel %vm194, %v891, 0
    %v921 = vsel %vm194, %v893, 0
    %v924 = vsel %vm194, %v895, 0
    %v927 = vsel %vm194, %v897, 0
    %v930 = vsel %vm194, %v899, 0
    %v933 = vsel %vm210, %v908, 0
    %v936 = vsel %vm210, %v916, 0
    %v939 = vsel %vm210, %v915, 0
    %941 = vmatprep.subr.bf16.mxu0 %v936
    %942 = vmatpush1.bf16.msra.mxu0 %v933
    %943 = vmatprep.subr.bf16.mxu0 0
    %944 = vmatpush1.bf16.msra.mxu0 0
    %945 = vmatprep.subr.bf16.mxu0 0
    %946 = vmatpush1.bf16.msra.mxu0 0
    %947 = vmatprep.subr.bf16.mxu0 0
    %948 = vmatpush1.bf16.msra.mxu0 0
    %949 = vmatprep.subr.bf16.mxu0 0
    %950 = vmatpush1.bf16.msra.mxu0 0
    %951 = vmatprep.subr.bf16.mxu0 0
    %952 = vmatpush1.bf16.msra.mxu0 0
    %953 = vmatprep.subr.bf16.mxu0 0
    %954 = vmatpush1.bf16.msra.mxu0 0
    %955 = vmatprep.subr.bf16.mxu0 0
    %956 = vmatpush1.bf16.msra.mxu0 0
    %957 = vmatprep.subr.bf16.mxu0 0
    %958 = vmatpush1.bf16.msra.mxu0 0
    %959 = vmatprep.subr.bf16.mxu0 0
    %960 = vmatpush1.bf16.msra.mxu0 0
    %961 = vmatprep.subr.bf16.mxu0 0
    %962 = vmatpush1.bf16.msra.mxu0 0
    %963 = vmatprep.subr.bf16.mxu0 0
    %964 = vmatpush1.bf16.msra.mxu0 0
    %965 = vmatprep.subr.bf16.mxu0 0
    %966 = vmatpush1.bf16.msra.mxu0 0
    %967 = vmatprep.subr.bf16.mxu0 0
    %968 = vmatpush1.bf16.msra.mxu0 0
    %969 = vmatprep.subr.bf16.mxu0 0
    %970 = vmatpush1.bf16.msra.mxu0 0
    %971 = vmatprep.subr.bf16.mxu0 0
    %972 = vmatpush1.bf16.msra.mxu0 0
    %973 = vmatprep.mubr.bf16.mxu0 0
    %974 = vmatmul.mubr.bf16.gmra.mrb[0].mxu0 %v918
    %v975 = vpop.f32.mrb[0].mxu0
    %v976 = vadd.f32 0.0, %v975
    %v977 = vpop.f32.mrb[0].mxu0
    %v978 = vadd.f32 0.0, %v977
    %v979 = vpop.f32.mrb[0].mxu0
    %v980 = vadd.f32 0.0, %v979
    %v981 = vpop.f32.mrb[0].mxu0
    %v982 = vadd.f32 0.0, %v981
    %983 = vmatprep.mubr.bf16.mxu0 0
    %984 = vmatmul.mubr.bf16.gmra.mrb[0].mxu0 %v921
    %v985 = vpop.f32.mrb[0].mxu0
    %v986 = vadd.f32 0.0, %v985
    %v987 = vpop.f32.mrb[0].mxu0
    %v988 = vadd.f32 0.0, %v987
    %v989 = vpop.f32.mrb[0].mxu0
    %v990 = vadd.f32 0.0, %v989
    %v991 = vpop.f32.mrb[0].mxu0
    %v992 = vadd.f32 0.0, %v991
    %993 = vmatprep.mubr.bf16.mxu0 0
    %994 = vmatmul.mubr.bf16.gmra.mrb[0].mxu0 %v924
    %v995 = vpop.f32.mrb[0].mxu0
    %v996 = vadd.f32 0.0, %v995
    %v997 = vpop.f32.mrb[0].mxu0
    %v998 = vadd.f32 0.0, %v997
    %v999 = vpop.f32.mrb[0].mxu0
    %v1000 = vadd.f32 0.0, %v999
    %v1001 = vpop.f32.mrb[0].mxu0
    %v1002 = vadd.f32 0.0, %v1001
    %1003 = vmatprep.mubr.bf16.mxu0 0
    %1004 = vmatmul.mubr.bf16.gmra.mrb[0].mxu0 %v927
    %v1005 = vpop.f32.mrb[0].mxu0
    %v1006 = vadd.f32 0.0, %v1005
    %v1007 = vpop.f32.mrb[0].mxu0
    %v1008 = vadd.f32 0.0, %v1007
    %v1009 = vpop.f32.mrb[0].mxu0
    %v1010 = vadd.f32 0.0, %v1009
    %v1011 = vpop.f32.mrb[0].mxu0
    %v1012 = vadd.f32 0.0, %v1011
    %1013 = vmatprep.mubr.bf16.mxu0 0
    %1014 = vmatmul.mubr.bf16.gmra.mrb[0].mxu0 %v930
    %v1015 = vpop.f32.mrb[0].mxu0
    %v1016 = vadd.f32 0.0, %v1015
    %v1017 = vpop.f32.mrb[0].mxu0
    %v1018 = vadd.f32 0.0, %v1017
    %v1019 = vpop.f32.mrb[0].mxu0
    %v1020 = vadd.f32 0.0, %v1019
    %v1021 = vpop.f32.mrb[0].mxu0
    %v1022 = vadd.f32 0.0, %v1021
    %1023 = vdwg.mxu0
    %1024 = vmatprep.subr.bf16.mxu0 0
    %1025 = vmatpush1.bf16.msra.mxu0 %v939
    %1026 = vmatprep.subr.bf16.mxu0 0
    %1027 = vmatpush1.bf16.msra.mxu0 0
    %1028 = vmatprep.subr.bf16.mxu0 0
    %1029 = vmatpush1.bf16.msra.mxu0 0
    %1030 = vmatprep.subr.bf16.mxu0 0
    %1031 = vmatpush1.bf16.msra.mxu0 0
    %1032 = vmatprep.subr.bf16.mxu0 0
    %1033 = vmatpush1.bf16.msra.mxu0 0
    %1034 = vmatprep.subr.bf16.mxu0 0
    %1035 = vmatpush1.bf16.msra.mxu0 0
    %1036 = vmatprep.subr.bf16.mxu0 0
    %1037 = vmatpush1.bf16.msra.mxu0 0
    %1038 = vmatprep.subr.bf16.mxu0 0
    %1039 = vmatpush1.bf16.msra.mxu0 0
    %1040 = vmatprep.subr.bf16.mxu0 0
    %1041 = vmatpush1.bf16.msra.mxu0 0
    %1042 = vmatprep.subr.bf16.mxu0 0
    %1043 = vmatpush1.bf16.msra.mxu0 0
    %1044 = vmatprep.subr.bf16.mxu0 0
    %1045 = vmatpush1.bf16.msra.mxu0 0
    %1046 = vmatprep.subr.bf16.mxu0 0
    %1047 = vmatpush1.bf16.msra.mxu0 0
    %1048 = vmatprep.subr.bf16.mxu0 0
    %1049 = vmatpush1.bf16.msra.mxu0 0
    %1050 = vmatprep.subr.bf16.mxu0 0
    %1051 = vmatpush1.bf16.msra.mxu0 0
    %1052 = vmatprep.subr.bf16.mxu0 0
    %1053 = vmatpush1.bf16.msra.mxu0 0
    %1054 = vmatprep.subr.bf16.mxu0 0
    %1055 = vmatpush1.bf16.msra.mxu0 0
    %1056 = vmatprep.mubr.bf16.mxu0 0
    %1057 = vmatmul.mubr.bf16.gmra.mrb[0].mxu0 %v918
    %v1058 = vpop.f32.mrb[0].mxu0
    %v1059 = vadd.f32 0.0, %v1058
    %v1060 = vpop.f32.mrb[0].mxu0
    %v1061 = vpop.f32.mrb[0].mxu0
    %v1062 = vadd.f32 0.0, %v1061
    %v1063 = vpop.f32.mrb[0].mxu0
    %1064 = vmatprep.mubr.bf16.mxu0 0
    %1065 = vmatmul.mubr.bf16.gmra.mrb[0].mxu0 %v921
    %v1066 = vpop.f32.mrb[0].mxu0
    %v1067 = vadd.f32 0.0, %v1066
    %v1068 = vpop.f32.mrb[0].mxu0
    %v1069 = vpop.f32.mrb[0].mxu0
    %v1070 = vadd.f32 0.0, %v1069
    %v1071 = vpop.f32.mrb[0].mxu0
    %1072 = vmatprep.mubr.bf16.mxu0 0
    %1073 = vmatmul.mubr.bf16.gmra.mrb[0].mxu0 %v924
    %v1074 = vpop.f32.mrb[0].mxu0
    %v1075 = vadd.f32 0.0, %v1074
    %v1076 = vpop.f32.mrb[0].mxu0
    %v1077 = vpop.f32.mrb[0].mxu0
    %v1078 = vadd.f32 0.0, %v1077
    %v1079 = vpop.f32.mrb[0].mxu0
    %1080 = vmatprep.mubr.bf16.mxu0 0
    %1081 = vmatmul.mubr.bf16.gmra.mrb[0].mxu0 %v927
    %v1082 = vpop.f32.mrb[0].mxu0
    %v1083 = vadd.f32 0.0, %v1082
    %v1084 = vpop.f32.mrb[0].mxu0
    %v1085 = vpop.f32.mrb[0].mxu0
    %v1086 = vadd.f32 0.0, %v1085
    %v1087 = vpop.f32.mrb[0].mxu0
    %1088 = vmatprep.mubr.bf16.mxu0 0
    %1089 = vmatmul.mubr.bf16.gmra.mrb[0].mxu0 %v930
    %v1090 = vpop.f32.mrb[0].mxu0
    %v1091 = vadd.f32 0.0, %v1090
    %v1092 = vpop.f32.mrb[0].mxu0
    %v1093 = vpop.f32.mrb[0].mxu0
    %v1094 = vadd.f32 0.0, %v1093
    %v1095 = vpop.f32.mrb[0].mxu0
    %1096 = vdwg.mxu0
    %v1097 = vadd.f32 %v818, %v976
    %v1098 = vadd.f32 %v819, %v978
    %v1099 = vadd.f32 %v820, %v1059
    %v1100 = vadd.f32 %v821, %v980
    %v1101 = vadd.f32 %v822, %v982
    %v1102 = vadd.f32 %v823, %v1062
    %v1103 = vadd.f32 %v824, %v986
    %v1104 = vadd.f32 %v825, %v988
    %v1105 = vadd.f32 %v826, %v1067
    %v1106 = vadd.f32 %v827, %v990
    %v1107 = vadd.f32 %v828, %v992
    %v1108 = vadd.f32 %v829, %v1070
    %v1109 = vadd.f32 %v830, %v996
    %v1110 = vadd.f32 %v831, %v998
    %v1111 = vadd.f32 %v832, %v1075
    %v1112 = vadd.f32 %v833, %v1000
    %v1113 = vadd.f32 %v834, %v1002
    %v1114 = vadd.f32 %v835, %v1078
    %v1115 = vadd.f32 %v836, %v1006
    %v1116 = vadd.f32 %v837, %v1008
    %v1117 = vadd.f32 %v838, %v1083
    %v1118 = vadd.f32 %v839, %v1010
    %v1119 = vadd.f32 %v840, %v1012
    %v1120 = vadd.f32 %v841, %v1086
    %v1121 = vadd.f32 %v842, %v1016
    %v1122 = vadd.f32 %v843, %v1018
    %v1123 = vadd.f32 %v844, %v1091
    %v1124 = vadd.f32 %v845, %v1020
    %v1125 = vadd.f32 %v846, %v1022
    %v1126 = vadd.f32 %v847, %v1094
    %v1127 = vld [vmem:[#allocation3 + $0x4] sm:$0xe]
    %v1128 = vld [vmem:[#allocation3 + $0x8] sm:$0xf]
    %v1129 = vld [vmem:[#allocation3 + $0xc] sm:$0xf]
    %v1130 = vld [vmem:[#allocation3 + $0x10] sm:$0xf]
    %v1131 = vld [vmem:[#allocation3 + $0x14] sm:$0xf]
    %v1132 = vld [vmem:[#allocation3 + $0x18] sm:$0xf]
    %v1133 = vld [vmem:[#allocation3 + $0x1c] sm:$0xf]
    %v1134 = vld [vmem:[#allocation3 + $0x20] sm:$0xf]
    %v1135 = vld [vmem:[#allocation3 + $0x24] sm:$0xf]
    %v1136 = vld [vmem:[#allocation3 + $0x28] sm:$0xf]
    %v1137 = vld [vmem:[#allocation3 + $0x2c] sm:$0x3]
    %s1138 = scalar_lea.vmem [#allocation6], 24
    %v1139 = vld [vmem:[%s1138] sm:$0x3f]
    %v1151 = vunpack.c.l.b16 %v1127
    %v1152 = vunpack.c.l.b16 %v1128
    %v1153 = vunpack.c.l.b16 %v1129
    %v1154 = vunpack.c.l.b16 %v1130
    %v1155 = vunpack.c.l.b16 %v1131
    %v1156 = vunpack.c.l.b16 %v1132
    %v1157 = vunpack.c.l.b16 %v1133
    %v1158 = vunpack.c.l.b16 %v1134
    %v1159 = vunpack.c.l.b16 %v1135
    %v1160 = vunpack.c.l.b16 %v1136
    %v1161 = vunpack.c.l.b16 %v1137
    %v1162 = vpack.c.b16 %v1152, %v1151
    %v1163 = vpack.c.b16 %v1154, %v1153
    %v1164 = vpack.c.b16 %v1156, %v1155
    %v1165 = vpack.c.b16 %v1158, %v1157
    %v1166 = vpack.c.b16 %v1160, %v1159
    %v1167 = vpack.c.b16 %v1161, %v1161
    %vm1168 = vsmask.f32 6400
    %v1170 = vshrl.u32 %v1162, 16
    %v1172 = vrot.slane %v1170, 1
    %v1173 = vshll.u32 %v1162, 16
    %v1175 = vrot.slane %v1173, 2
    %v1176 = vor.u32 %v1172, %v1175
    %v1178 = vshrl.u32 %v1163, 16
    %v1180 = vrot.slane %v1178, 1
    %v1181 = vshll.u32 %v1163, 16
    %v1183 = vrot.slane %v1181, 2
    %v1184 = vor.u32 %v1180, %v1183
    %v1185 = vsel %vm1168, %v1176, %v1184
    %v1187 = vshrl.u32 %v1164, 16
    %v1189 = vrot.slane %v1187, 1
    %v1190 = vshll.u32 %v1164, 16
    %v1192 = vrot.slane %v1190, 2
    %v1193 = vor.u32 %v1189, %v1192
    %v1194 = vsel %vm1168, %v1184, %v1193
    %v1196 = vshrl.u32 %v1165, 16
    %v1198 = vrot.slane %v1196, 1
    %v1199 = vshll.u32 %v1165, 16
    %v1201 = vrot.slane %v1199, 2
    %v1202 = vor.u32 %v1198, %v1201
    %v1203 = vsel %vm1168, %v1193, %v1202
    %v1205 = vshrl.u32 %v1166, 16
    %v1207 = vrot.slane %v1205, 1
    %v1208 = vshll.u32 %v1166, 16
    %v1210 = vrot.slane %v1208, 2
    %v1211 = vor.u32 %v1207, %v1210
    %v1212 = vsel %vm1168, %v1202, %v1211
    %v1214 = vshrl.u32 %v1167, 16
    %v1216 = vrot.slane %v1214, 1
    %v1217 = vshll.u32 %v1167, 16
    %v1219 = vrot.slane %v1217, 2
    %v1220 = vor.u32 %v1216, %v1219
    %v1221 = vsel %vm1168, %v1211, %v1220
    %v1223 = vcombine.high %v1139, %v1139
    %v1225 = vunpack.c.l.s4 1983009808
    %v1226 = vunpack.c.0.s8 %v1225
    %v1227 = vlaneseq
    %v1228 = vshrl.u32 %v1227, 7
    %v1229 = vsub.s32 %v1226, %v1228
    %v1230 = vrot.slane %v1139, %v1229
    %v1232 = vunpack.c.l.s4 1983009808
    %v1233 = vunpack.c.0.s8 %v1232
    %v1234 = vlaneseq
    %v1235 = vshrl.u32 %v1234, 7
    %v1236 = vsub.s32 %v1233, %v1235
    %v1237 = vrot.slane %v1223, %v1236
    %v1238 = vcombine.high %v1230, %v1230
    %v1240 = vsel %vm194, %v1185, 0
    %v1243 = vsel %vm194, %v1194, 0
    %v1246 = vsel %vm194, %v1203, 0
    %v1249 = vsel %vm194, %v1212, 0
    %v1252 = vsel %vm194, %v1221, 0
    %v1255 = vsel %vm210, %v1230, 0
    %v1258 = vsel %vm210, %v1238, 0
    %v1261 = vsel %vm210, %v1237, 0
    %1263 = vmatprep.subr.bf16.mxu0 %v1258
    %1264 = vmatpush1.bf16.msra.mxu0 %v1255
    %1265 = vmatprep.subr.bf16.mxu0 0
    %1266 = vmatpush1.bf16.msra.mxu0 0
    %1267 = vmatprep.subr.bf16.mxu0 0
    %1268 = vmatpush1.bf16.msra.mxu0 0
    %1269 = vmatprep.subr.bf16.mxu0 0
    %1270 = vmatpush1.bf16.msra.mxu0 0
    %1271 = vmatprep.subr.bf16.mxu0 0
    %1272 = vmatpush1.bf16.msra.mxu0 0
    %1273 = vmatprep.subr.bf16.mxu0 0
    %1274 = vmatpush1.bf16.msra.mxu0 0
    %1275 = vmatprep.subr.bf16.mxu0 0
    %1276 = vmatpush1.bf16.msra.mxu0 0
    %1277 = vmatprep.subr.bf16.mxu0 0
    %1278 = vmatpush1.bf16.msra.mxu0 0
    %1279 = vmatprep.subr.bf16.mxu0 0
    %1280 = vmatpush1.bf16.msra.mxu0 0
    %1281 = vmatprep.subr.bf16.mxu0 0
    %1282 = vmatpush1.bf16.msra.mxu0 0
    %1283 = vmatprep.subr.bf16.mxu0 0
    %1284 = vmatpush1.bf16.msra.mxu0 0
    %1285 = vmatprep.subr.bf16.mxu0 0
    %1286 = vmatpush1.bf16.msra.mxu0 0
    %1287 = vmatprep.subr.bf16.mxu0 0
    %1288 = vmatpush1.bf16.msra.mxu0 0
    %1289 = vmatprep.subr.bf16.mxu0 0
    %1290 = vmatpush1.bf16.msra.mxu0 0
    %1291 = vmatprep.subr.bf16.mxu0 0
    %1292 = vmatpush1.bf16.msra.mxu0 0
    %1293 = vmatprep.subr.bf16.mxu0 0
    %1294 = vmatpush1.bf16.msra.mxu0 0
    %1295 = vmatprep.mubr.bf16.mxu0 0
    %1296 = vmatmul.mubr.bf16.gmra.mrb[0].mxu0 %v1240
    %v1297 = vpop.f32.mrb[0].mxu0
    %v1298 = vadd.f32 0.0, %v1297
    %v1299 = vpop.f32.mrb[0].mxu0
    %v1300 = vadd.f32 0.0, %v1299
    %v1301 = vpop.f32.mrb[0].mxu0
    %v1302 = vadd.f32 0.0, %v1301
    %v1303 = vpop.f32.mrb[0].mxu0
    %v1304 = vadd.f32 0.0, %v1303
    %1305 = vmatprep.mubr.bf16.mxu0 0
    %1306 = vmatmul.mubr.bf16.gmra.mrb[0].mxu0 %v1243
    %v1307 = vpop.f32.mrb[0].mxu0
    %v1308 = vadd.f32 0.0, %v1307
    %v1309 = vpop.f32.mrb[0].mxu0
    %v1310 = vadd.f32 0.0, %v1309
    %v1311 = vpop.f32.mrb[0].mxu0
    %v1312 = vadd.f32 0.0, %v1311
    %v1313 = vpop.f32.mrb[0].mxu0
    %v1314 = vadd.f32 0.0, %v1313
    %1315 = vmatprep.mubr.bf16.mxu0 0
    %1316 = vmatmul.mubr.bf16.gmra.mrb[0].mxu0 %v1246
    %v1317 = vpop.f32.mrb[0].mxu0
    %v1318 = vadd.f32 0.0, %v1317
    %v1319 = vpop.f32.mrb[0].mxu0
    %v1320 = vadd.f32 0.0, %v1319
    %v1321 = vpop.f32.mrb[0].mxu0
    %v1322 = vadd.f32 0.0, %v1321
    %v1323 = vpop.f32.mrb[0].mxu0
    %v1324 = vadd.f32 0.0, %v1323
    %1325 = vmatprep.mubr.bf16.mxu0 0
    %1326 = vmatmul.mubr.bf16.gmra.mrb[0].mxu0 %v1249
    %v1327 = vpop.f32.mrb[0].mxu0
    %v1328 = vadd.f32 0.0, %v1327
    %v1329 = vpop.f32.mrb[0].mxu0
    %v1330 = vadd.f32 0.0, %v1329
    %v1331 = vpop.f32.mrb[0].mxu0
    %v1332 = vadd.f32 0.0, %v1331
    %v1333 = vpop.f32.mrb[0].mxu0
    %v1334 = vadd.f32 0.0, %v1333
    %1335 = vmatprep.mubr.bf16.mxu0 0
    %1336 = vmatmul.mubr.bf16.gmra.mrb[0].mxu0 %v1252
    %v1337 = vpop.f32.mrb[0].mxu0
    %v1338 = vadd.f32 0.0, %v1337
    %v1339 = vpop.f32.mrb[0].mxu0
    %v1340 = vadd.f32 0.0, %v1339
    %v1341 = vpop.f32.mrb[0].mxu0
    %v1342 = vadd.f32 0.0, %v1341
    %v1343 = vpop.f32.mrb[0].mxu0
    %v1344 = vadd.f32 0.0, %v1343
    %1345 = vdwg.mxu0
    %1346 = vmatprep.subr.bf16.mxu0 0
    %1347 = vmatpush1.bf16.msra.mxu0 %v1261
    %1348 = vmatprep.subr.bf16.mxu0 0
    %1349 = vmatpush1.bf16.msra.mxu0 0
    %1350 = vmatprep.subr.bf16.mxu0 0
    %1351 = vmatpush1.bf16.msra.mxu0 0
    %1352 = vmatprep.subr.bf16.mxu0 0
    %1353 = vmatpush1.bf16.msra.mxu0 0
    %1354 = vmatprep.subr.bf16.mxu0 0
    %1355 = vmatpush1.bf16.msra.mxu0 0
    %1356 = vmatprep.subr.bf16.mxu0 0
    %1357 = vmatpush1.bf16.msra.mxu0 0
    %1358 = vmatprep.subr.bf16.mxu0 0
    %1359 = vmatpush1.bf16.msra.mxu0 0
    %1360 = vmatprep.subr.bf16.mxu0 0
    %1361 = vmatpush1.bf16.msra.mxu0 0
    %1362 = vmatprep.subr.bf16.mxu0 0
    %1363 = vmatpush1.bf16.msra.mxu0 0
    %1364 = vmatprep.subr.bf16.mxu0 0
    %1365 = vmatpush1.bf16.msra.mxu0 0
    %1366 = vmatprep.subr.bf16.mxu0 0
    %1367 = vmatpush1.bf16.msra.mxu0 0
    %1368 = vmatprep.subr.bf16.mxu0 0
    %1369 = vmatpush1.bf16.msra.mxu0 0
    %1370 = vmatprep.subr.bf16.mxu0 0
    %1371 = vmatpush1.bf16.msra.mxu0 0
    %1372 = vmatprep.subr.bf16.mxu0 0
    %1373 = vmatpush1.bf16.msra.mxu0 0
    %1374 = vmatprep.subr.bf16.mxu0 0
    %1375 = vmatpush1.bf16.msra.mxu0 0
    %1376 = vmatprep.subr.bf16.mxu0 0
    %1377 = vmatpush1.bf16.msra.mxu0 0
    %1378 = vmatprep.mubr.bf16.mxu0 0
    %1379 = vmatmul.mubr.bf16.gmra.mrb[0].mxu0 %v1240
    %v1380 = vpop.f32.mrb[0].mxu0
    %v1381 = vadd.f32 0.0, %v1380
    %v1382 = vpop.f32.mrb[0].mxu0
    %v1383 = vpop.f32.mrb[0].mxu0
    %v1384 = vadd.f32 0.0, %v1383
    %v1385 = vpop.f32.mrb[0].mxu0
    %1386 = vmatprep.mubr.bf16.mxu0 0
    %1387 = vmatmul.mubr.bf16.gmra.mrb[0].mxu0 %v1243
    %v1388 = vpop.f32.mrb[0].mxu0
    %v1389 = vadd.f32 0.0, %v1388
    %v1390 = vpop.f32.mrb[0].mxu0
    %v1391 = vpop.f32.mrb[0].mxu0
    %v1392 = vadd.f32 0.0, %v1391
    %v1393 = vpop.f32.mrb[0].mxu0
    %1394 = vmatprep.mubr.bf16.mxu0 0
    %1395 = vmatmul.mubr.bf16.gmra.mrb[0].mxu0 %v1246
    %v1396 = vpop.f32.mrb[0].mxu0
    %v1397 = vadd.f32 0.0, %v1396
    %v1398 = vpop.f32.mrb[0].mxu0
    %v1399 = vpop.f32.mrb[0].mxu0
    %v1400 = vadd.f32 0.0, %v1399
    %v1401 = vpop.f32.mrb[0].mxu0
    %1402 = vmatprep.mubr.bf16.mxu0 0
    %1403 = vmatmul.mubr.bf16.gmra.mrb[0].mxu0 %v1249
    %v1404 = vpop.f32.mrb[0].mxu0
    %v1405 = vadd.f32 0.0, %v1404
    %v1406 = vpop.f32.mrb[0].mxu0
    %v1407 = vpop.f32.mrb[0].mxu0
    %v1408 = vadd.f32 0.0, %v1407
    %v1409 = vpop.f32.mrb[0].mxu0
    %1410 = vmatprep.mubr.bf16.mxu0 0
    %1411 = vmatmul.mubr.bf16.gmra.mrb[0].mxu0 %v1252
    %v1412 = vpop.f32.mrb[0].mxu0
    %v1413 = vadd.f32 0.0, %v1412
    %v1414 = vpop.f32.mrb[0].mxu0
    %v1415 = vpop.f32.mrb[0].mxu0
    %v1416 = vadd.f32 0.0, %v1415
    %v1417 = vpop.f32.mrb[0].mxu0
    %1418 = vdwg.mxu0
    %v1419 = vadd.f32 %v1097, %v1298
    %v1420 = vadd.f32 %v1098, %v1300
    %v1421 = vadd.f32 %v1099, %v1381
    %v1422 = vadd.f32 %v1100, %v1302
    %v1423 = vadd.f32 %v1101, %v1304
    %v1424 = vadd.f32 %v1102, %v1384
    %v1425 = vadd.f32 %v1103, %v1308
    %v1426 = vadd.f32 %v1104, %v1310
    %v1427 = vadd.f32 %v1105, %v1389
    %v1428 = vadd.f32 %v1106, %v1312
    %v1429 = vadd.f32 %v1107, %v1314
    %v1430 = vadd.f32 %v1108, %v1392
    %v1431 = vadd.f32 %v1109, %v1318
    %v1432 = vadd.f32 %v1110, %v1320
    %v1433 = vadd.f32 %v1111, %v1397
    %v1434 = vadd.f32 %v1112, %v1322
    %v1435 = vadd.f32 %v1113, %v1324
    %v1436 = vadd.f32 %v1114, %v1400
    %v1437 = vadd.f32 %v1115, %v1328
    %v1438 = vadd.f32 %v1116, %v1330
    %v1439 = vadd.f32 %v1117, %v1405
    %v1440 = vadd.f32 %v1118, %v1332
    %v1441 = vadd.f32 %v1119, %v1334
    %v1442 = vadd.f32 %v1120, %v1408
    %v1443 = vadd.f32 %v1121, %v1338
    %v1444 = vadd.f32 %v1122, %v1340
    %v1445 = vadd.f32 %v1123, %v1413
    %v1446 = vadd.f32 %v1124, %v1342
    %v1447 = vadd.f32 %v1125, %v1344
    %v1448 = vadd.f32 %v1126, %v1416
    %v1449 = vld [vmem:[#allocation3 + $0x4] sm:$0xc]
    %v1450 = vld [vmem:[#allocation3 + $0x8] sm:$0xf]
    %v1451 = vld [vmem:[#allocation3 + $0xc] sm:$0xf]
    %v1452 = vld [vmem:[#allocation3 + $0x10] sm:$0xf]
    %v1453 = vld [vmem:[#allocation3 + $0x14] sm:$0xf]
    %v1454 = vld [vmem:[#allocation3 + $0x18] sm:$0xf]
    %v1455 = vld [vmem:[#allocation3 + $0x1c] sm:$0xf]
    %v1456 = vld [vmem:[#allocation3 + $0x20] sm:$0xf]
    %v1457 = vld [vmem:[#allocation3 + $0x24] sm:$0xf]
    %v1458 = vld [vmem:[#allocation3 + $0x28] sm:$0xf]
    %v1459 = vld [vmem:[#allocation3 + $0x2c] sm:$0x3]
    %s1460 = scalar_lea.vmem [#allocation6], 30
    %v1461 = vld [vmem:[%s1460] sm:$0x3f]
    %v1473 = vunpack.c.l.b16 %v1449
    %v1474 = vunpack.c.l.b16 %v1450
    %v1475 = vunpack.c.l.b16 %v1451
    %v1476 = vunpack.c.l.b16 %v1452
    %v1477 = vunpack.c.l.b16 %v1453
    %v1478 = vunpack.c.l.b16 %v1454
    %v1479 = vunpack.c.l.b16 %v1455
    %v1480 = vunpack.c.l.b16 %v1456
    %v1481 = vunpack.c.l.b16 %v1457
    %v1482 = vunpack.c.l.b16 %v1458
    %v1483 = vunpack.c.l.b16 %v1459
    %v1484 = vpack.c.b16 %v1474, %v1473
    %v1485 = vpack.c.b16 %v1476, %v1475
    %v1486 = vpack.c.b16 %v1478, %v1477
    %v1487 = vpack.c.b16 %v1480, %v1479
    %v1488 = vpack.c.b16 %v1482, %v1481
    %v1489 = vpack.c.b16 %v1483, %v1483
    %vm1490 = vcmask 1045504
    %v1491 = vrot.slane %v1484, 2
    %v1492 = vrot.slane %v1485, 2
    %v1493 = vsel %vm1490, %v1491, %v1492
    %v1494 = vrot.slane %v1486, 2
    %v1495 = vsel %vm1490, %v1492, %v1494
    %v1496 = vrot.slane %v1487, 2
    %v1497 = vsel %vm1490, %v1494, %v1496
    %v1498 = vrot.slane %v1488, 2
    %v1499 = vsel %vm1490, %v1496, %v1498
    %v1500 = vrot.slane %v1489, 2
    %v1501 = vsel %vm1490, %v1498, %v1500
    %v1503 = vcombine.high %v1461, %v1461
    %v1505 = vunpack.c.l.s4 1983009808
    %v1506 = vunpack.c.0.s8 %v1505
    %v1507 = vlaneseq
    %v1508 = vshrl.u32 %v1507, 7
    %v1509 = vsub.s32 %v1506, %v1508
    %v1510 = vrot.slane %v1461, %v1509
    %v1512 = vunpack.c.l.s4 1983009808
    %v1513 = vunpack.c.0.s8 %v1512
    %v1514 = vlaneseq
    %v1515 = vshrl.u32 %v1514, 7
    %v1516 = vsub.s32 %v1513, %v1515
    %v1517 = vrot.slane %v1503, %v1516
    %v1518 = vcombine.high %v1510, %v1510
    %v1520 = vsel %vm194, %v1493, 0
    %v1523 = vsel %vm194, %v1495, 0
    %v1526 = vsel %vm194, %v1497, 0
    %v1529 = vsel %vm194, %v1499, 0
    %v1532 = vsel %vm194, %v1501, 0
    %v1535 = vsel %vm210, %v1510, 0
    %v1538 = vsel %vm210, %v1518, 0
    %v1541 = vsel %vm210, %v1517, 0
    %1543 = vmatprep.subr.bf16.mxu0 %v1538
    %1544 = vmatpush1.bf16.msra.mxu0 %v1535
    %1545 = vmatprep.subr.bf16.mxu0 0
    %1546 = vmatpush1.bf16.msra.mxu0 0
    %1547 = vmatprep.subr.bf16.mxu0 0
    %1548 = vmatpush1.bf16.msra.mxu0 0
    %1549 = vmatprep.subr.bf16.mxu0 0
    %1550 = vmatpush1.bf16.msra.mxu0 0
    %1551 = vmatprep.subr.bf16.mxu0 0
    %1552 = vmatpush1.bf16.msra.mxu0 0
    %1553 = vmatprep.subr.bf16.mxu0 0
    %1554 = vmatpush1.bf16.msra.mxu0 0
    %1555 = vmatprep.subr.bf16.mxu0 0
    %1556 = vmatpush1.bf16.msra.mxu0 0
    %1557 = vmatprep.subr.bf16.mxu0 0
    %1558 = vmatpush1.bf16.msra.mxu0 0
    %1559 = vmatprep.subr.bf16.mxu0 0
    %1560 = vmatpush1.bf16.msra.mxu0 0
    %1561 = vmatprep.subr.bf16.mxu0 0
    %1562 = vmatpush1.bf16.msra.mxu0 0
    %1563 = vmatprep.subr.bf16.mxu0 0
    %1564 = vmatpush1.bf16.msra.mxu0 0
    %1565 = vmatprep.subr.bf16.mxu0 0
    %1566 = vmatpush1.bf16.msra.mxu0 0
    %1567 = vmatprep.subr.bf16.mxu0 0
    %1568 = vmatpush1.bf16.msra.mxu0 0
    %1569 = vmatprep.subr.bf16.mxu0 0
    %1570 = vmatpush1.bf16.msra.mxu0 0
    %1571 = vmatprep.subr.bf16.mxu0 0
    %1572 = vmatpush1.bf16.msra.mxu0 0
    %1573 = vmatprep.subr.bf16.mxu0 0
    %1574 = vmatpush1.bf16.msra.mxu0 0
    %1575 = vmatprep.mubr.bf16.mxu0 0
    %1576 = vmatmul.mubr.bf16.gmra.mrb[0].mxu0 %v1520
    %v1577 = vpop.f32.mrb[0].mxu0
    %v1578 = vadd.f32 0.0, %v1577
    %v1579 = vpop.f32.mrb[0].mxu0
    %v1580 = vadd.f32 0.0, %v1579
    %v1581 = vpop.f32.mrb[0].mxu0
    %v1582 = vadd.f32 0.0, %v1581
    %v1583 = vpop.f32.mrb[0].mxu0
    %v1584 = vadd.f32 0.0, %v1583
    %1585 = vmatprep.mubr.bf16.mxu0 0
    %1586 = vmatmul.mubr.bf16.gmra.mrb[0].mxu0 %v1523
    %v1587 = vpop.f32.mrb[0].mxu0
    %v1588 = vadd.f32 0.0, %v1587
    %v1589 = vpop.f32.mrb[0].mxu0
    %v1590 = vadd.f32 0.0, %v1589
    %v1591 = vpop.f32.mrb[0].mxu0
    %v1592 = vadd.f32 0.0, %v1591
    %v1593 = vpop.f32.mrb[0].mxu0
    %v1594 = vadd.f32 0.0, %v1593
    %1595 = vmatprep.mubr.bf16.mxu0 0
    %1596 = vmatmul.mubr.bf16.gmra.mrb[0].mxu0 %v1526
    %v1597 = vpop.f32.mrb[0].mxu0
    %v1598 = vadd.f32 0.0, %v1597
    %v1599 = vpop.f32.mrb[0].mxu0
    %v1600 = vadd.f32 0.0, %v1599
    %v1601 = vpop.f32.mrb[0].mxu0
    %v1602 = vadd.f32 0.0, %v1601
    %v1603 = vpop.f32.mrb[0].mxu0
    %v1604 = vadd.f32 0.0, %v1603
    %1605 = vmatprep.mubr.bf16.mxu0 0
    %1606 = vmatmul.mubr.bf16.gmra.mrb[0].mxu0 %v1529
    %v1607 = vpop.f32.mrb[0].mxu0
    %v1608 = vadd.f32 0.0, %v1607
    %v1609 = vpop.f32.mrb[0].mxu0
    %v1610 = vadd.f32 0.0, %v1609
    %v1611 = vpop.f32.mrb[0].mxu0
    %v1612 = vadd.f32 0.0, %v1611
    %v1613 = vpop.f32.mrb[0].mxu0
    %v1614 = vadd.f32 0.0, %v1613
    %1615 = vmatprep.mubr.bf16.mxu0 0
    %1616 = vmatmul.mubr.bf16.gmra.mrb[0].mxu0 %v1532
    %v1617 = vpop.f32.mrb[0].mxu0
    %v1618 = vadd.f32 0.0, %v1617
    %v1619 = vpop.f32.mrb[0].mxu0
    %v1620 = vadd.f32 0.0, %v1619
    %v1621 = vpop.f32.mrb[0].mxu0
    %v1622 = vadd.f32 0.0, %v1621
    %v1623 = vpop.f32.mrb[0].mxu0
    %v1624 = vadd.f32 0.0, %v1623
    %1625 = vdwg.mxu0
    %1626 = vmatprep.subr.bf16.mxu0 0
    %1627 = vmatpush1.bf16.msra.mxu0 %v1541
    %1628 = vmatprep.subr.bf16.mxu0 0
    %1629 = vmatpush1.bf16.msra.mxu0 0
    %1630 = vmatprep.subr.bf16.mxu0 0
    %1631 = vmatpush1.bf16.msra.mxu0 0
    %1632 = vmatprep.subr.bf16.mxu0 0
    %1633 = vmatpush1.bf16.msra.mxu0 0
    %1634 = vmatprep.subr.bf16.mxu0 0
    %1635 = vmatpush1.bf16.msra.mxu0 0
    %1636 = vmatprep.subr.bf16.mxu0 0
    %1637 = vmatpush1.bf16.msra.mxu0 0
    %1638 = vmatprep.subr.bf16.mxu0 0
    %1639 = vmatpush1.bf16.msra.mxu0 0
    %1640 = vmatprep.subr.bf16.mxu0 0
    %1641 = vmatpush1.bf16.msra.mxu0 0
    %1642 = vmatprep.subr.bf16.mxu0 0
    %1643 = vmatpush1.bf16.msra.mxu0 0
    %1644 = vmatprep.subr.bf16.mxu0 0
    %1645 = vmatpush1.bf16.msra.mxu0 0
    %1646 = vmatprep.subr.bf16.mxu0 0
    %1647 = vmatpush1.bf16.msra.mxu0 0
    %1648 = vmatprep.subr.bf16.mxu0 0
    %1649 = vmatpush1.bf16.msra.mxu0 0
    %1650 = vmatprep.subr.bf16.mxu0 0
    %1651 = vmatpush1.bf16.msra.mxu0 0
    %1652 = vmatprep.subr.bf16.mxu0 0
    %1653 = vmatpush1.bf16.msra.mxu0 0
    %1654 = vmatprep.subr.bf16.mxu0 0
    %1655 = vmatpush1.bf16.msra.mxu0 0
    %1656 = vmatprep.subr.bf16.mxu0 0
    %1657 = vmatpush1.bf16.msra.mxu0 0
    %1658 = vmatprep.mubr.bf16.mxu0 0
    %1659 = vmatmul.mubr.bf16.gmra.mrb[0].mxu0 %v1520
    %v1660 = vpop.f32.mrb[0].mxu0
    %v1661 = vadd.f32 0.0, %v1660
    %v1662 = vpop.f32.mrb[0].mxu0
    %v1663 = vpop.f32.mrb[0].mxu0
    %v1664 = vadd.f32 0.0, %v1663
    %v1665 = vpop.f32.mrb[0].mxu0
    %1666 = vmatprep.mubr.bf16.mxu0 0
    %1667 = vmatmul.mubr.bf16.gmra.mrb[0].mxu0 %v1523
    %v1668 = vpop.f32.mrb[0].mxu0
    %v1669 = vadd.f32 0.0, %v1668
    %v1670 = vpop.f32.mrb[0].mxu0
    %v1671 = vpop.f32.mrb[0].mxu0
    %v1672 = vadd.f32 0.0, %v1671
    %v1673 = vpop.f32.mrb[0].mxu0
    %1674 = vmatprep.mubr.bf16.mxu0 0
    %1675 = vmatmul.mubr.bf16.gmra.mrb[0].mxu0 %v1526
    %v1676 = vpop.f32.mrb[0].mxu0
    %v1677 = vadd.f32 0.0, %v1676
    %v1678 = vpop.f32.mrb[0].mxu0
    %v1679 = vpop.f32.mrb[0].mxu0
    %v1680 = vadd.f32 0.0, %v1679
    %v1681 = vpop.f32.mrb[0].mxu0
    %1682 = vmatprep.mubr.bf16.mxu0 0
    %1683 = vmatmul.mubr.bf16.gmra.mrb[0].mxu0 %v1529
    %v1684 = vpop.f32.mrb[0].mxu0
    %v1685 = vadd.f32 0.0, %v1684
    %v1686 = vpop.f32.mrb[0].mxu0
    %v1687 = vpop.f32.mrb[0].mxu0
    %v1688 = vadd.f32 0.0, %v1687
    %v1689 = vpop.f32.mrb[0].mxu0
    %1690 = vmatprep.mubr.bf16.mxu0 0
    %1691 = vmatmul.mubr.bf16.gmra.mrb[0].mxu0 %v1532
    %v1692 = vpop.f32.mrb[0].mxu0
    %v1693 = vadd.f32 0.0, %v1692
    %v1694 = vpop.f32.mrb[0].mxu0
    %v1695 = vpop.f32.mrb[0].mxu0
    %v1696 = vadd.f32 0.0, %v1695
    %v1697 = vpop.f32.mrb[0].mxu0
    %1698 = vdwg.mxu0
    %v1699 = vadd.f32 %v1419, %v1578
    %v1700 = vadd.f32 %v1420, %v1580
    %v1701 = vadd.f32 %v1421, %v1661
    %v1702 = vadd.f32 %v1422, %v1582
    %v1703 = vadd.f32 %v1423, %v1584
    %v1704 = vadd.f32 %v1424, %v1664
    %v1705 = vadd.f32 %v1425, %v1588
    %v1706 = vadd.f32 %v1426, %v1590
    %v1707 = vadd.f32 %v1427, %v1669
    %v1708 = vadd.f32 %v1428, %v1592
    %v1709 = vadd.f32 %v1429, %v1594
    %v1710 = vadd.f32 %v1430, %v1672
    %v1711 = vadd.f32 %v1431, %v1598
    %v1712 = vadd.f32 %v1432, %v1600
    %v1713 = vadd.f32 %v1433, %v1677
    %v1714 = vadd.f32 %v1434, %v1602
    %v1715 = vadd.f32 %v1435, %v1604
    %v1716 = vadd.f32 %v1436, %v1680
    %v1717 = vadd.f32 %v1437, %v1608
    %v1718 = vadd.f32 %v1438, %v1610
    %v1719 = vadd.f32 %v1439, %v1685
    %v1720 = vadd.f32 %v1440, %v1612
    %v1721 = vadd.f32 %v1441, %v1614
    %v1722 = vadd.f32 %v1442, %v1688
    %v1723 = vadd.f32 %v1443, %v1618
    %v1724 = vadd.f32 %v1444, %v1620
    %v1725 = vadd.f32 %v1445, %v1693
    %v1726 = vadd.f32 %v1446, %v1622
    %v1727 = vadd.f32 %v1447, %v1624
    %v1728 = vadd.f32 %v1448, %v1696
    %v1729 = vld [vmem:[#allocation3 + $0x8] sm:$0xc]
    %v1730 = vld [vmem:[#allocation3 + $0xc] sm:$0xf]
    %v1731 = vld [vmem:[#allocation3 + $0x10] sm:$0xf]
    %v1732 = vld [vmem:[#allocation3 + $0x14] sm:$0xf]
    %v1733 = vld [vmem:[#allocation3 + $0x18] sm:$0xf]
    %v1734 = vld [vmem:[#allocation3 + $0x1c] sm:$0xf]
    %v1735 = vld [vmem:[#allocation3 + $0x20] sm:$0xf]
    %v1736 = vld [vmem:[#allocation3 + $0x24] sm:$0xf]
    %v1737 = vld [vmem:[#allocation3 + $0x28] sm:$0xf]
    %v1738 = vld [vmem:[#allocation3 + $0x2c] sm:$0xf]
    %v1739 = vld [vmem:[#allocation3 + $0x30] sm:$0x3]
    %s1740 = scalar_lea.vmem [#allocation6], 36
    %v1741 = vld [vmem:[%s1740] sm:$0x3f]
    %v1753 = vunpack.c.l.b16 %v1729
    %v1754 = vunpack.c.l.b16 %v1730
    %v1755 = vunpack.c.l.b16 %v1731
    %v1756 = vunpack.c.l.b16 %v1732
    %v1757 = vunpack.c.l.b16 %v1733
    %v1758 = vunpack.c.l.b16 %v1734
    %v1759 = vunpack.c.l.b16 %v1735
    %v1760 = vunpack.c.l.b16 %v1736
    %v1761 = vunpack.c.l.b16 %v1737
    %v1762 = vunpack.c.l.b16 %v1738
    %v1763 = vunpack.c.l.b16 %v1739
    %v1764 = vpack.c.b16 %v1754, %v1753
    %v1765 = vpack.c.b16 %v1756, %v1755
    %v1766 = vpack.c.b16 %v1758, %v1757
    %v1767 = vpack.c.b16 %v1760, %v1759
    %v1768 = vpack.c.b16 %v1762, %v1761
    %v1769 = vpack.c.b16 %v1763, %v1763
    %v1770 = vrot.slane %v1764, 2
    %v1771 = vrot.slane %v1765, 2
    %v1772 = vsel %vm1490, %v1770, %v1771
    %v1773 = vrot.slane %v1766, 2
    %v1774 = vsel %vm1490, %v1771, %v1773
    %v1775 = vrot.slane %v1767, 2
    %v1776 = vsel %vm1490, %v1773, %v1775
    %v1777 = vrot.slane %v1768, 2
    %v1778 = vsel %vm1490, %v1775, %v1777
    %v1779 = vrot.slane %v1769, 2
    %v1780 = vsel %vm1490, %v1777, %v1779
    %v1782 = vcombine.high %v1741, %v1741
    %v1784 = vunpack.c.l.s4 1983009808
    %v1785 = vunpack.c.0.s8 %v1784
    %v1786 = vlaneseq
    %v1787 = vshrl.u32 %v1786, 7
    %v1788 = vsub.s32 %v1785, %v1787
    %v1789 = vrot.slane %v1741, %v1788
    %v1791 = vunpack.c.l.s4 1983009808
    %v1792 = vunpack.c.0.s8 %v1791
    %v1793 = vlaneseq
    %v1794 = vshrl.u32 %v1793, 7
    %v1795 = vsub.s32 %v1792, %v1794
    %v1796 = vrot.slane %v1782, %v1795
    %v1797 = vcombine.high %v1789, %v1789
    %v1799 = vsel %vm194, %v1772, 0
    %v1802 = vsel %vm194, %v1774, 0
    %v1805 = vsel %vm194, %v1776, 0
    %v1808 = vsel %vm194, %v1778, 0
    %v1811 = vsel %vm194, %v1780, 0
    %v1814 = vsel %vm210, %v1789, 0
    %v1817 = vsel %vm210, %v1797, 0
    %v1820 = vsel %vm210, %v1796, 0
    %1822 = vmatprep.subr.bf16.mxu0 %v1817
    %1823 = vmatpush1.bf16.msra.mxu0 %v1814
    %1824 = vmatprep.subr.bf16.mxu0 0
    %1825 = vmatpush1.bf16.msra.mxu0 0
    %1826 = vmatprep.subr.bf16.mxu0 0
    %1827 = vmatpush1.bf16.msra.mxu0 0
    %1828 = vmatprep.subr.bf16.mxu0 0
    %1829 = vmatpush1.bf16.msra.mxu0 0
    %1830 = vmatprep.subr.bf16.mxu0 0
    %1831 = vmatpush1.bf16.msra.mxu0 0
    %1832 = vmatprep.subr.bf16.mxu0 0
    %1833 = vmatpush1.bf16.msra.mxu0 0
    %1834 = vmatprep.subr.bf16.mxu0 0
    %1835 = vmatpush1.bf16.msra.mxu0 0
    %1836 = vmatprep.subr.bf16.mxu0 0
    %1837 = vmatpush1.bf16.msra.mxu0 0
    %1838 = vmatprep.subr.bf16.mxu0 0
    %1839 = vmatpush1.bf16.msra.mxu0 0
    %1840 = vmatprep.subr.bf16.mxu0 0
    %1841 = vmatpush1.bf16.msra.mxu0 0
    %1842 = vmatprep.subr.bf16.mxu0 0
    %1843 = vmatpush1.bf16.msra.mxu0 0
    %1844 = vmatprep.subr.bf16.mxu0 0
    %1845 = vmatpush1.bf16.msra.mxu0 0
    %1846 = vmatprep.subr.bf16.mxu0 0
    %1847 = vmatpush1.bf16.msra.mxu0 0
    %1848 = vmatprep.subr.bf16.mxu0 0
    %1849 = vmatpush1.bf16.msra.mxu0 0
    %1850 = vmatprep.subr.bf16.mxu0 0
    %1851 = vmatpush1.bf16.msra.mxu0 0
    %1852 = vmatprep.subr.bf16.mxu0 0
    %1853 = vmatpush1.bf16.msra.mxu0 0
    %1854 = vmatprep.mubr.bf16.mxu0 0
    %1855 = vmatmul.mubr.bf16.gmra.mrb[0].mxu0 %v1799
    %v1856 = vpop.f32.mrb[0].mxu0
    %v1857 = vadd.f32 0.0, %v1856
    %v1858 = vpop.f32.mrb[0].mxu0
    %v1859 = vadd.f32 0.0, %v1858
    %v1860 = vpop.f32.mrb[0].mxu0
    %v1861 = vadd.f32 0.0, %v1860
    %v1862 = vpop.f32.mrb[0].mxu0
    %v1863 = vadd.f32 0.0, %v1862
    %1864 = vmatprep.mubr.bf16.mxu0 0
    %1865 = vmatmul.mubr.bf16.gmra.mrb[0].mxu0 %v1802
    %v1866 = vpop.f32.mrb[0].mxu0
    %v1867 = vadd.f32 0.0, %v1866
    %v1868 = vpop.f32.mrb[0].mxu0
    %v1869 = vadd.f32 0.0, %v1868
    %v1870 = vpop.f32.mrb[0].mxu0
    %v1871 = vadd.f32 0.0, %v1870
    %v1872 = vpop.f32.mrb[0].mxu0
    %v1873 = vadd.f32 0.0, %v1872
    %1874 = vmatprep.mubr.bf16.mxu0 0
    %1875 = vmatmul.mubr.bf16.gmra.mrb[0].mxu0 %v1805
    %v1876 = vpop.f32.mrb[0].mxu0
    %v1877 = vadd.f32 0.0, %v1876
    %v1878 = vpop.f32.mrb[0].mxu0
    %v1879 = vadd.f32 0.0, %v1878
    %v1880 = vpop.f32.mrb[0].mxu0
    %v1881 = vadd.f32 0.0, %v1880
    %v1882 = vpop.f32.mrb[0].mxu0
    %v1883 = vadd.f32 0.0, %v1882
    %1884 = vmatprep.mubr.bf16.mxu0 0
    %1885 = vmatmul.mubr.bf16.gmra.mrb[0].mxu0 %v1808
    %v1886 = vpop.f32.mrb[0].mxu0
    %v1887 = vadd.f32 0.0, %v1886
    %v1888 = vpop.f32.mrb[0].mxu0
    %v1889 = vadd.f32 0.0, %v1888
    %v1890 = vpop.f32.mrb[0].mxu0
    %v1891 = vadd.f32 0.0, %v1890
    %v1892 = vpop.f32.mrb[0].mxu0
    %v1893 = vadd.f32 0.0, %v1892
    %1894 = vmatprep.mubr.bf16.mxu0 0
    %1895 = vmatmul.mubr.bf16.gmra.mrb[0].mxu0 %v1811
    %v1896 = vpop.f32.mrb[0].mxu0
    %v1897 = vadd.f32 0.0, %v1896
    %v1898 = vpop.f32.mrb[0].mxu0
    %v1899 = vadd.f32 0.0, %v1898
    %v1900 = vpop.f32.mrb[0].mxu0
    %v1901 = vadd.f32 0.0, %v1900
    %v1902 = vpop.f32.mrb[0].mxu0
    %v1903 = vadd.f32 0.0, %v1902
    %1904 = vdwg.mxu0
    %1905 = vmatprep.subr.bf16.mxu0 0
    %1906 = vmatpush1.bf16.msra.mxu0 %v1820
    %1907 = vmatprep.subr.bf16.mxu0 0
    %1908 = vmatpush1.bf16.msra.mxu0 0
    %1909 = vmatprep.subr.bf16.mxu0 0
    %1910 = vmatpush1.bf16.msra.mxu0 0
    %1911 = vmatprep.subr.bf16.mxu0 0
    %1912 = vmatpush1.bf16.msra.mxu0 0
    %1913 = vmatprep.subr.bf16.mxu0 0
    %1914 = vmatpush1.bf16.msra.mxu0 0
    %1915 = vmatprep.subr.bf16.mxu0 0
    %1916 = vmatpush1.bf16.msra.mxu0 0
    %1917 = vmatprep.subr.bf16.mxu0 0
    %1918 = vmatpush1.bf16.msra.mxu0 0
    %1919 = vmatprep.subr.bf16.mxu0 0
    %1920 = vmatpush1.bf16.msra.mxu0 0
    %1921 = vmatprep.subr.bf16.mxu0 0
    %1922 = vmatpush1.bf16.msra.mxu0 0
    %1923 = vmatprep.subr.bf16.mxu0 0
    %1924 = vmatpush1.bf16.msra.mxu0 0
    %1925 = vmatprep.subr.bf16.mxu0 0
    %1926 = vmatpush1.bf16.msra.mxu0 0
    %1927 = vmatprep.subr.bf16.mxu0 0
    %1928 = vmatpush1.bf16.msra.mxu0 0
    %1929 = vmatprep.subr.bf16.mxu0 0
    %1930 = vmatpush1.bf16.msra.mxu0 0
    %1931 = vmatprep.subr.bf16.mxu0 0
    %1932 = vmatpush1.bf16.msra.mxu0 0
    %1933 = vmatprep.subr.bf16.mxu0 0
    %1934 = vmatpush1.bf16.msra.mxu0 0
    %1935 = vmatprep.subr.bf16.mxu0 0
    %1936 = vmatpush1.bf16.msra.mxu0 0
    %1937 = vmatprep.mubr.bf16.mxu0 0
    %1938 = vmatmul.mubr.bf16.gmra.mrb[0].mxu0 %v1799
    %v1939 = vpop.f32.mrb[0].mxu0
    %v1940 = vadd.f32 0.0, %v1939
    %v1941 = vpop.f32.mrb[0].mxu0
    %v1942 = vpop.f32.mrb[0].mxu0
    %v1943 = vadd.f32 0.0, %v1942
    %v1944 = vpop.f32.mrb[0].mxu0
    %1945 = vmatprep.mubr.bf16.mxu0 0
    %1946 = vmatmul.mubr.bf16.gmra.mrb[0].mxu0 %v1802
    %v1947 = vpop.f32.mrb[0].mxu0
    %v1948 = vadd.f32 0.0, %v1947
    %v1949 = vpop.f32.mrb[0].mxu0
    %v1950 = vpop.f32.mrb[0].mxu0
    %v1951 = vadd.f32 0.0, %v1950
    %v1952 = vpop.f32.mrb[0].mxu0
    %1953 = vmatprep.mubr.bf16.mxu0 0
    %1954 = vmatmul.mubr.bf16.gmra.mrb[0].mxu0 %v1805
    %v1955 = vpop.f32.mrb[0].mxu0
    %v1956 = vadd.f32 0.0, %v1955
    %v1957 = vpop.f32.mrb[0].mxu0
    %v1958 = vpop.f32.mrb[0].mxu0
    %v1959 = vadd.f32 0.0, %v1958
    %v1960 = vpop.f32.mrb[0].mxu0
    %1961 = vmatprep.mubr.bf16.mxu0 0
    %1962 = vmatmul.mubr.bf16.gmra.mrb[0].mxu0 %v1808
    %v1963 = vpop.f32.mrb[0].mxu0
    %v1964 = vadd.f32 0.0, %v1963
    %v1965 = vpop.f32.mrb[0].mxu0
    %v1966 = vpop.f32.mrb[0].mxu0
    %v1967 = vadd.f32 0.0, %v1966
    %v1968 = vpop.f32.mrb[0].mxu0
    %1969 = vmatprep.mubr.bf16.mxu0 0
    %1970 = vmatmul.mubr.bf16.gmra.mrb[0].mxu0 %v1811
    %v1971 = vpop.f32.mrb[0].mxu0
    %v1972 = vadd.f32 0.0, %v1971
    %v1973 = vpop.f32.mrb[0].mxu0
    %v1974 = vpop.f32.mrb[0].mxu0
    %v1975 = vadd.f32 0.0, %v1974
    %v1976 = vpop.f32.mrb[0].mxu0
    %1977 = vdwg.mxu0
    %v1978 = vadd.f32 %v1699, %v1857
    %v1979 = vadd.f32 %v1700, %v1859
    %v1980 = vadd.f32 %v1701, %v1940
    %v1981 = vadd.f32 %v1702, %v1861
    %v1982 = vadd.f32 %v1703, %v1863
    %v1983 = vadd.f32 %v1704, %v1943
    %v1984 = vadd.f32 %v1705, %v1867
    %v1985 = vadd.f32 %v1706, %v1869
    %v1986 = vadd.f32 %v1707, %v1948
    %v1987 = vadd.f32 %v1708, %v1871
    %v1988 = vadd.f32 %v1709, %v1873
    %v1989 = vadd.f32 %v1710, %v1951
    %v1990 = vadd.f32 %v1711, %v1877
    %v1991 = vadd.f32 %v1712, %v1879
    %v1992 = vadd.f32 %v1713, %v1956
    %v1993 = vadd.f32 %v1714, %v1881
    %v1994 = vadd.f32 %v1715, %v1883
    %v1995 = vadd.f32 %v1716, %v1959
    %v1996 = vadd.f32 %v1717, %v1887
    %v1997 = vadd.f32 %v1718, %v1889
    %v1998 = vadd.f32 %v1719, %v1964
    %v1999 = vadd.f32 %v1720, %v1891
    %v2000 = vadd.f32 %v1721, %v1893
    %v2001 = vadd.f32 %v1722, %v1967
    %v2002 = vadd.f32 %v1723, %v1897
    %v2003 = vadd.f32 %v1724, %v1899
    %v2004 = vadd.f32 %v1725, %v1972
    %v2005 = vadd.f32 %v1726, %v1901
    %v2006 = vadd.f32 %v1727, %v1903
    %v2007 = vadd.f32 %v1728, %v1975
    %v2008 = vld [vmem:[#allocation3 + $0x8] sm:$0xc]
    %v2009 = vld [vmem:[#allocation3 + $0xc] sm:$0xf]
    %v2010 = vld [vmem:[#allocation3 + $0x10] sm:$0xf]
    %v2011 = vld [vmem:[#allocation3 + $0x14] sm:$0xf]
    %v2012 = vld [vmem:[#allocation3 + $0x18] sm:$0xf]
    %v2013 = vld [vmem:[#allocation3 + $0x1c] sm:$0xf]
    %v2014 = vld [vmem:[#allocation3 + $0x20] sm:$0xf]
    %v2015 = vld [vmem:[#allocation3 + $0x24] sm:$0xf]
    %v2016 = vld [vmem:[#allocation3 + $0x28] sm:$0xf]
    %v2017 = vld [vmem:[#allocation3 + $0x2c] sm:$0xf]
    %v2018 = vld [vmem:[#allocation3 + $0x30] sm:$0x7]
    %s2019 = scalar_lea.vmem [#allocation6], 42
    %v2020 = vld [vmem:[%s2019] sm:$0x3f]
    %v2032 = vunpack.c.l.b16 %v2008
    %v2033 = vunpack.c.l.b16 %v2009
    %v2034 = vunpack.c.l.b16 %v2010
    %v2035 = vunpack.c.l.b16 %v2011
    %v2036 = vunpack.c.l.b16 %v2012
    %v2037 = vunpack.c.l.b16 %v2013
    %v2038 = vunpack.c.l.b16 %v2014
    %v2039 = vunpack.c.l.b16 %v2015
    %v2040 = vunpack.c.l.b16 %v2016
    %v2041 = vunpack.c.l.b16 %v2017
    %v2042 = vunpack.c.l.b16 %v2018
    %v2043 = vpack.c.b16 %v2033, %v2032
    %v2044 = vpack.c.b16 %v2035, %v2034
    %v2045 = vpack.c.b16 %v2037, %v2036
    %v2046 = vpack.c.b16 %v2039, %v2038
    %v2047 = vpack.c.b16 %v2041, %v2040
    %v2048 = vpack.c.b16 %v2042, %v2042
    %vm2049 = vsmask.f32 5376
    %v2051 = vshrl.u32 %v2043, 16
    %v2053 = vrot.slane %v2051, 2
    %v2054 = vshll.u32 %v2043, 16
    %v2056 = vrot.slane %v2054, 3
    %v2057 = vor.u32 %v2053, %v2056
    %v2059 = vshrl.u32 %v2044, 16
    %v2061 = vrot.slane %v2059, 2
    %v2062 = vshll.u32 %v2044, 16
    %v2064 = vrot.slane %v2062, 3
    %v2065 = vor.u32 %v2061, %v2064
    %v2066 = vsel %vm2049, %v2057, %v2065
    %v2068 = vshrl.u32 %v2045, 16
    %v2070 = vrot.slane %v2068, 2
    %v2071 = vshll.u32 %v2045, 16
    %v2073 = vrot.slane %v2071, 3
    %v2074 = vor.u32 %v2070, %v2073
    %v2075 = vsel %vm2049, %v2065, %v2074
    %v2077 = vshrl.u32 %v2046, 16
    %v2079 = vrot.slane %v2077, 2
    %v2080 = vshll.u32 %v2046, 16
    %v2082 = vrot.slane %v2080, 3
    %v2083 = vor.u32 %v2079, %v2082
    %v2084 = vsel %vm2049, %v2074, %v2083
    %v2086 = vshrl.u32 %v2047, 16
    %v2088 = vrot.slane %v2086, 2
    %v2089 = vshll.u32 %v2047, 16
    %v2091 = vrot.slane %v2089, 3
    %v2092 = vor.u32 %v2088, %v2091
    %v2093 = vsel %vm2049, %v2083, %v2092
    %v2095 = vshrl.u32 %v2048, 16
    %v2097 = vrot.slane %v2095, 2
    %v2098 = vshll.u32 %v2048, 16
    %v2100 = vrot.slane %v2098, 3
    %v2101 = vor.u32 %v2097, %v2100
    %v2102 = vsel %vm2049, %v2092, %v2101
    %v2104 = vcombine.high %v2020, %v2020
    %v2106 = vunpack.c.l.s4 1983009808
    %v2107 = vunpack.c.0.s8 %v2106
    %v2108 = vlaneseq
    %v2109 = vshrl.u32 %v2108, 7
    %v2110 = vsub.s32 %v2107, %v2109
    %v2111 = vrot.slane %v2020, %v2110
    %v2113 = vunpack.c.l.s4 1983009808
    %v2114 = vunpack.c.0.s8 %v2113
    %v2115 = vlaneseq
    %v2116 = vshrl.u32 %v2115, 7
    %v2117 = vsub.s32 %v2114, %v2116
    %v2118 = vrot.slane %v2104, %v2117
    %v2119 = vcombine.high %v2111, %v2111
    %v2121 = vsel %vm194, %v2066, 0
    %v2124 = vsel %vm194, %v2075, 0
    %v2127 = vsel %vm194, %v2084, 0
    %v2130 = vsel %vm194, %v2093, 0
    %v2133 = vsel %vm194, %v2102, 0
    %v2136 = vsel %vm210, %v2111, 0
    %v2139 = vsel %vm210, %v2119, 0
    %v2142 = vsel %vm210, %v2118, 0
    %2144 = vmatprep.subr.bf16.mxu0 %v2139
    %2145 = vmatpush1.bf16.msra.mxu0 %v2136
    %2146 = vmatprep.subr.bf16.mxu0 0
    %2147 = vmatpush1.bf16.msra.mxu0 0
    %2148 = vmatprep.subr.bf16.mxu0 0
    %2149 = vmatpush1.bf16.msra.mxu0 0
    %2150 = vmatprep.subr.bf16.mxu0 0
    %2151 = vmatpush1.bf16.msra.mxu0 0
    %2152 = vmatprep.subr.bf16.mxu0 0
    %2153 = vmatpush1.bf16.msra.mxu0 0
    %2154 = vmatprep.subr.bf16.mxu0 0
    %2155 = vmatpush1.bf16.msra.mxu0 0
    %2156 = vmatprep.subr.bf16.mxu0 0
    %2157 = vmatpush1.bf16.msra.mxu0 0
    %2158 = vmatprep.subr.bf16.mxu0 0
    %2159 = vmatpush1.bf16.msra.mxu0 0
    %2160 = vmatprep.subr.bf16.mxu0 0
    %2161 = vmatpush1.bf16.msra.mxu0 0
    %2162 = vmatprep.subr.bf16.mxu0 0
    %2163 = vmatpush1.bf16.msra.mxu0 0
    %2164 = vmatprep.subr.bf16.mxu0 0
    %2165 = vmatpush1.bf16.msra.mxu0 0
    %2166 = vmatprep.subr.bf16.mxu0 0
    %2167 = vmatpush1.bf16.msra.mxu0 0
    %2168 = vmatprep.subr.bf16.mxu0 0
    %2169 = vmatpush1.bf16.msra.mxu0 0
    %2170 = vmatprep.subr.bf16.mxu0 0
    %2171 = vmatpush1.bf16.msra.mxu0 0
    %2172 = vmatprep.subr.bf16.mxu0 0
    %2173 = vmatpush1.bf16.msra.mxu0 0
    %2174 = vmatprep.subr.bf16.mxu0 0
    %2175 = vmatpush1.bf16.msra.mxu0 0
    %2176 = vmatprep.mubr.bf16.mxu0 0
    %2177 = vmatmul.mubr.bf16.gmra.mrb[0].mxu0 %v2121
    %v2178 = vpop.f32.mrb[0].mxu0
    %v2179 = vadd.f32 0.0, %v2178
    %v2180 = vpop.f32.mrb[0].mxu0
    %v2181 = vadd.f32 0.0, %v2180
    %v2182 = vpop.f32.mrb[0].mxu0
    %v2183 = vadd.f32 0.0, %v2182
    %v2184 = vpop.f32.mrb[0].mxu0
    %v2185 = vadd.f32 0.0, %v2184
    %2186 = vmatprep.mubr.bf16.mxu0 0
    %2187 = vmatmul.mubr.bf16.gmra.mrb[0].mxu0 %v2124
    %v2188 = vpop.f32.mrb[0].mxu0
    %v2189 = vadd.f32 0.0, %v2188
    %v2190 = vpop.f32.mrb[0].mxu0
    %v2191 = vadd.f32 0.0, %v2190
    %v2192 = vpop.f32.mrb[0].mxu0
    %v2193 = vadd.f32 0.0, %v2192
    %v2194 = vpop.f32.mrb[0].mxu0
    %v2195 = vadd.f32 0.0, %v2194
    %2196 = vmatprep.mubr.bf16.mxu0 0
    %2197 = vmatmul.mubr.bf16.gmra.mrb[0].mxu0 %v2127
    %v2198 = vpop.f32.mrb[0].mxu0
    %v2199 = vadd.f32 0.0, %v2198
    %v2200 = vpop.f32.mrb[0].mxu0
    %v2201 = vadd.f32 0.0, %v2200
    %v2202 = vpop.f32.mrb[0].mxu0
    %v2203 = vadd.f32 0.0, %v2202
    %v2204 = vpop.f32.mrb[0].mxu0
    %v2205 = vadd.f32 0.0, %v2204
    %2206 = vmatprep.mubr.bf16.mxu0 0
    %2207 = vmatmul.mubr.bf16.gmra.mrb[0].mxu0 %v2130
    %v2208 = vpop.f32.mrb[0].mxu0
    %v2209 = vadd.f32 0.0, %v2208
    %v2210 = vpop.f32.mrb[0].mxu0
    %v2211 = vadd.f32 0.0, %v2210
    %v2212 = vpop.f32.mrb[0].mxu0
    %v2213 = vadd.f32 0.0, %v2212
    %v2214 = vpop.f32.mrb[0].mxu0
    %v2215 = vadd.f32 0.0, %v2214
    %2216 = vmatprep.mubr.bf16.mxu0 0
    %2217 = vmatmul.mubr.bf16.gmra.mrb[0].mxu0 %v2133
    %v2218 = vpop.f32.mrb[0].mxu0
    %v2219 = vadd.f32 0.0, %v2218
    %v2220 = vpop.f32.mrb[0].mxu0
    %v2221 = vadd.f32 0.0, %v2220
    %v2222 = vpop.f32.mrb[0].mxu0
    %v2223 = vadd.f32 0.0, %v2222
    %v2224 = vpop.f32.mrb[0].mxu0
    %v2225 = vadd.f32 0.0, %v2224
    %2226 = vdwg.mxu0
    %2227 = vmatprep.subr.bf16.mxu0 0
    %2228 = vmatpush1.bf16.msra.mxu0 %v2142
    %2229 = vmatprep.subr.bf16.mxu0 0
    %2230 = vmatpush1.bf16.msra.mxu0 0
    %2231 = vmatprep.subr.bf16.mxu0 0
    %2232 = vmatpush1.bf16.msra.mxu0 0
    %2233 = vmatprep.subr.bf16.mxu0 0
    %2234 = vmatpush1.bf16.msra.mxu0 0
    %2235 = vmatprep.subr.bf16.mxu0 0
    %2236 = vmatpush1.bf16.msra.mxu0 0
    %2237 = vmatprep.subr.bf16.mxu0 0
    %2238 = vmatpush1.bf16.msra.mxu0 0
    %2239 = vmatprep.subr.bf16.mxu0 0
    %2240 = vmatpush1.bf16.msra.mxu0 0
    %2241 = vmatprep.subr.bf16.mxu0 0
    %2242 = vmatpush1.bf16.msra.mxu0 0
    %2243 = vmatprep.subr.bf16.mxu0 0
    %2244 = vmatpush1.bf16.msra.mxu0 0
    %2245 = vmatprep.subr.bf16.mxu0 0
    %2246 = vmatpush1.bf16.msra.mxu0 0
    %2247 = vmatprep.subr.bf16.mxu0 0
    %2248 = vmatpush1.bf16.msra.mxu0 0
    %2249 = vmatprep.subr.bf16.mxu0 0
    %2250 = vmatpush1.bf16.msra.mxu0 0
    %2251 = vmatprep.subr.bf16.mxu0 0
    %2252 = vmatpush1.bf16.msra.mxu0 0
    %2253 = vmatprep.subr.bf16.mxu0 0
    %2254 = vmatpush1.bf16.msra.mxu0 0
    %2255 = vmatprep.subr.bf16.mxu0 0
    %2256 = vmatpush1.bf16.msra.mxu0 0
    %2257 = vmatprep.subr.bf16.mxu0 0
    %2258 = vmatpush1.bf16.msra.mxu0 0
    %2259 = vmatprep.mubr.bf16.mxu0 0
    %2260 = vmatmul.mubr.bf16.gmra.mrb[0].mxu0 %v2121
    %v2261 = vpop.f32.mrb[0].mxu0
    %v2262 = vadd.f32 0.0, %v2261
    %v2263 = vpop.f32.mrb[0].mxu0
    %v2264 = vpop.f32.mrb[0].mxu0
    %v2265 = vadd.f32 0.0, %v2264
    %v2266 = vpop.f32.mrb[0].mxu0
    %2267 = vmatprep.mubr.bf16.mxu0 0
    %2268 = vmatmul.mubr.bf16.gmra.mrb[0].mxu0 %v2124
    %v2269 = vpop.f32.mrb[0].mxu0
    %v2270 = vadd.f32 0.0, %v2269
    %v2271 = vpop.f32.mrb[0].mxu0
    %v2272 = vpop.f32.mrb[0].mxu0
    %v2273 = vadd.f32 0.0, %v2272
    %v2274 = vpop.f32.mrb[0].mxu0
    %2275 = vmatprep.mubr.bf16.mxu0 0
    %2276 = vmatmul.mubr.bf16.gmra.mrb[0].mxu0 %v2127
    %v2277 = vpop.f32.mrb[0].mxu0
    %v2278 = vadd.f32 0.0, %v2277
    %v2279 = vpop.f32.mrb[0].mxu0
    %v2280 = vpop.f32.mrb[0].mxu0
    %v2281 = vadd.f32 0.0, %v2280
    %v2282 = vpop.f32.mrb[0].mxu0
    %2283 = vmatprep.mubr.bf16.mxu0 0
    %2284 = vmatmul.mubr.bf16.gmra.mrb[0].mxu0 %v2130
    %v2285 = vpop.f32.mrb[0].mxu0
    %v2286 = vadd.f32 0.0, %v2285
    %v2287 = vpop.f32.mrb[0].mxu0
    %v2288 = vpop.f32.mrb[0].mxu0
    %v2289 = vadd.f32 0.0, %v2288
    %v2290 = vpop.f32.mrb[0].mxu0
    %2291 = vmatprep.mubr.bf16.mxu0 0
    %2292 = vmatmul.mubr.bf16.gmra.mrb[0].mxu0 %v2133
    %v2293 = vpop.f32.mrb[0].mxu0
    %v2294 = vadd.f32 0.0, %v2293
    %v2295 = vpop.f32.mrb[0].mxu0
    %v2296 = vpop.f32.mrb[0].mxu0
    %v2297 = vadd.f32 0.0, %v2296
    %v2298 = vpop.f32.mrb[0].mxu0
    %2299 = vdwg.mxu0
    %v2300 = vadd.f32 %v1978, %v2179
    %v2301 = vadd.f32 %v1979, %v2181
    %v2302 = vadd.f32 %v1980, %v2262
    %v2303 = vadd.f32 %v1981, %v2183
    %v2304 = vadd.f32 %v1982, %v2185
    %v2305 = vadd.f32 %v1983, %v2265
    %v2306 = vadd.f32 %v1984, %v2189
    %v2307 = vadd.f32 %v1985, %v2191
    %v2308 = vadd.f32 %v1986, %v2270
    %v2309 = vadd.f32 %v1987, %v2193
    %v2310 = vadd.f32 %v1988, %v2195
    %v2311 = vadd.f32 %v1989, %v2273
    %v2312 = vadd.f32 %v1990, %v2199
    %v2313 = vadd.f32 %v1991, %v2201
    %v2314 = vadd.f32 %v1992, %v2278
    %v2315 = vadd.f32 %v1993, %v2203
    %v2316 = vadd.f32 %v1994, %v2205
    %v2317 = vadd.f32 %v1995, %v2281
    %v2318 = vadd.f32 %v1996, %v2209
    %v2319 = vadd.f32 %v1997, %v2211
    %v2320 = vadd.f32 %v1998, %v2286
    %v2321 = vadd.f32 %v1999, %v2213
    %v2322 = vadd.f32 %v2000, %v2215
    %v2323 = vadd.f32 %v2001, %v2289
    %v2324 = vadd.f32 %v2002, %v2219
    %v2325 = vadd.f32 %v2003, %v2221
    %v2326 = vadd.f32 %v2004, %v2294
    %v2327 = vadd.f32 %v2005, %v2223
    %v2328 = vadd.f32 %v2006, %v2225
    %v2329 = vadd.f32 %v2007, %v2297
    %v2330 = vld [vmem:[#allocation3 + $0x8] sm:$0x8]
    %v2331 = vld [vmem:[#allocation3 + $0xc] sm:$0xf]
    %v2332 = vld [vmem:[#allocation3 + $0x10] sm:$0xf]
    %v2333 = vld [vmem:[#allocation3 + $0x14] sm:$0xf]
    %v2334 = vld [vmem:[#allocation3 + $0x18] sm:$0xf]
    %v2335 = vld [vmem:[#allocation3 + $0x1c] sm:$0xf]
    %v2336 = vld [vmem:[#allocation3 + $0x20] sm:$0xf]
    %v2337 = vld [vmem:[#allocation3 + $0x24] sm:$0xf]
    %v2338 = vld [vmem:[#allocation3 + $0x28] sm:$0xf]
    %v2339 = vld [vmem:[#allocation3 + $0x2c] sm:$0xf]
    %v2340 = vld [vmem:[#allocation3 + $0x30] sm:$0x7]
    %s2341 = scalar_lea.vmem [#allocation6], 48
    %v2342 = vld [vmem:[%s2341] sm:$0x3f]
    %v2354 = vunpack.c.l.b16 %v2330
    %v2355 = vunpack.c.l.b16 %v2331
    %v2356 = vunpack.c.l.b16 %v2332
    %v2357 = vunpack.c.l.b16 %v2333
    %v2358 = vunpack.c.l.b16 %v2334
    %v2359 = vunpack.c.l.b16 %v2335
    %v2360 = vunpack.c.l.b16 %v2336
    %v2361 = vunpack.c.l.b16 %v2337
    %v2362 = vunpack.c.l.b16 %v2338
    %v2363 = vunpack.c.l.b16 %v2339
    %v2364 = vunpack.c.l.b16 %v2340
    %v2365 = vpack.c.b16 %v2355, %v2354
    %v2366 = vpack.c.b16 %v2357, %v2356
    %v2367 = vpack.c.b16 %v2359, %v2358
    %v2368 = vpack.c.b16 %v2361, %v2360
    %v2369 = vpack.c.b16 %v2363, %v2362
    %v2370 = vpack.c.b16 %v2364, %v2364
    %vm2371 = vcmask 1044480
    %v2372 = vrot.slane %v2365, 3
    %v2373 = vrot.slane %v2366, 3
    %v2374 = vsel %vm2371, %v2372, %v2373
    %v2375 = vrot.slane %v2367, 3
    %v2376 = vsel %vm2371, %v2373, %v2375
    %v2377 = vrot.slane %v2368, 3
    %v2378 = vsel %vm2371, %v2375, %v2377
    %v2379 = vrot.slane %v2369, 3
    %v2380 = vsel %vm2371, %v2377, %v2379
    %v2381 = vrot.slane %v2370, 3
    %v2382 = vsel %vm2371, %v2379, %v2381
    %v2384 = vcombine.high %v2342, %v2342
    %v2386 = vunpack.c.l.s4 1983009808
    %v2387 = vunpack.c.0.s8 %v2386
    %v2388 = vlaneseq
    %v2389 = vshrl.u32 %v2388, 7
    %v2390 = vsub.s32 %v2387, %v2389
    %v2391 = vrot.slane %v2342, %v2390
    %v2393 = vunpack.c.l.s4 1983009808
    %v2394 = vunpack.c.0.s8 %v2393
    %v2395 = vlaneseq
    %v2396 = vshrl.u32 %v2395, 7
    %v2397 = vsub.s32 %v2394, %v2396
    %v2398 = vrot.slane %v2384, %v2397
    %v2399 = vcombine.high %v2391, %v2391
    %v2401 = vsel %vm194, %v2374, 0
    %v2404 = vsel %vm194, %v2376, 0
    %v2407 = vsel %vm194, %v2378, 0
    %v2410 = vsel %vm194, %v2380, 0
    %v2413 = vsel %vm194, %v2382, 0
    %v2416 = vsel %vm210, %v2391, 0
    %v2419 = vsel %vm210, %v2399, 0
    %v2422 = vsel %vm210, %v2398, 0
    %2424 = vmatprep.subr.bf16.mxu0 %v2419
    %2425 = vmatpush1.bf16.msra.mxu0 %v2416
    %2426 = vmatprep.subr.bf16.mxu0 0
    %2427 = vmatpush1.bf16.msra.mxu0 0
    %2428 = vmatprep.subr.bf16.mxu0 0
    %2429 = vmatpush1.bf16.msra.mxu0 0
    %2430 = vmatprep.subr.bf16.mxu0 0
    %2431 = vmatpush1.bf16.msra.mxu0 0
    %2432 = vmatprep.subr.bf16.mxu0 0
    %2433 = vmatpush1.bf16.msra.mxu0 0
    %2434 = vmatprep.subr.bf16.mxu0 0
    %2435 = vmatpush1.bf16.msra.mxu0 0
    %2436 = vmatprep.subr.bf16.mxu0 0
    %2437 = vmatpush1.bf16.msra.mxu0 0
    %2438 = vmatprep.subr.bf16.mxu0 0
    %2439 = vmatpush1.bf16.msra.mxu0 0
    %2440 = vmatprep.subr.bf16.mxu0 0
    %2441 = vmatpush1.bf16.msra.mxu0 0
    %2442 = vmatprep.subr.bf16.mxu0 0
    %2443 = vmatpush1.bf16.msra.mxu0 0
    %2444 = vmatprep.subr.bf16.mxu0 0
    %2445 = vmatpush1.bf16.msra.mxu0 0
    %2446 = vmatprep.subr.bf16.mxu0 0
    %2447 = vmatpush1.bf16.msra.mxu0 0
    %2448 = vmatprep.subr.bf16.mxu0 0
    %2449 = vmatpush1.bf16.msra.mxu0 0
    %2450 = vmatprep.subr.bf16.mxu0 0
    %2451 = vmatpush1.bf16.msra.mxu0 0
    %2452 = vmatprep.subr.bf16.mxu0 0
    %2453 = vmatpush1.bf16.msra.mxu0 0
    %2454 = vmatprep.subr.bf16.mxu0 0
    %2455 = vmatpush1.bf16.msra.mxu0 0
    %2456 = vmatprep.mubr.bf16.mxu0 0
    %2457 = vmatmul.mubr.bf16.gmra.mrb[0].mxu0 %v2401
    %v2458 = vpop.f32.mrb[0].mxu0
    %v2459 = vadd.f32 0.0, %v2458
    %v2460 = vpop.f32.mrb[0].mxu0
    %v2461 = vadd.f32 0.0, %v2460
    %v2462 = vpop.f32.mrb[0].mxu0
    %v2463 = vadd.f32 0.0, %v2462
    %v2464 = vpop.f32.mrb[0].mxu0
    %v2465 = vadd.f32 0.0, %v2464
    %2466 = vmatprep.mubr.bf16.mxu0 0
    %2467 = vmatmul.mubr.bf16.gmra.mrb[0].mxu0 %v2404
    %v2468 = vpop.f32.mrb[0].mxu0
    %v2469 = vadd.f32 0.0, %v2468
    %v2470 = vpop.f32.mrb[0].mxu0
    %v2471 = vadd.f32 0.0, %v2470
    %v2472 = vpop.f32.mrb[0].mxu0
    %v2473 = vadd.f32 0.0, %v2472
    %v2474 = vpop.f32.mrb[0].mxu0
    %v2475 = vadd.f32 0.0, %v2474
    %2476 = vmatprep.mubr.bf16.mxu0 0
    %2477 = vmatmul.mubr.bf16.gmra.mrb[0].mxu0 %v2407
    %v2478 = vpop.f32.mrb[0].mxu0
    %v2479 = vadd.f32 0.0, %v2478
    %v2480 = vpop.f32.mrb[0].mxu0
    %v2481 = vadd.f32 0.0, %v2480
    %v2482 = vpop.f32.mrb[0].mxu0
    %v2483 = vadd.f32 0.0, %v2482
    %v2484 = vpop.f32.mrb[0].mxu0
    %v2485 = vadd.f32 0.0, %v2484
    %2486 = vmatprep.mubr.bf16.mxu0 0
    %2487 = vmatmul.mubr.bf16.gmra.mrb[0].mxu0 %v2410
    %v2488 = vpop.f32.mrb[0].mxu0
    %v2489 = vadd.f32 0.0, %v2488
    %v2490 = vpop.f32.mrb[0].mxu0
    %v2491 = vadd.f32 0.0, %v2490
    %v2492 = vpop.f32.mrb[0].mxu0
    %v2493 = vadd.f32 0.0, %v2492
    %v2494 = vpop.f32.mrb[0].mxu0
    %v2495 = vadd.f32 0.0, %v2494
    %2496 = vmatprep.mubr.bf16.mxu0 0
    %2497 = vmatmul.mubr.bf16.gmra.mrb[0].mxu0 %v2413
    %v2498 = vpop.f32.mrb[0].mxu0
    %v2499 = vadd.f32 0.0, %v2498
    %v2500 = vpop.f32.mrb[0].mxu0
    %v2501 = vadd.f32 0.0, %v2500
    %v2502 = vpop.f32.mrb[0].mxu0
    %v2503 = vadd.f32 0.0, %v2502
    %v2504 = vpop.f32.mrb[0].mxu0
    %v2505 = vadd.f32 0.0, %v2504
    %2506 = vdwg.mxu0
    %2507 = vmatprep.subr.bf16.mxu0 0
    %2508 = vmatpush1.bf16.msra.mxu0 %v2422
    %2509 = vmatprep.subr.bf16.mxu0 0
    %2510 = vmatpush1.bf16.msra.mxu0 0
    %2511 = vmatprep.subr.bf16.mxu0 0
    %2512 = vmatpush1.bf16.msra.mxu0 0
    %2513 = vmatprep.subr.bf16.mxu0 0
    %2514 = vmatpush1.bf16.msra.mxu0 0
    %2515 = vmatprep.subr.bf16.mxu0 0
    %2516 = vmatpush1.bf16.msra.mxu0 0
    %2517 = vmatprep.subr.bf16.mxu0 0
    %2518 = vmatpush1.bf16.msra.mxu0 0
    %2519 = vmatprep.subr.bf16.mxu0 0
    %2520 = vmatpush1.bf16.msra.mxu0 0
    %2521 = vmatprep.subr.bf16.mxu0 0
    %2522 = vmatpush1.bf16.msra.mxu0 0
    %2523 = vmatprep.subr.bf16.mxu0 0
    %2524 = vmatpush1.bf16.msra.mxu0 0
    %2525 = vmatprep.subr.bf16.mxu0 0
    %2526 = vmatpush1.bf16.msra.mxu0 0
    %2527 = vmatprep.subr.bf16.mxu0 0
    %2528 = vmatpush1.bf16.msra.mxu0 0
    %2529 = vmatprep.subr.bf16.mxu0 0
    %2530 = vmatpush1.bf16.msra.mxu0 0
    %2531 = vmatprep.subr.bf16.mxu0 0
    %2532 = vmatpush1.bf16.msra.mxu0 0
    %2533 = vmatprep.subr.bf16.mxu0 0
    %2534 = vmatpush1.bf16.msra.mxu0 0
    %2535 = vmatprep.subr.bf16.mxu0 0
    %2536 = vmatpush1.bf16.msra.mxu0 0
    %2537 = vmatprep.subr.bf16.mxu0 0
    %2538 = vmatpush1.bf16.msra.mxu0 0
    %2539 = vmatprep.mubr.bf16.mxu0 0
    %2540 = vmatmul.mubr.bf16.gmra.mrb[0].mxu0 %v2401
    %v2541 = vpop.f32.mrb[0].mxu0
    %v2542 = vadd.f32 0.0, %v2541
    %v2543 = vpop.f32.mrb[0].mxu0
    %v2544 = vpop.f32.mrb[0].mxu0
    %v2545 = vadd.f32 0.0, %v2544
    %v2546 = vpop.f32.mrb[0].mxu0
    %2547 = vmatprep.mubr.bf16.mxu0 0
    %2548 = vmatmul.mubr.bf16.gmra.mrb[0].mxu0 %v2404
    %v2549 = vpop.f32.mrb[0].mxu0
    %v2550 = vadd.f32 0.0, %v2549
    %v2551 = vpop.f32.mrb[0].mxu0
    %v2552 = vpop.f32.mrb[0].mxu0
    %v2553 = vadd.f32 0.0, %v2552
    %v2554 = vpop.f32.mrb[0].mxu0
    %2555 = vmatprep.mubr.bf16.mxu0 0
    %2556 = vmatmul.mubr.bf16.gmra.mrb[0].mxu0 %v2407
    %v2557 = vpop.f32.mrb[0].mxu0
    %v2558 = vadd.f32 0.0, %v2557
    %v2559 = vpop.f32.mrb[0].mxu0
    %v2560 = vpop.f32.mrb[0].mxu0
    %v2561 = vadd.f32 0.0, %v2560
    %v2562 = vpop.f32.mrb[0].mxu0
    %2563 = vmatprep.mubr.bf16.mxu0 0
    %2564 = vmatmul.mubr.bf16.gmra.mrb[0].mxu0 %v2410
    %v2565 = vpop.f32.mrb[0].mxu0
    %v2566 = vadd.f32 0.0, %v2565
    %v2567 = vpop.f32.mrb[0].mxu0
    %v2568 = vpop.f32.mrb[0].mxu0
    %v2569 = vadd.f32 0.0, %v2568
    %v2570 = vpop.f32.mrb[0].mxu0
    %2571 = vmatprep.mubr.bf16.mxu0 0
    %2572 = vmatmul.mubr.bf16.gmra.mrb[0].mxu0 %v2413
    %v2573 = vpop.f32.mrb[0].mxu0
    %v2574 = vadd.f32 0.0, %v2573
    %v2575 = vpop.f32.mrb[0].mxu0
    %v2576 = vpop.f32.mrb[0].mxu0
    %v2577 = vadd.f32 0.0, %v2576
    %v2578 = vpop.f32.mrb[0].mxu0
    %2579 = vdwg.mxu0
    %v2580 = vadd.f32 %v2300, %v2459
    %v2581 = vadd.f32 %v2301, %v2461
    %v2582 = vadd.f32 %v2302, %v2542
    %v2583 = vadd.f32 %v2303, %v2463
    %v2584 = vadd.f32 %v2304, %v2465
    %v2585 = vadd.f32 %v2305, %v2545
    %v2586 = vadd.f32 %v2306, %v2469
    %v2587 = vadd.f32 %v2307, %v2471
    %v2588 = vadd.f32 %v2308, %v2550
    %v2589 = vadd.f32 %v2309, %v2473
    %v2590 = vadd.f32 %v2310, %v2475
    %v2591 = vadd.f32 %v2311, %v2553
    %v2592 = vadd.f32 %v2312, %v2479
    %v2593 = vadd.f32 %v2313, %v2481
    %v2594 = vadd.f32 %v2314, %v2558
    %v2595 = vadd.f32 %v2315, %v2483
    %v2596 = vadd.f32 %v2316, %v2485
    %v2597 = vadd.f32 %v2317, %v2561
    %v2598 = vadd.f32 %v2318, %v2489
    %v2599 = vadd.f32 %v2319, %v2491
    %v2600 = vadd.f32 %v2320, %v2566
    %v2601 = vadd.f32 %v2321, %v2493
    %v2602 = vadd.f32 %v2322, %v2495
    %v2603 = vadd.f32 %v2323, %v2569
    %v2604 = vadd.f32 %v2324, %v2499
    %v2605 = vadd.f32 %v2325, %v2501
    %v2606 = vadd.f32 %v2326, %v2574
    %v2607 = vadd.f32 %v2327, %v2503
    %v2608 = vadd.f32 %v2328, %v2505
    %v2609 = vadd.f32 %v2329, %v2577
    %v2610 = vld [vmem:[#allocation2] sm:$0xff]
    %v2611 = vld [vmem:[#allocation2 + $0x8] sm:$0xff]
    %v2612 = vld [vmem:[#allocation2 + $0x10] sm:$0xff]
    %v2613 = vld [vmem:[#allocation2 + $0x18] sm:$0xff]
    %v2614 = vld [vmem:[#allocation2 + $0x20] sm:$0xff]
    %v2615 = vld [vmem:[#allocation2 + $0x28] sm:$0xff]
    %v2616 = vld [vmem:[#allocation2 + $0x30] sm:$0xff]
    %v2617 = vld [vmem:[#allocation2 + $0x38] sm:$0xff]
    %v2618 = vld [vmem:[#allocation2 + $0x40] sm:$0xff]
    %v2619 = vld [vmem:[#allocation2 + $0x48] sm:$0xff]
    %v2620 = vld [vmem:[#allocation2 + $0x50] sm:$0xff]
    %v2621 = vld [vmem:[#allocation2 + $0x58] sm:$0xff]
    %v2622 = vld [vmem:[#allocation2 + $0x60] sm:$0xff]
    %v2623 = vld [vmem:[#allocation2 + $0x68] sm:$0xff]
    %v2624 = vld [vmem:[#allocation2 + $0x70] sm:$0xff]
    %v2625 = vld [vmem:[#allocation2 + $0x78] sm:$0xff]
    %v2626 = vld [vmem:[#allocation2 + $0x80] sm:$0xff]
    %v2627 = vld [vmem:[#allocation2 + $0x88] sm:$0xff]
    %v2628 = vld [vmem:[#allocation2 + $0x90] sm:$0xff]
    %v2629 = vld [vmem:[#allocation2 + $0x98] sm:$0xff]
    %v2630 = vld [vmem:[#allocation2 + $0xa0] sm:$0xff]
    %v2631 = vld [vmem:[#allocation2 + $0xa8] sm:$0xff]
    %v2632 = vld [vmem:[#allocation2 + $0xb0] sm:$0xff]
    %v2633 = vld [vmem:[#allocation2 + $0xb8] sm:$0xff]
    %v2634 = vld [vmem:[#allocation2 + $0xc0] sm:$0xff]
    %v2635 = vld [vmem:[#allocation2 + $0xc8] sm:$0xff]
    %v2636 = vld [vmem:[#allocation2 + $0xd0] sm:$0xff]
    %v2637 = vld [vmem:[#allocation2 + $0xd8] sm:$0xff]
    %v2638 = vld [vmem:[#allocation2 + $0xe0] sm:$0xff]
    %v2639 = vld [vmem:[#allocation2 + $0xe8] sm:$0xff]
    %v2640 = vadd.f32 %v2610, %v2580
    %v2641 = vadd.f32 %v2611, %v2581
    %v2642 = vadd.f32 %v2612, %v2582
    %v2643 = vadd.f32 %v2613, %v2583
    %v2644 = vadd.f32 %v2614, %v2584
    %v2645 = vadd.f32 %v2615, %v2585
    %v2646 = vadd.f32 %v2616, %v2586
    %v2647 = vadd.f32 %v2617, %v2587
    %v2648 = vadd.f32 %v2618, %v2588
    %v2649 = vadd.f32 %v2619, %v2589
    %v2650 = vadd.f32 %v2620, %v2590
    %v2651 = vadd.f32 %v2621, %v2591
    %v2652 = vadd.f32 %v2622, %v2592
    %v2653 = vadd.f32 %v2623, %v2593
    %v2654 = vadd.f32 %v2624, %v2594
    %v2655 = vadd.f32 %v2625, %v2595
    %v2656 = vadd.f32 %v2626, %v2596
    %v2657 = vadd.f32 %v2627, %v2597
    %v2658 = vadd.f32 %v2628, %v2598
    %v2659 = vadd.f32 %v2629, %v2599
    %v2660 = vadd.f32 %v2630, %v2600
    %v2661 = vadd.f32 %v2631, %v2601
    %v2662 = vadd.f32 %v2632, %v2602
    %v2663 = vadd.f32 %v2633, %v2603
    %v2664 = vadd.f32 %v2634, %v2604
    %v2665 = vadd.f32 %v2635, %v2605
    %v2666 = vadd.f32 %v2636, %v2606
    %v2667 = vadd.f32 %v2637, %v2607
    %v2668 = vadd.f32 %v2638, %v2608
    %v2669 = vadd.f32 %v2639, %v2609
    %2670 = vst [vmem:[#allocation2] sm:$0xff] %v2640
    %2671 = vst [vmem:[#allocation2 + $0x8] sm:$0xff] %v2641
    %vm2672 = vcmask 523264
    %2673 = vst.msk [vmem:[#allocation2 + $0x10] sm:$0xff] %vm2672, %v2642
    %2674 = vst [vmem:[#allocation2 + $0x18] sm:$0xff] %v2643
    %2675 = vst [vmem:[#allocation2 + $0x20] sm:$0xff] %v2644
    %2676 = vst.msk [vmem:[#allocation2 + $0x28] sm:$0xff] %vm2672, %v2645
    %2677 = vst [vmem:[#allocation2 + $0x30] sm:$0xff] %v2646
    %2678 = vst [vmem:[#allocation2 + $0x38] sm:$0xff] %v2647
    %2679 = vst.msk [vmem:[#allocation2 + $0x40] sm:$0xff] %vm2672, %v2648
    %2680 = vst [vmem:[#allocation2 + $0x48] sm:$0xff] %v2649
    %2681 = vst [vmem:[#allocation2 + $0x50] sm:$0xff] %v2650
    %2682 = vst.msk [vmem:[#allocation2 + $0x58] sm:$0xff] %vm2672, %v2651
    %2683 = vst [vmem:[#allocation2 + $0x60] sm:$0xff] %v2652
    %2684 = vst [vmem:[#allocation2 + $0x68] sm:$0xff] %v2653
    %2685 = vst.msk [vmem:[#allocation2 + $0x70] sm:$0xff] %vm2672, %v2654
    %2686 = vst [vmem:[#allocation2 + $0x78] sm:$0xff] %v2655
    %2687 = vst [vmem:[#allocation2 + $0x80] sm:$0xff] %v2656
    %2688 = vst.msk [vmem:[#allocation2 + $0x88] sm:$0xff] %vm2672, %v2657
    %2689 = vst [vmem:[#allocation2 + $0x90] sm:$0xff] %v2658
    %2690 = vst [vmem:[#allocation2 + $0x98] sm:$0xff] %v2659
    %2691 = vst.msk [vmem:[#allocation2 + $0xa0] sm:$0xff] %vm2672, %v2660
    %2692 = vst [vmem:[#allocation2 + $0xa8] sm:$0xff] %v2661
    %2693 = vst [vmem:[#allocation2 + $0xb0] sm:$0xff] %v2662
    %2694 = vst.msk [vmem:[#allocation2 + $0xb8] sm:$0xff] %vm2672, %v2663
    %2695 = vst [vmem:[#allocation2 + $0xc0] sm:$0xff] %v2664
    %2696 = vst [vmem:[#allocation2 + $0xc8] sm:$0xff] %v2665
    %2697 = vst.msk [vmem:[#allocation2 + $0xd0] sm:$0xff] %vm2672, %v2666
    %2698 = vst [vmem:[#allocation2 + $0xd8] sm:$0xff] %v2667
    %2699 = vst [vmem:[#allocation2 + $0xe0] sm:$0xff] %v2668
    %2700 = vst.msk [vmem:[#allocation2 + $0xe8] sm:$0xff] %vm2672, %v2669
    // Predicated region
    $region30: #{_conv3x3_exec.1} parent=1 // pred_check
      %p2701 = pneg %p55
    $region31: #{_conv3x3_exec.1} parent=1 // pred_check_branch
      %2703 = sbr.rel (%p2701) target = $region33
    $region32: #{_conv3x3_exec.1} parent=1 // pred_region
      %v2704 = vld [vmem:[#allocation2] sm:$0xff]
      %v2705 = vld [vmem:[#allocation2 + $0x8] sm:$0xff]
      %v2706 = vld [vmem:[#allocation2 + $0x10] sm:$0xff]
      %v2707 = vld [vmem:[#allocation2 + $0x18] sm:$0xff]
      %v2708 = vld [vmem:[#allocation2 + $0x20] sm:$0xff]
      %v2709 = vld [vmem:[#allocation2 + $0x28] sm:$0xff]
      %v2710 = vld [vmem:[#allocation2 + $0x30] sm:$0xff]
      %v2711 = vld [vmem:[#allocation2 + $0x38] sm:$0xff]
      %v2712 = vld [vmem:[#allocation2 + $0x40] sm:$0xff]
      %v2713 = vld [vmem:[#allocation2 + $0x48] sm:$0xff]
      %v2714 = vld [vmem:[#allocation2 + $0x50] sm:$0xff]
      %v2715 = vld [vmem:[#allocation2 + $0x58] sm:$0xff]
      %v2716 = vld [vmem:[#allocation2 + $0x60] sm:$0xff]
      %v2717 = vld [vmem:[#allocation2 + $0x68] sm:$0xff]
      %v2718 = vld [vmem:[#allocation2 + $0x70] sm:$0xff]
      %v2719 = vld [vmem:[#allocation2 + $0x78] sm:$0xff]
      %v2720 = vld [vmem:[#allocation2 + $0x80] sm:$0xff]
      %v2721 = vld [vmem:[#allocation2 + $0x88] sm:$0xff]
      %v2722 = vld [vmem:[#allocation2 + $0x90] sm:$0xff]
      %v2723 = vld [vmem:[#allocation2 + $0x98] sm:$0xff]
      %v2724 = vld [vmem:[#allocation2 + $0xa0] sm:$0xff]
      %v2725 = vld [vmem:[#allocation2 + $0xa8] sm:$0xff]
      %v2726 = vld [vmem:[#allocation2 + $0xb0] sm:$0xff]
      %v2727 = vld [vmem:[#allocation2 + $0xb8] sm:$0xff]
      %v2728 = vld [vmem:[#allocation2 + $0xc0] sm:$0xff]
      %v2729 = vld [vmem:[#allocation2 + $0xc8] sm:$0xff]
      %v2730 = vld [vmem:[#allocation2 + $0xd0] sm:$0xff]
      %v2731 = vld [vmem:[#allocation2 + $0xd8] sm:$0xff]
      %v2732 = vld [vmem:[#allocation2 + $0xe0] sm:$0xff]
      %v2733 = vld [vmem:[#allocation2 + $0xe8] sm:$0xff]
      %v2734 = vld [vmem:[#allocation8] sm:$0x7]
      %v2736 = vlaneseq
      %v2737 = vshrl.u32 %v2736, 7
      %v2738 = vsub.s32 0, %v2737
      %v2739 = vrot.slane %v2734, %v2738
      %v2740 = vlaneseq
      %v2741 = vshrl.u32 %v2740, 7
      %v2742 = vsub.s32 1, %v2741
      %v2743 = vrot.slane %v2734, %v2742
      %v2744 = vlaneseq
      %v2745 = vshrl.u32 %v2744, 7
      %v2746 = vsub.s32 2, %v2745
      %v2747 = vrot.slane %v2734, %v2746
      %v2751 = vadd.f32 %v2704, %v2739
      %v2752 = vadd.f32 %v2705, %v2743
      %v2753 = vadd.f32 %v2706, %v2747
      %v2754 = vadd.f32 %v2707, %v2739
      %v2755 = vadd.f32 %v2708, %v2743
      %v2756 = vadd.f32 %v2709, %v2747
      %v2757 = vadd.f32 %v2710, %v2739
      %v2758 = vadd.f32 %v2711, %v2743
      %v2759 = vadd.f32 %v2712, %v2747
      %v2760 = vadd.f32 %v2713, %v2739
      %v2761 = vadd.f32 %v2714, %v2743
      %v2762 = vadd.f32 %v2715, %v2747
      %v2763 = vadd.f32 %v2716, %v2739
      %v2764 = vadd.f32 %v2717, %v2743
      %v2765 = vadd.f32 %v2718, %v2747
      %v2766 = vadd.f32 %v2719, %v2739
      %v2767 = vadd.f32 %v2720, %v2743
      %v2768 = vadd.f32 %v2721, %v2747
      %v2769 = vadd.f32 %v2722, %v2739
      %v2770 = vadd.f32 %v2723, %v2743
      %v2771 = vadd.f32 %v2724, %v2747
      %v2772 = vadd.f32 %v2725, %v2739
      %v2773 = vadd.f32 %v2726, %v2743
      %v2774 = vadd.f32 %v2727, %v2747
      %v2775 = vadd.f32 %v2728, %v2739
      %v2776 = vadd.f32 %v2729, %v2743
      %v2777 = vadd.f32 %v2730, %v2747
      %v2778 = vadd.f32 %v2731, %v2739
      %v2779 = vadd.f32 %v2732, %v2743
      %v2780 = vadd.f32 %v2733, %v2747
      %v2781 = vpack.c.bf16 %v2754, %v2751
      %v2782 = vpack.c.bf16 %v2755, %v2752
      %v2783 = vpack.c.bf16 %v2756, %v2753
      %v2784 = vpack.c.bf16 %v2760, %v2757
      %v2785 = vpack.c.bf16 %v2761, %v2758
      %v2786 = vpack.c.bf16 %v2762, %v2759
      %v2787 = vpack.c.bf16 %v2766, %v2763
      %v2788 = vpack.c.bf16 %v2767, %v2764
      %v2789 = vpack.c.bf16 %v2768, %v2765
      %v2790 = vpack.c.bf16 %v2772, %v2769
      %v2791 = vpack.c.bf16 %v2773, %v2770
      %v2792 = vpack.c.bf16 %v2774, %v2771
      %v2793 = vpack.c.bf16 %v2778, %v2775
      %v2794 = vpack.c.bf16 %v2779, %v2776
      %v2795 = vpack.c.bf16 %v2780, %v2777
      %v2811 = vunpack.c.l.b16 %v2781
      %v2812 = vunpack.c.l.b16 %v2782
      %v2813 = vunpack.c.l.b16 %v2783
      %v2814 = vunpack.c.h.b16 %v2781
      %v2815 = vunpack.c.h.b16 %v2782
      %v2816 = vunpack.c.h.b16 %v2783
      %v2817 = vunpack.c.l.b16 %v2784
      %v2818 = vunpack.c.l.b16 %v2785
      %v2819 = vunpack.c.l.b16 %v2786
      %v2820 = vunpack.c.h.b16 %v2784
      %v2821 = vunpack.c.h.b16 %v2785
      %v2822 = vunpack.c.h.b16 %v2786
      %v2823 = vunpack.c.l.b16 %v2787
      %v2824 = vunpack.c.l.b16 %v2788
      %v2825 = vunpack.c.l.b16 %v2789
      %v2826 = vunpack.c.h.b16 %v2787
      %v2827 = vunpack.c.h.b16 %v2788
      %v2828 = vunpack.c.h.b16 %v2789
      %v2829 = vunpack.c.l.b16 %v2790
      %v2830 = vunpack.c.l.b16 %v2791
      %v2831 = vunpack.c.l.b16 %v2792
      %v2832 = vunpack.c.h.b16 %v2790
      %v2833 = vunpack.c.h.b16 %v2791
      %v2834 = vunpack.c.h.b16 %v2792
      %v2835 = vunpack.c.l.b16 %v2793
      %v2836 = vunpack.c.l.b16 %v2794
      %v2837 = vunpack.c.l.b16 %v2795
      %v2838 = vunpack.c.h.b16 %v2793
      %v2839 = vunpack.c.h.b16 %v2794
      %v2840 = vunpack.c.h.b16 %v2795
      %v2841 = vpack.c.b16 %v2812, %v2811
      %v2842 = vpack.c.b16 %v2813, %v2813
      %v2843 = vpack.c.b16 %v2815, %v2814
      %v2844 = vpack.c.b16 %v2816, %v2816
      %v2845 = vpack.c.b16 %v2818, %v2817
      %v2846 = vpack.c.b16 %v2819, %v2819
      %v2847 = vpack.c.b16 %v2821, %v2820
      %v2848 = vpack.c.b16 %v2822, %v2822
      %v2849 = vpack.c.b16 %v2824, %v2823
      %v2850 = vpack.c.b16 %v2825, %v2825
      %v2851 = vpack.c.b16 %v2827, %v2826
      %v2852 = vpack.c.b16 %v2828, %v2828
      %v2853 = vpack.c.b16 %v2830, %v2829
      %v2854 = vpack.c.b16 %v2831, %v2831
      %v2855 = vpack.c.b16 %v2833, %v2832
      %v2856 = vpack.c.b16 %v2834, %v2834
      %v2857 = vpack.c.b16 %v2836, %v2835
      %v2858 = vpack.c.b16 %v2837, %v2837
      %v2859 = vpack.c.b16 %v2839, %v2838
      %v2860 = vpack.c.b16 %v2840, %v2840
      %2881 = vst [vmem:[#allocation9] sm:$0xff] %v2841
      %vm2882 = vcmask 519168
      %2883 = vst.msk [vmem:[#allocation9 + $0x8] sm:$0xf] %vm2882, %v2842
      %2884 = vst [vmem:[#allocation9 + $0xc] sm:$0xff] %v2843
      %2885 = vst.msk [vmem:[#allocation9 + $0x14] sm:$0xf] %vm2882, %v2844
      %2886 = vst [vmem:[#allocation9 + $0x18] sm:$0xff] %v2845
      %2887 = vst.msk [vmem:[#allocation9 + $0x20] sm:$0xf] %vm2882, %v2846
      %2888 = vst [vmem:[#allocation9 + $0x24] sm:$0xff] %v2847
      %2889 = vst.msk [vmem:[#allocation9 + $0x2c] sm:$0xf] %vm2882, %v2848
      %2890 = vst [vmem:[#allocation9 + $0x30] sm:$0xff] %v2849
      %2891 = vst.msk [vmem:[#allocation9 + $0x38] sm:$0xf] %vm2882, %v2850
      %2892 = vst [vmem:[#allocation9 + $0x3c] sm:$0xff] %v2851
      %2893 = vst.msk [vmem:[#allocation9 + $0x44] sm:$0xf] %vm2882, %v2852
      %2894 = vst [vmem:[#allocation9 + $0x48] sm:$0xff] %v2853
      %2895 = vst.msk [vmem:[#allocation9 + $0x50] sm:$0xf] %vm2882, %v2854
      %2896 = vst [vmem:[#allocation9 + $0x54] sm:$0xff] %v2855
      %2897 = vst.msk [vmem:[#allocation9 + $0x5c] sm:$0xf] %vm2882, %v2856
      %2898 = vst [vmem:[#allocation9 + $0x60] sm:$0xff] %v2857
      %2899 = vst.msk [vmem:[#allocation9 + $0x68] sm:$0xf] %vm2882, %v2858
      %2900 = vst [vmem:[#allocation9 + $0x6c] sm:$0xff] %v2859
      %2901 = vst.msk [vmem:[#allocation9 + $0x74] sm:$0xf] %vm2882, %v2860
    $region33: #{_conv3x3_exec.1} parent=1 // pred_fallthru
      _
    // Predicated region
    $region34: #{_conv3x3_exec.1} parent=1 // pred_check
      _
    $region35: #{_conv3x3_exec.1} parent=1 // pred_check_branch
      %2903 = sbr.rel (0) target = $region37
    $region36: #{_conv3x3_exec.1} parent=1 // pred_region
      %s2905 = ssub.s32 1920, 1920
      %2906 = vsyncadd [#allocation5], %s2905
      %s2907 = sshll.u32 [#allocation9], 4
      %s2908 = int_to_ptr.vmem [resolvable:$true] %s2907
      %2913 = dma.vmem_to_hbm [thread:$0]  %s2908, 1920, %s3, [#allocation5], 192, 192, 12
    $region37: #{_conv3x3_exec.1} parent=1 // pred_fallthru
      _
    // Predicated region
    $region38: #{_conv3x3_exec.1} parent=1 // pred_check
      _
    $region39: #{_conv3x3_exec.1} parent=1 // pred_check_branch
      %2915 = sbr.rel (0) target = $region41
    $region40: #{_conv3x3_exec.1} parent=1 // pred_region
      %2916 = dma.done [#allocation5], 1920
    $region41: #{_conv3x3_exec.1} parent=1 // pred_fallthru
      _
    %2917 = vsyncpa [#allocation4], 1
    %2918 = vsyncpa [#allocation7], 1
    %2919 = vsyncpa [#allocation5], 1

</llo_original>
